<compile_context>
chip_gen: v7x
topology: tpu7x:2x2x1
jax: 0.10.0
libtpu: 0.0.40
codegen_flags: <defaults>
</compile_context>

<pallas_src>
import functools
import math

import numpy as np
import jax
import jax.numpy as jnp
from jax import lax
from jax.experimental import pallas as pl
from jax.experimental.pallas import tpu as pltpu


# --------------------------------------------------------------------------
# Pass A: key / context pass.  grid = (B, num_key_tiles), key axis "arbitrary".
# Accumulates, per (batch, head):
#   ctx_ext (M, Dh+1) = sum_t k'[t, :]^T [v[t, :] | 1]
# with k' = ratio * (exp(kd - diag_k - k_max_global) + eps), using online
# max-rescaling across key tiles so k_max keeps its global semantics.
# --------------------------------------------------------------------------
def _performer_ctx_kernel(
    x_ref,       # (1, Tk, E)          f32
    wkv_ref,     # (E, 2*QKV)          cdt  (pre-transposed, k|v fused)
    bkv_ref,     # (1, 2*QKV)          f32
    projt_ref,   # (Dh, M)             cdt  (dn * proj.T, shared across heads)
    ctx_ref,     # (1, H, M, Dh+1)     f32  output
    acc_ref,     # (H, M, Dh+1)        f32  scratch: exp-part accumulator
    vsum_ref,    # (H, 1, Dh+1)        f32  scratch: sum of [v | 1] (eps part)
    mrun_ref,    # (H, 1, 1)           f32  scratch: running per-head key max
    *, num_heads, head_dim, kernel_eps, ratio, half_dn2, mm_precision,
):
    H, Dh = num_heads, head_dim
    Tk = x_ref.shape[1]
    QKV = H * Dh
    cdt = wkv_ref.dtype
    kt = pl.program_id(1)
    nk = pl.num_programs(1)

    def mm(a, b):
        return jnp.dot(a, b, precision=mm_precision,
                       preferred_element_type=jnp.float32)

    @pl.when(kt == 0)
    def _():
        acc_ref[...] = jnp.zeros_like(acc_ref)
        vsum_ref[...] = jnp.zeros_like(vsum_ref)
        mrun_ref[...] = jnp.full_like(mrun_ref, -jnp.inf)

    x = x_ref[0].astype(cdt)                                  # (Tk, E)
    kv = mm(x, wkv_ref[...]) + bkv_ref[...]                   # (Tk, 2*QKV) f32
    proj_c = projt_ref[...]                                   # (Dh, M) cdt
    ones_col = jnp.ones((Tk, 1), jnp.float32)

    for h in range(H):
        k_h = kv[:, h * Dh:(h + 1) * Dh]                      # (Tk, Dh) f32
        v_h = kv[:, QKV + h * Dh:QKV + (h + 1) * Dh]          # (Tk, Dh) f32

        # shared-projection FAVOR+ features (no block-diagonal operand)
        kd_h = mm(k_h.astype(cdt), proj_c)                    # (Tk, M) f32
        diag_h = half_dn2 * jnp.sum(k_h * k_h, axis=-1, keepdims=True)   # (Tk,1)

        # online global key stabilizer (per-head max over all keys & features)
        tile_max = jnp.max(jnp.max(kd_h, axis=-1, keepdims=True),
                           axis=0, keepdims=True)             # (1, 1)
        m_prev = mrun_ref[h]                                  # (1, 1)
        m_new = jnp.maximum(m_prev, tile_max)
        alpha = jnp.exp(m_prev - m_new)                       # 0.0 on first tile
        mrun_ref[h] = m_new

        p_h = jnp.exp(kd_h - diag_h - m_new)                  # (Tk, M) f32
        v_ext = jnp.concatenate([v_h, ones_col], axis=-1)     # (Tk, Dh+1)

        # context accumulation, contracting the sequence axis directly
        # (no explicit k'.T relayout).
        upd = lax.dot_general(
            p_h.astype(cdt), v_ext.astype(cdt),
            dimension_numbers=(((0,), (0,)), ((), ())),
            preferred_element_type=jnp.float32, precision=mm_precision)
        acc_ref[h] = acc_ref[h] * alpha + upd                 # (M, Dh+1)
        # eps part of k' does not rescale with the max -> tracked separately
        vsum_ref[h] = vsum_ref[h] + jnp.sum(v_ext, axis=0, keepdims=True)

    @pl.when(kt == nk - 1)
    def _():
        # ctx_ext = ratio * (exp-part + eps * ones_M (x) sum_t [v|1])
        ctx_ref[0] = ratio * (acc_ref[...] + kernel_eps * vsum_ref[...])


# --------------------------------------------------------------------------
# Pass B: query pass.  grid = (B, num_query_tiles), fully parallel.
# q' -> combine against ctx_ext = [ctx | k_sum] (one matmul gives [o | D]),
# normalize, output linear.
# --------------------------------------------------------------------------
def _performer_out_kernel(
    x_ref,       # (1, Tq, E)          f32
    wq_ref,      # (E, QKV)            cdt
    bq_ref,      # (1, QKV)            f32
    projt_ref,   # (Dh, M)             cdt
    ctx_ref,     # (1, H, M, Dh+1)     f32
    wo_ref,      # (QKV, E)            cdt
    bo_ref,      # (1, E)              f32
    out_ref,     # (1, Tq, E)          f32
    o_slab,      # (Tq, QKV)           cdt  scratch (lane-contiguous head outs)
    *, num_heads, head_dim, kernel_eps, ratio, half_dn2, mm_precision,
    approx_recip,
):
    H, Dh = num_heads, head_dim
    cdt = wq_ref.dtype

    def mm(a, b):
        return jnp.dot(a, b, precision=mm_precision,
                       preferred_element_type=jnp.float32)

    x = x_ref[0].astype(cdt)                                  # (Tq, E)
    q_lin = mm(x, wq_ref[...]) + bq_ref[...]                  # (Tq, QKV) f32
    proj_c = projt_ref[...]                                   # (Dh, M) cdt

    for h in range(H):
        q_h = q_lin[:, h * Dh:(h + 1) * Dh]                   # (Tq, Dh) f32
        qd_h = mm(q_h.astype(cdt), proj_c)                    # (Tq, M) f32
        diag_h = half_dn2 * jnp.sum(q_h * q_h, axis=-1, keepdims=True)   # (Tq,1)
        qmax_h = jnp.max(qd_h, axis=-1, keepdims=True)        # (Tq, 1)
        qp_h = ratio * (jnp.exp(qd_h - diag_h - qmax_h) + kernel_eps)    # (Tq,M)

        # combine against [ctx | k_sum]: one MXU pass gives [o_h | D_h]
        oe = mm(qp_h.astype(cdt), ctx_ref[0, h].astype(cdt))  # (Tq, Dh+1) f32
        d = oe[:, Dh:Dh + 1]                                  # (Tq, 1)
        d_inv = pl.reciprocal(d, approx=True) if approx_recip else 1.0 / d
        o_slab[:, h * Dh:(h + 1) * Dh] = (oe[:, :Dh] * d_inv).astype(o_slab.dtype)

    out = mm(o_slab[...], wo_ref[...]) + bo_ref[...]          # (Tq, E) f32
    out_ref[0] = out.astype(out_ref.dtype)


# --------------------------------------------------------------------------
# wrapper: host-side layout plumbing + two sequence-tiled pallas_calls
# --------------------------------------------------------------------------
def _pick_seq_tile(seq_len, cap):
    """Largest multiple of 8 <= cap that divides seq_len, else the full seq."""
    if seq_len <= cap:
        return seq_len
    t = min(cap, seq_len)
    t -= t % 8
    while t >= 8:
        if seq_len % t == 0:
            return t
        t -= 8
    return seq_len


def performer_attention(x, params, *, num_heads,
                        compute_dtype=jnp.float32, approx_recip=False,
                        seq_tile=512, vmem_limit_bytes=48 * 1024 * 1024):
    """PerformerAttention forward via two sequence-tiled Pallas TPU kernels.

    compute_dtype: dtype of the MXU operands (f32 = exact path, bf16 = fast
    path with f32 accumulation). exp / reductions / normalizer stay f32.
    seq_tile: sequence tile size (cap); bigger tiles amortize per-step overhead
    on v5e/v6e (128 MiB VMEM), keep <= ~256-512 on v7x (64 MiB VMEM).
    """
    B, S, E = x.shape
    proj = params["proj"]                     # (M, head_dim) random features
    M, head_dim = proj.shape
    H = num_heads
    QKV = H * head_dim
    Dv = head_dim + 1                         # extra column carries k_sum
    cdt = jnp.dtype(compute_dtype)
    dn = float(head_dim) ** -0.25
    ratio = float(M) ** -0.5
    half_dn2 = 0.5 * float(head_dim) ** -0.5
    kernel_eps = 1e-4

    tile = _pick_seq_tile(S, seq_tile)
    n_tiles = S // tile

    # host-side layout plumbing (free): fuse K|V, pre-transpose all weights,
    # fold the data normalizer into the SHARED (Dh, M) projection (no kron).
    w_kv = jnp.concatenate([params["wk"].T, params["wv"].T], axis=1).astype(cdt)
    b_kv = jnp.concatenate([params["bk"], params["bv"]], axis=1)          # f32
    w_q = params["wq"].T.astype(cdt)                                      # (E,QKV)
    b_q = params["bq"]
    proj_t = (dn * proj.T).astype(cdt)                                    # (Dh,M)
    w_o = params["wo"].T.astype(cdt)                                      # (QKV,E)
    b_o = params["bo"]

    mm_precision = lax.Precision.HIGHEST if cdt == jnp.float32 else None

    def inv(a):  # grid-invariant operand (weights / biases)
        return pl.BlockSpec(a.shape, lambda b, t: (0,) * a.ndim)

    # ---- pass A: key/context pass ----------------------------------------
    ctx_kernel = functools.partial(
        _performer_ctx_kernel, num_heads=H, head_dim=head_dim,
        kernel_eps=kernel_eps, ratio=ratio, half_dn2=half_dn2,
        mm_precision=mm_precision)

    ctx = pl.pallas_call(
        ctx_kernel,
        out_shape=jax.ShapeDtypeStruct((B, H, M, Dv), jnp.float32),
        grid_spec=pltpu.PrefetchScalarGridSpec(
            num_scalar_prefetch=0,
            grid=(B, n_tiles),
            in_specs=[pl.BlockSpec((1, tile, E), lambda b, t: (b, t, 0)),
                      inv(w_kv), inv(b_kv), inv(proj_t)],
            out_specs=pl.BlockSpec((1, H, M, Dv), lambda b, t: (b, 0, 0, 0)),
            scratch_shapes=[pltpu.VMEM((H, M, Dv), jnp.float32),
                            pltpu.VMEM((H, 1, Dv), jnp.float32),
                            pltpu.VMEM((H, 1, 1), jnp.float32)]),
        compiler_params=pltpu.CompilerParams(
            dimension_semantics=("parallel", "arbitrary"),
            vmem_limit_bytes=vmem_limit_bytes),
    )(x, w_kv, b_kv, proj_t)

    # ---- pass B: query pass ------------------------------------------------
    out_kernel = functools.partial(
        _performer_out_kernel, num_heads=H, head_dim=head_dim,
        kernel_eps=kernel_eps, ratio=ratio, half_dn2=half_dn2,
        mm_precision=mm_precision, approx_recip=approx_recip)

    return pl.pallas_call(
        out_kernel,
        out_shape=jax.ShapeDtypeStruct((B, S, E), x.dtype),
        grid_spec=pltpu.PrefetchScalarGridSpec(
            num_scalar_prefetch=0,
            grid=(B, n_tiles),
            in_specs=[pl.BlockSpec((1, tile, E), lambda b, t: (b, t, 0)),
                      inv(w_q), inv(b_q), inv(proj_t),
                      pl.BlockSpec((1, H, M, Dv), lambda b, t: (b, 0, 0, 0)),
                      inv(w_o), inv(b_o)],
            out_specs=pl.BlockSpec((1, tile, E), lambda b, t: (b, t, 0)),
            scratch_shapes=[pltpu.VMEM((tile, QKV), cdt)]),
        compiler_params=pltpu.CompilerParams(
            dimension_semantics=("parallel", "parallel"),
            vmem_limit_bytes=vmem_limit_bytes),
    )(x, w_q, b_q, proj_t, ctx, w_o, b_o)


# --------------------------------------------------------------------------
# deterministic parameter construction (synthetic, not a checkpoint)
# --------------------------------------------------------------------------
def gaussian_orthogonal_random_matrix(seed, nb_rows, nb_cols, scaling=0):
    rng = np.random.default_rng(seed)
    n_full = nb_rows // nb_cols
    blocks = []
    for _ in range(n_full):
        q, _ = np.linalg.qr(rng.standard_normal((nb_cols, nb_cols)))
        blocks.append(q.T)
    rem = nb_rows - n_full * nb_cols
    if rem > 0:
        q, _ = np.linalg.qr(rng.standard_normal((nb_cols, nb_cols)))
        blocks.append(q.T[:rem])
    final = np.concatenate(blocks, axis=0)
    if scaling == 0:
        mult = np.linalg.norm(rng.standard_normal((nb_rows, nb_cols)), axis=1)
    else:
        mult = math.sqrt(float(nb_cols)) * np.ones((nb_rows,))
    return jnp.asarray(mult[:, None] * final, dtype=jnp.float32)


def init_params(key, emb_dim, qkv_dim, num_heads):
    head_dim = qkv_dim // num_heads
    ks = jax.random.split(key, 8)

    def xavier(k, out_f, in_f):
        bound = math.sqrt(6.0 / (in_f + out_f))
        return jax.random.uniform(k, (out_f, in_f), jnp.float32, -bound, bound)

    p = {}
    p["proj"] = gaussian_orthogonal_random_matrix(0, qkv_dim, head_dim, scaling=0)
    p["wq"] = xavier(ks[0], qkv_dim, emb_dim)
    p["wk"] = xavier(ks[1], qkv_dim, emb_dim)
    p["wv"] = xavier(ks[2], qkv_dim, emb_dim)
    p["wo"] = xavier(ks[3], emb_dim, qkv_dim)
    p["bq"] = 0.01 * jax.random.normal(ks[4], (1, qkv_dim), jnp.float32)
    p["bk"] = 0.01 * jax.random.normal(ks[5], (1, qkv_dim), jnp.float32)
    p["bv"] = 0.01 * jax.random.normal(ks[6], (1, qkv_dim), jnp.float32)
    p["bo"] = 0.01 * jax.random.normal(ks[7], (1, emb_dim), jnp.float32)
    return p


# --------------------------------------------------------------------------
# pure-JAX reference (mirrors PerformerAttention.forward exactly, f32)
# --------------------------------------------------------------------------
def reference_forward(x, p, *, num_heads):
    B, S, E = x.shape
    proj = p["proj"]                              # (M, head_dim)
    M, head_dim = proj.shape
    dn = float(head_dim) ** -0.25
    ratio = float(M) ** -0.5
    eps = 1e-4
    hp = lax.Precision.HIGHEST

    def lin(t, w, b):
        return jnp.dot(t, w.T, precision=hp) + b

    def split(t):
        return t.reshape(B, S, num_heads, head_dim).transpose(0, 2, 1, 3)

    q = split(lin(x, p["wq"], p["bq"]))           # (B, H, S, Dh)
    k = split(lin(x, p["wk"], p["bk"]))
    v = split(lin(x, p["wv"], p["bv"]))

    qd = jnp.einsum("bhid,jd->bhij", dn * q, proj, precision=hp)
    kd = jnp.einsum("bhid,jd->bhij", dn * k, proj, precision=hp)
    diag_q = jnp.sum(q ** 2, -1, keepdims=True) * 0.5 * dn ** 2
    diag_k = jnp.sum(k ** 2, -1, keepdims=True) * 0.5 * dn ** 2
    qp = ratio * (jnp.exp(qd - diag_q - jnp.max(qd, axis=-1, keepdims=True)) + eps)
    kp = ratio * (jnp.exp(kd - diag_k - jnp.max(kd, axis=(-1, -2), keepdims=True)) + eps)

    k_sum = kp.sum(-2)                                                   # (B, H, M)
    d_inv = 1.0 / jnp.einsum("bhnd,bhd->bhn", qp, k_sum, precision=hp)   # (B, H, S)
    context = jnp.einsum("bhnd,bhne->bhde", kp, v, precision=hp)         # (B, H, M, Dh)
    o = jnp.einsum("bhde,bhnd,bhn->bhne", context, qp, d_inv, precision=hp)
    o = o.transpose(0, 2, 1, 3).reshape(B, S, num_heads * head_dim)
    return lin(o, p["wo"], p["bo"])


# --------------------------------------------------------------------------
if __name__ == "__main__":
    B, S, E = 2, 16, 32
    qkv_dim, num_heads = 32, 4

    key = jax.random.PRNGKey(0)
    kx, kp = jax.random.split(key)
    x = jax.random.normal(kx, (B, S, E), jnp.float32)
    params = init_params(kp, E, qkv_dim, num_heads)

    ref = reference_forward(x, params, num_heads=num_heads)

    # exact path: f32 MXU operands (HIGHEST precision). seq_tile=8 forces two
    # key/query tiles so the online key-max rescaling path is exercised.
    out_f32 = jax.block_until_ready(
        performer_attention(x, params, num_heads=num_heads,
                            compute_dtype=jnp.float32, approx_recip=False,
                            seq_tile=8))
    assert out_f32.shape == (B, S, E)
    err_f32 = float(jnp.max(jnp.abs(out_f32 - ref)))
    assert err_f32 < 5e-3, f"f32 kernel mismatch vs reference: {err_f32}"

    # perf path: bf16 MXU operands + f32 accumulation + approx EUP reciprocal.
    out_bf16 = jax.block_until_ready(
        performer_attention(x, params, num_heads=num_heads,
                            compute_dtype=jnp.bfloat16, approx_recip=True,
                            seq_tile=8))
    err_bf16 = float(jnp.max(jnp.abs(out_bf16 - ref)))
    assert err_bf16 < 1.5e-1, f"bf16 kernel mismatch vs reference: {err_bf16}"

    print("KERNEL_OK")
</pallas_src>

<mosaic_0001>
module attributes {stable_mosaic.version = 11 : i64} {
  func.func @_performer_ctx_kernel(%arg0: i32, %arg1: i32, %arg2: memref<1x8x32xf32, #tpu.memory_space<vmem>>, %arg3: memref<32x64xf32, #tpu.memory_space<vmem>>, %arg4: memref<1x64xf32, #tpu.memory_space<vmem>>, %arg5: memref<8x32xf32, #tpu.memory_space<vmem>>, %arg6: memref<1x4x32x9xf32, #tpu.memory_space<vmem>>, %arg7: memref<4x32x9xf32, #tpu.memory_space<vmem>>, %arg8: memref<4x1x9xf32, #tpu.memory_space<vmem>>, %arg9: memref<4x1x1xf32, #tpu.memory_space<vmem>>) attributes {dimension_semantics = [#tpu.dimension_semantics<parallel>, #tpu.dimension_semantics<arbitrary>], iteration_bounds = array<i64: 2, 2>, scalar_prefetch = 0 : i64, scratch_operands = 3 : i64, tpu.core_type = #tpu.core_type<tc>, window_params = [{transform_indices = @transform_0, window_bounds = array<i64: 1, 8, 32>}, {pipeline_mode = #tpu.pipeline_mode<synchronous>, transform_indices = @transform_1, window_bounds = array<i64: 32, 64>}, {pipeline_mode = #tpu.pipeline_mode<synchronous>, transform_indices = @transform_2, window_bounds = array<i64: 1, 64>}, {pipeline_mode = #tpu.pipeline_mode<synchronous>, transform_indices = @transform_3, window_bounds = array<i64: 8, 32>}, {transform_indices = @transform_4, window_bounds = array<i64: 1, 4, 32, 9>}]} {
    %c0_i32 = arith.constant 0 : i32
    %0 = arith.cmpi eq, %arg1, %c0_i32 : i32
    %1 = arith.extui %0 : i1 to i32
    %c0_i32_0 = arith.constant 0 : i32
    %2 = arith.cmpi ne, %1, %c0_i32_0 : i32
    scf.if %2 {
      %cst_108 = arith.constant 0.000000e+00 : f32
      %187 = vector.broadcast %cst_108 : f32 to vector<4x32x9xf32>
      %c0_109 = arith.constant 0 : index
      %c0_110 = arith.constant 0 : index
      %c0_111 = arith.constant 0 : index
      %188 = vector.load %arg7[%c0_109, %c0_110, %c0_111] : memref<4x32x9xf32, #tpu.memory_space<vmem>>, vector<4x32x9xf32>
      tpu.vector_store %arg7[%c0_109, %c0_110, %c0_111], %187 {strides = array<i32>} : memref<4x32x9xf32, #tpu.memory_space<vmem>>, vector<4x32x9xf32>,
      %cst_112 = arith.constant 0.000000e+00 : f32
      %189 = vector.broadcast %cst_112 : f32 to vector<4x1x9xf32>
      %c0_113 = arith.constant 0 : index
      %c0_114 = arith.constant 0 : index
      %c0_115 = arith.constant 0 : index
      %190 = vector.load %arg8[%c0_113, %c0_114, %c0_115] : memref<4x1x9xf32, #tpu.memory_space<vmem>>, vector<4x1x9xf32>
      tpu.vector_store %arg8[%c0_113, %c0_114, %c0_115], %189 {strides = array<i32>} : memref<4x1x9xf32, #tpu.memory_space<vmem>>, vector<4x1x9xf32>,
      %cst_116 = arith.constant 0xFF800000 : f32
      %191 = vector.broadcast %cst_116 : f32 to vector<4x1x1xf32>
      %c0_117 = arith.constant 0 : index
      %c0_118 = arith.constant 0 : index
      %c0_119 = arith.constant 0 : index
      %192 = vector.load %arg9[%c0_117, %c0_118, %c0_119] : memref<4x1x1xf32, #tpu.memory_space<vmem>>, vector<4x1x1xf32>
      tpu.vector_store %arg9[%c0_117, %c0_118, %c0_119], %191 {strides = array<i32>} : memref<4x1x1xf32, #tpu.memory_space<vmem>>, vector<4x1x1xf32>,
    } else {
    }
    %c0 = arith.constant 0 : index
    %c0_1 = arith.constant 0 : index
    %c0_2 = arith.constant 0 : index
    %3 = vector.load %arg2[%c0, %c0_1, %c0_2] : memref<1x8x32xf32, #tpu.memory_space<vmem>>, vector<1x8x32xf32>
    %4 = vector.shape_cast %3 : vector<1x8x32xf32> to vector<8x32xf32>
    %c0_3 = arith.constant 0 : index
    %c0_4 = arith.constant 0 : index
    %5 = vector.load %arg3[%c0_3, %c0_4] : memref<32x64xf32, #tpu.memory_space<vmem>>, vector<32x64xf32>
    %cst = arith.constant dense<0.000000e+00> : vector<8x64xf32>
    %6 = tpu.matmul %4, %5, %cst {dimension_numbers = #tpu.dot_dimension_numbers<[1], [0], [0], [1], [0, 0, 1, 1], [], []>, precision = #tpu.contract_precision<fp32>} : vector<8x32xf32>, vector<32x64xf32>, vector<8x64xf32> -> vector<8x64xf32>
    %c0_5 = arith.constant 0 : index
    %c0_6 = arith.constant 0 : index
    %7 = vector.load %arg4[%c0_5, %c0_6] : memref<1x64xf32, #tpu.memory_space<vmem>>, vector<1x64xf32>
    %8 = vector.broadcast %7 : vector<1x64xf32> to vector<8x64xf32>
    %9 = arith.addf %6, %8 : vector<8x64xf32>
    %c0_7 = arith.constant 0 : index
    %c0_8 = arith.constant 0 : index
    %10 = vector.load %arg5[%c0_7, %c0_8] : memref<8x32xf32, #tpu.memory_space<vmem>>, vector<8x32xf32>
    %cst_9 = arith.constant 1.000000e+00 : f32
    %11 = vector.broadcast %cst_9 : f32 to vector<8x1xf32>
    %12 = vector.extract_strided_slice %9 {offsets = [0, 0], sizes = [8, 8], strides = [1, 1]} : vector<8x64xf32> to vector<8x8xf32>
    %13 = vector.extract_strided_slice %9 {offsets = [0, 32], sizes = [8, 8], strides = [1, 1]} : vector<8x64xf32> to vector<8x8xf32>
    %cst_10 = arith.constant dense<0.000000e+00> : vector<8x32xf32>
    %14 = tpu.matmul %12, %10, %cst_10 {dimension_numbers = #tpu.dot_dimension_numbers<[1], [0], [0], [1], [0, 0, 1, 1], [], []>, precision = #tpu.contract_precision<fp32>} : vector<8x8xf32>, vector<8x32xf32>, vector<8x32xf32> -> vector<8x32xf32>
    %15 = arith.mulf %12, %12 : vector<8x8xf32>
    %cst_11 = arith.constant dense<0.000000e+00> : vector<8xf32>
    %16 = vector.multi_reduction <add>, %15, %cst_11 [1] : vector<8x8xf32> to vector<8xf32>
    %17 = vector.shape_cast %16 : vector<8xf32> to vector<8x1xf32>
    %cst_12 = arith.constant 0.176776692 : f32
    %18 = vector.broadcast %cst_12 : f32 to vector<8x1xf32>
    %19 = arith.mulf %18, %17 : vector<8x1xf32>
    %cst_13 = arith.constant dense<0xFF800000> : vector<8xf32>
    %20 = vector.multi_reduction <maximumf>, %14, %cst_13 [1] : vector<8x32xf32> to vector<8xf32>
    %21 = vector.shape_cast %20 : vector<8xf32> to vector<8x1xf32>
    %cst_14 = arith.constant dense<0xFF800000> : vector<1xf32>
    %22 = vector.multi_reduction <maximumf>, %21, %cst_14 [0] : vector<8x1xf32> to vector<1xf32>
    %23 = vector.shape_cast %22 : vector<1xf32> to vector<1x1xf32>
    %c0_15 = arith.constant 0 : index
    %c0_16 = arith.constant 0 : index
    %c0_17 = arith.constant 0 : index
    %24 = vector.load %arg9[%c0_15, %c0_16, %c0_17] : memref<4x1x1xf32, #tpu.memory_space<vmem>>, vector<1x1x1xf32>
    %25 = vector.shape_cast %24 : vector<1x1x1xf32> to vector<1x1xf32>
    %26 = arith.maximumf %25, %23 : vector<1x1xf32>
    %27 = arith.subf %25, %26 : vector<1x1xf32>
    %28 = math.exp %27 : vector<1x1xf32>
    %c0_18 = arith.constant 0 : index
    %c0_19 = arith.constant 0 : index
    %c0_20 = arith.constant 0 : index
    %29 = vector.load %arg9[%c0_18, %c0_19, %c0_20] : memref<4x1x1xf32, #tpu.memory_space<vmem>>, vector<1x1x1xf32>
    %30 = vector.shape_cast %29 : vector<1x1x1xf32> to vector<1x1xf32>
    %31 = vector.shape_cast %26 : vector<1x1xf32> to vector<1x1x1xf32>
    tpu.vector_store %arg9[%c0_18, %c0_19, %c0_20], %31 {strides = array<i32>} : memref<4x1x1xf32, #tpu.memory_space<vmem>>, vector<1x1x1xf32>,
    %32 = vector.broadcast %19 : vector<8x1xf32> to vector<8x32xf32>
    %33 = arith.subf %14, %32 : vector<8x32xf32>
    %34 = vector.broadcast %26 : vector<1x1xf32> to vector<8x32xf32>
    %35 = arith.subf %33, %34 : vector<8x32xf32>
    %36 = math.exp %35 : vector<8x32xf32>
    %37 = tpu.concatenate %13, %11 in 1 : vector<8x8xf32>, vector<8x1xf32> -> vector<8x9xf32>
    %cst_21 = arith.constant dense<0.000000e+00> : vector<32x9xf32>
    %38 = tpu.matmul %36, %37, %cst_21 {dimension_numbers = #tpu.dot_dimension_numbers<[0], [0], [1], [1], [0, 1, 1, 1], [], []>, precision = #tpu.contract_precision<fp32>} : vector<8x32xf32>, vector<8x9xf32>, vector<32x9xf32> -> vector<32x9xf32>
    %c0_22 = arith.constant 0 : index
    %c0_23 = arith.constant 0 : index
    %c0_24 = arith.constant 0 : index
    %39 = vector.load %arg7[%c0_22, %c0_23, %c0_24] : memref<4x32x9xf32, #tpu.memory_space<vmem>>, vector<1x32x9xf32>
    %40 = vector.shape_cast %39 : vector<1x32x9xf32> to vector<32x9xf32>
    %41 = vector.broadcast %28 : vector<1x1xf32> to vector<32x9xf32>
    %42 = arith.mulf %40, %41 : vector<32x9xf32>
    %43 = arith.addf %42, %38 : vector<32x9xf32>
    %c0_25 = arith.constant 0 : index
    %c0_26 = arith.constant 0 : index
    %c0_27 = arith.constant 0 : index
    %44 = vector.load %arg7[%c0_25, %c0_26, %c0_27] : memref<4x32x9xf32, #tpu.memory_space<vmem>>, vector<1x32x9xf32>
    %45 = vector.shape_cast %44 : vector<1x32x9xf32> to vector<32x9xf32>
    %46 = vector.shape_cast %43 : vector<32x9xf32> to vector<1x32x9xf32>
    tpu.vector_store %arg7[%c0_25, %c0_26, %c0_27], %46 {strides = array<i32>} : memref<4x32x9xf32, #tpu.memory_space<vmem>>, vector<1x32x9xf32>,
    %c0_28 = arith.constant 0 : index
    %c0_29 = arith.constant 0 : index
    %c0_30 = arith.constant 0 : index
    %47 = vector.load %arg8[%c0_28, %c0_29, %c0_30] : memref<4x1x9xf32, #tpu.memory_space<vmem>>, vector<1x1x9xf32>
    %48 = vector.shape_cast %47 : vector<1x1x9xf32> to vector<1x9xf32>
    %cst_31 = arith.constant dense<0.000000e+00> : vector<9xf32>
    %49 = vector.multi_reduction <add>, %37, %cst_31 [0] : vector<8x9xf32> to vector<9xf32>
    %50 = vector.shape_cast %49 : vector<9xf32> to vector<1x9xf32>
    %51 = arith.addf %48, %50 : vector<1x9xf32>
    %c0_32 = arith.constant 0 : index
    %c0_33 = arith.constant 0 : index
    %c0_34 = arith.constant 0 : index
    %52 = vector.load %arg8[%c0_32, %c0_33, %c0_34] : memref<4x1x9xf32, #tpu.memory_space<vmem>>, vector<1x1x9xf32>
    %53 = vector.shape_cast %52 : vector<1x1x9xf32> to vector<1x9xf32>
    %54 = vector.shape_cast %51 : vector<1x9xf32> to vector<1x1x9xf32>
    tpu.vector_store %arg8[%c0_32, %c0_33, %c0_34], %54 {strides = array<i32>} : memref<4x1x9xf32, #tpu.memory_space<vmem>>, vector<1x1x9xf32>,
    %55 = vector.extract_strided_slice %9 {offsets = [0, 8], sizes = [8, 8], strides = [1, 1]} : vector<8x64xf32> to vector<8x8xf32>
    %56 = vector.extract_strided_slice %9 {offsets = [0, 40], sizes = [8, 8], strides = [1, 1]} : vector<8x64xf32> to vector<8x8xf32>
    %cst_35 = arith.constant dense<0.000000e+00> : vector<8x32xf32>
    %57 = tpu.matmul %55, %10, %cst_35 {dimension_numbers = #tpu.dot_dimension_numbers<[1], [0], [0], [1], [0, 0, 1, 1], [], []>, precision = #tpu.contract_precision<fp32>} : vector<8x8xf32>, vector<8x32xf32>, vector<8x32xf32> -> vector<8x32xf32>
    %58 = arith.mulf %55, %55 : vector<8x8xf32>
    %cst_36 = arith.constant dense<0.000000e+00> : vector<8xf32>
    %59 = vector.multi_reduction <add>, %58, %cst_36 [1] : vector<8x8xf32> to vector<8xf32>
    %60 = vector.shape_cast %59 : vector<8xf32> to vector<8x1xf32>
    %cst_37 = arith.constant 0.176776692 : f32
    %61 = vector.broadcast %cst_37 : f32 to vector<8x1xf32>
    %62 = arith.mulf %61, %60 : vector<8x1xf32>
    %cst_38 = arith.constant dense<0xFF800000> : vector<8xf32>
    %63 = vector.multi_reduction <maximumf>, %57, %cst_38 [1] : vector<8x32xf32> to vector<8xf32>
    %64 = vector.shape_cast %63 : vector<8xf32> to vector<8x1xf32>
    %cst_39 = arith.constant dense<0xFF800000> : vector<1xf32>
    %65 = vector.multi_reduction <maximumf>, %64, %cst_39 [0] : vector<8x1xf32> to vector<1xf32>
    %66 = vector.shape_cast %65 : vector<1xf32> to vector<1x1xf32>
    %c1 = arith.constant 1 : index
    %c0_40 = arith.constant 0 : index
    %c0_41 = arith.constant 0 : index
    %67 = vector.load %arg9[%c1, %c0_40, %c0_41] : memref<4x1x1xf32, #tpu.memory_space<vmem>>, vector<1x1x1xf32>
    %68 = vector.shape_cast %67 : vector<1x1x1xf32> to vector<1x1xf32>
    %69 = arith.maximumf %68, %66 : vector<1x1xf32>
    %70 = arith.subf %68, %69 : vector<1x1xf32>
    %71 = math.exp %70 : vector<1x1xf32>
    %c1_42 = arith.constant 1 : index
    %c0_43 = arith.constant 0 : index
    %c0_44 = arith.constant 0 : index
    %72 = vector.load %arg9[%c1_42, %c0_43, %c0_44] : memref<4x1x1xf32, #tpu.memory_space<vmem>>, vector<1x1x1xf32>
    %73 = vector.shape_cast %72 : vector<1x1x1xf32> to vector<1x1xf32>
    %74 = vector.shape_cast %69 : vector<1x1xf32> to vector<1x1x1xf32>
    tpu.vector_store %arg9[%c1_42, %c0_43, %c0_44], %74 {strides = array<i32>} : memref<4x1x1xf32, #tpu.memory_space<vmem>>, vector<1x1x1xf32>,
    %75 = vector.broadcast %62 : vector<8x1xf32> to vector<8x32xf32>
    %76 = arith.subf %57, %75 : vector<8x32xf32>
    %77 = vector.broadcast %69 : vector<1x1xf32> to vector<8x32xf32>
    %78 = arith.subf %76, %77 : vector<8x32xf32>
    %79 = math.exp %78 : vector<8x32xf32>
    %80 = tpu.concatenate %56, %11 in 1 : vector<8x8xf32>, vector<8x1xf32> -> vector<8x9xf32>
    %cst_45 = arith.constant dense<0.000000e+00> : vector<32x9xf32>
    %81 = tpu.matmul %79, %80, %cst_45 {dimension_numbers = #tpu.dot_dimension_numbers<[0], [0], [1], [1], [0, 1, 1, 1], [], []>, precision = #tpu.contract_precision<fp32>} : vector<8x32xf32>, vector<8x9xf32>, vector<32x9xf32> -> vector<32x9xf32>
    %c1_46 = arith.constant 1 : index
    %c0_47 = arith.constant 0 : index
    %c0_48 = arith.constant 0 : index
    %82 = vector.load %arg7[%c1_46, %c0_47, %c0_48] : memref<4x32x9xf32, #tpu.memory_space<vmem>>, vector<1x32x9xf32>
    %83 = vector.shape_cast %82 : vector<1x32x9xf32> to vector<32x9xf32>
    %84 = vector.broadcast %71 : vector<1x1xf32> to vector<32x9xf32>
    %85 = arith.mulf %83, %84 : vector<32x9xf32>
    %86 = arith.addf %85, %81 : vector<32x9xf32>
    %c1_49 = arith.constant 1 : index
    %c0_50 = arith.constant 0 : index
    %c0_51 = arith.constant 0 : index
    %87 = vector.load %arg7[%c1_49, %c0_50, %c0_51] : memref<4x32x9xf32, #tpu.memory_space<vmem>>, vector<1x32x9xf32>
    %88 = vector.shape_cast %87 : vector<1x32x9xf32> to vector<32x9xf32>
    %89 = vector.shape_cast %86 : vector<32x9xf32> to vector<1x32x9xf32>
    tpu.vector_store %arg7[%c1_49, %c0_50, %c0_51], %89 {strides = array<i32>} : memref<4x32x9xf32, #tpu.memory_space<vmem>>, vector<1x32x9xf32>,
    %c1_52 = arith.constant 1 : index
    %c0_53 = arith.constant 0 : index
    %c0_54 = arith.constant 0 : index
    %90 = vector.load %arg8[%c1_52, %c0_53, %c0_54] : memref<4x1x9xf32, #tpu.memory_space<vmem>>, vector<1x1x9xf32>
    %91 = vector.shape_cast %90 : vector<1x1x9xf32> to vector<1x9xf32>
    %cst_55 = arith.constant dense<0.000000e+00> : vector<9xf32>
    %92 = vector.multi_reduction <add>, %80, %cst_55 [0] : vector<8x9xf32> to vector<9xf32>
    %93 = vector.shape_cast %92 : vector<9xf32> to vector<1x9xf32>
    %94 = arith.addf %91, %93 : vector<1x9xf32>
    %c1_56 = arith.constant 1 : index
    %c0_57 = arith.constant 0 : index
    %c0_58 = arith.constant 0 : index
    %95 = vector.load %arg8[%c1_56, %c0_57, %c0_58] : memref<4x1x9xf32, #tpu.memory_space<vmem>>, vector<1x1x9xf32>
    %96 = vector.shape_cast %95 : vector<1x1x9xf32> to vector<1x9xf32>
    %97 = vector.shape_cast %94 : vector<1x9xf32> to vector<1x1x9xf32>
    tpu.vector_store %arg8[%c1_56, %c0_57, %c0_58], %97 {strides = array<i32>} : memref<4x1x9xf32, #tpu.memory_space<vmem>>, vector<1x1x9xf32>,
    %98 = vector.extract_strided_slice %9 {offsets = [0, 16], sizes = [8, 8], strides = [1, 1]} : vector<8x64xf32> to vector<8x8xf32>
    %99 = vector.extract_strided_slice %9 {offsets = [0, 48], sizes = [8, 8], strides = [1, 1]} : vector<8x64xf32> to vector<8x8xf32>
    %cst_59 = arith.constant dense<0.000000e+00> : vector<8x32xf32>
    %100 = tpu.matmul %98, %10, %cst_59 {dimension_numbers = #tpu.dot_dimension_numbers<[1], [0], [0], [1], [0, 0, 1, 1], [], []>, precision = #tpu.contract_precision<fp32>} : vector<8x8xf32>, vector<8x32xf32>, vector<8x32xf32> -> vector<8x32xf32>
    %101 = arith.mulf %98, %98 : vector<8x8xf32>
    %cst_60 = arith.constant dense<0.000000e+00> : vector<8xf32>
    %102 = vector.multi_reduction <add>, %101, %cst_60 [1] : vector<8x8xf32> to vector<8xf32>
    %103 = vector.shape_cast %102 : vector<8xf32> to vector<8x1xf32>
    %cst_61 = arith.constant 0.176776692 : f32
    %104 = vector.broadcast %cst_61 : f32 to vector<8x1xf32>
    %105 = arith.mulf %104, %103 : vector<8x1xf32>
    %cst_62 = arith.constant dense<0xFF800000> : vector<8xf32>
    %106 = vector.multi_reduction <maximumf>, %100, %cst_62 [1] : vector<8x32xf32> to vector<8xf32>
    %107 = vector.shape_cast %106 : vector<8xf32> to vector<8x1xf32>
    %cst_63 = arith.constant dense<0xFF800000> : vector<1xf32>
    %108 = vector.multi_reduction <maximumf>, %107, %cst_63 [0] : vector<8x1xf32> to vector<1xf32>
    %109 = vector.shape_cast %108 : vector<1xf32> to vector<1x1xf32>
    %c2 = arith.constant 2 : index
    %c0_64 = arith.constant 0 : index
    %c0_65 = arith.constant 0 : index
    %110 = vector.load %arg9[%c2, %c0_64, %c0_65] : memref<4x1x1xf32, #tpu.memory_space<vmem>>, vector<1x1x1xf32>
    %111 = vector.shape_cast %110 : vector<1x1x1xf32> to vector<1x1xf32>
    %112 = arith.maximumf %111, %109 : vector<1x1xf32>
    %113 = arith.subf %111, %112 : vector<1x1xf32>
    %114 = math.exp %113 : vector<1x1xf32>
    %c2_66 = arith.constant 2 : index
    %c0_67 = arith.constant 0 : index
    %c0_68 = arith.constant 0 : index
    %115 = vector.load %arg9[%c2_66, %c0_67, %c0_68] : memref<4x1x1xf32, #tpu.memory_space<vmem>>, vector<1x1x1xf32>
    %116 = vector.shape_cast %115 : vector<1x1x1xf32> to vector<1x1xf32>
    %117 = vector.shape_cast %112 : vector<1x1xf32> to vector<1x1x1xf32>
    tpu.vector_store %arg9[%c2_66, %c0_67, %c0_68], %117 {strides = array<i32>} : memref<4x1x1xf32, #tpu.memory_space<vmem>>, vector<1x1x1xf32>,
    %118 = vector.broadcast %105 : vector<8x1xf32> to vector<8x32xf32>
    %119 = arith.subf %100, %118 : vector<8x32xf32>
    %120 = vector.broadcast %112 : vector<1x1xf32> to vector<8x32xf32>
    %121 = arith.subf %119, %120 : vector<8x32xf32>
    %122 = math.exp %121 : vector<8x32xf32>
    %123 = tpu.concatenate %99, %11 in 1 : vector<8x8xf32>, vector<8x1xf32> -> vector<8x9xf32>
    %cst_69 = arith.constant dense<0.000000e+00> : vector<32x9xf32>
    %124 = tpu.matmul %122, %123, %cst_69 {dimension_numbers = #tpu.dot_dimension_numbers<[0], [0], [1], [1], [0, 1, 1, 1], [], []>, precision = #tpu.contract_precision<fp32>} : vector<8x32xf32>, vector<8x9xf32>, vector<32x9xf32> -> vector<32x9xf32>
    %c2_70 = arith.constant 2 : index
    %c0_71 = arith.constant 0 : index
    %c0_72 = arith.constant 0 : index
    %125 = vector.load %arg7[%c2_70, %c0_71, %c0_72] : memref<4x32x9xf32, #tpu.memory_space<vmem>>, vector<1x32x9xf32>
    %126 = vector.shape_cast %125 : vector<1x32x9xf32> to vector<32x9xf32>
    %127 = vector.broadcast %114 : vector<1x1xf32> to vector<32x9xf32>
    %128 = arith.mulf %126, %127 : vector<32x9xf32>
    %129 = arith.addf %128, %124 : vector<32x9xf32>
    %c2_73 = arith.constant 2 : index
    %c0_74 = arith.constant 0 : index
    %c0_75 = arith.constant 0 : index
    %130 = vector.load %arg7[%c2_73, %c0_74, %c0_75] : memref<4x32x9xf32, #tpu.memory_space<vmem>>, vector<1x32x9xf32>
    %131 = vector.shape_cast %130 : vector<1x32x9xf32> to vector<32x9xf32>
    %132 = vector.shape_cast %129 : vector<32x9xf32> to vector<1x32x9xf32>
    tpu.vector_store %arg7[%c2_73, %c0_74, %c0_75], %132 {strides = array<i32>} : memref<4x32x9xf32, #tpu.memory_space<vmem>>, vector<1x32x9xf32>,
    %c2_76 = arith.constant 2 : index
    %c0_77 = arith.constant 0 : index
    %c0_78 = arith.constant 0 : index
    %133 = vector.load %arg8[%c2_76, %c0_77, %c0_78] : memref<4x1x9xf32, #tpu.memory_space<vmem>>, vector<1x1x9xf32>
    %134 = vector.shape_cast %133 : vector<1x1x9xf32> to vector<1x9xf32>
    %cst_79 = arith.constant dense<0.000000e+00> : vector<9xf32>
    %135 = vector.multi_reduction <add>, %123, %cst_79 [0] : vector<8x9xf32> to vector<9xf32>
    %136 = vector.shape_cast %135 : vector<9xf32> to vector<1x9xf32>
    %137 = arith.addf %134, %136 : vector<1x9xf32>
    %c2_80 = arith.constant 2 : index
    %c0_81 = arith.constant 0 : index
    %c0_82 = arith.constant 0 : index
    %138 = vector.load %arg8[%c2_80, %c0_81, %c0_82] : memref<4x1x9xf32, #tpu.memory_space<vmem>>, vector<1x1x9xf32>
    %139 = vector.shape_cast %138 : vector<1x1x9xf32> to vector<1x9xf32>
    %140 = vector.shape_cast %137 : vector<1x9xf32> to vector<1x1x9xf32>
    tpu.vector_store %arg8[%c2_80, %c0_81, %c0_82], %140 {strides = array<i32>} : memref<4x1x9xf32, #tpu.memory_space<vmem>>, vector<1x1x9xf32>,
    %141 = vector.extract_strided_slice %9 {offsets = [0, 24], sizes = [8, 8], strides = [1, 1]} : vector<8x64xf32> to vector<8x8xf32>
    %142 = vector.extract_strided_slice %9 {offsets = [0, 56], sizes = [8, 8], strides = [1, 1]} : vector<8x64xf32> to vector<8x8xf32>
    %cst_83 = arith.constant dense<0.000000e+00> : vector<8x32xf32>
    %143 = tpu.matmul %141, %10, %cst_83 {dimension_numbers = #tpu.dot_dimension_numbers<[1], [0], [0], [1], [0, 0, 1, 1], [], []>, precision = #tpu.contract_precision<fp32>} : vector<8x8xf32>, vector<8x32xf32>, vector<8x32xf32> -> vector<8x32xf32>
    %144 = arith.mulf %141, %141 : vector<8x8xf32>
    %cst_84 = arith.constant dense<0.000000e+00> : vector<8xf32>
    %145 = vector.multi_reduction <add>, %144, %cst_84 [1] : vector<8x8xf32> to vector<8xf32>
    %146 = vector.shape_cast %145 : vector<8xf32> to vector<8x1xf32>
    %cst_85 = arith.constant 0.176776692 : f32
    %147 = vector.broadcast %cst_85 : f32 to vector<8x1xf32>
    %148 = arith.mulf %147, %146 : vector<8x1xf32>
    %cst_86 = arith.constant dense<0xFF800000> : vector<8xf32>
    %149 = vector.multi_reduction <maximumf>, %143, %cst_86 [1] : vector<8x32xf32> to vector<8xf32>
    %150 = vector.shape_cast %149 : vector<8xf32> to vector<8x1xf32>
    %cst_87 = arith.constant dense<0xFF800000> : vector<1xf32>
    %151 = vector.multi_reduction <maximumf>, %150, %cst_87 [0] : vector<8x1xf32> to vector<1xf32>
    %152 = vector.shape_cast %151 : vector<1xf32> to vector<1x1xf32>
    %c3 = arith.constant 3 : index
    %c0_88 = arith.constant 0 : index
    %c0_89 = arith.constant 0 : index
    %153 = vector.load %arg9[%c3, %c0_88, %c0_89] : memref<4x1x1xf32, #tpu.memory_space<vmem>>, vector<1x1x1xf32>
    %154 = vector.shape_cast %153 : vector<1x1x1xf32> to vector<1x1xf32>
    %155 = arith.maximumf %154, %152 : vector<1x1xf32>
    %156 = arith.subf %154, %155 : vector<1x1xf32>
    %157 = math.exp %156 : vector<1x1xf32>
    %c3_90 = arith.constant 3 : index
    %c0_91 = arith.constant 0 : index
    %c0_92 = arith.constant 0 : index
    %158 = vector.load %arg9[%c3_90, %c0_91, %c0_92] : memref<4x1x1xf32, #tpu.memory_space<vmem>>, vector<1x1x1xf32>
    %159 = vector.shape_cast %158 : vector<1x1x1xf32> to vector<1x1xf32>
    %160 = vector.shape_cast %155 : vector<1x1xf32> to vector<1x1x1xf32>
    tpu.vector_store %arg9[%c3_90, %c0_91, %c0_92], %160 {strides = array<i32>} : memref<4x1x1xf32, #tpu.memory_space<vmem>>, vector<1x1x1xf32>,
    %161 = vector.broadcast %148 : vector<8x1xf32> to vector<8x32xf32>
    %162 = arith.subf %143, %161 : vector<8x32xf32>
    %163 = vector.broadcast %155 : vector<1x1xf32> to vector<8x32xf32>
    %164 = arith.subf %162, %163 : vector<8x32xf32>
    %165 = math.exp %164 : vector<8x32xf32>
    %166 = tpu.concatenate %142, %11 in 1 : vector<8x8xf32>, vector<8x1xf32> -> vector<8x9xf32>
    %cst_93 = arith.constant dense<0.000000e+00> : vector<32x9xf32>
    %167 = tpu.matmul %165, %166, %cst_93 {dimension_numbers = #tpu.dot_dimension_numbers<[0], [0], [1], [1], [0, 1, 1, 1], [], []>, precision = #tpu.contract_precision<fp32>} : vector<8x32xf32>, vector<8x9xf32>, vector<32x9xf32> -> vector<32x9xf32>
    %c3_94 = arith.constant 3 : index
    %c0_95 = arith.constant 0 : index
    %c0_96 = arith.constant 0 : index
    %168 = vector.load %arg7[%c3_94, %c0_95, %c0_96] : memref<4x32x9xf32, #tpu.memory_space<vmem>>, vector<1x32x9xf32>
    %169 = vector.shape_cast %168 : vector<1x32x9xf32> to vector<32x9xf32>
    %170 = vector.broadcast %157 : vector<1x1xf32> to vector<32x9xf32>
    %171 = arith.mulf %169, %170 : vector<32x9xf32>
    %172 = arith.addf %171, %167 : vector<32x9xf32>
    %c3_97 = arith.constant 3 : index
    %c0_98 = arith.constant 0 : index
    %c0_99 = arith.constant 0 : index
    %173 = vector.load %arg7[%c3_97, %c0_98, %c0_99] : memref<4x32x9xf32, #tpu.memory_space<vmem>>, vector<1x32x9xf32>
    %174 = vector.shape_cast %173 : vector<1x32x9xf32> to vector<32x9xf32>
    %175 = vector.shape_cast %172 : vector<32x9xf32> to vector<1x32x9xf32>
    tpu.vector_store %arg7[%c3_97, %c0_98, %c0_99], %175 {strides = array<i32>} : memref<4x32x9xf32, #tpu.memory_space<vmem>>, vector<1x32x9xf32>,
    %c3_100 = arith.constant 3 : index
    %c0_101 = arith.constant 0 : index
    %c0_102 = arith.constant 0 : index
    %176 = vector.load %arg8[%c3_100, %c0_101, %c0_102] : memref<4x1x9xf32, #tpu.memory_space<vmem>>, vector<1x1x9xf32>
    %177 = vector.shape_cast %176 : vector<1x1x9xf32> to vector<1x9xf32>
    %cst_103 = arith.constant dense<0.000000e+00> : vector<9xf32>
    %178 = vector.multi_reduction <add>, %166, %cst_103 [0] : vector<8x9xf32> to vector<9xf32>
    %179 = vector.shape_cast %178 : vector<9xf32> to vector<1x9xf32>
    %180 = arith.addf %177, %179 : vector<1x9xf32>
    %c3_104 = arith.constant 3 : index
    %c0_105 = arith.constant 0 : index
    %c0_106 = arith.constant 0 : index
    %181 = vector.load %arg8[%c3_104, %c0_105, %c0_106] : memref<4x1x9xf32, #tpu.memory_space<vmem>>, vector<1x1x9xf32>
    %182 = vector.shape_cast %181 : vector<1x1x9xf32> to vector<1x9xf32>
    %183 = vector.shape_cast %180 : vector<1x9xf32> to vector<1x1x9xf32>
    tpu.vector_store %arg8[%c3_104, %c0_105, %c0_106], %183 {strides = array<i32>} : memref<4x1x9xf32, #tpu.memory_space<vmem>>, vector<1x1x9xf32>,
    %c1_i32 = arith.constant 1 : i32
    %184 = arith.cmpi eq, %arg1, %c1_i32 : i32
    %185 = arith.extui %184 : i1 to i32
    %c0_i32_107 = arith.constant 0 : i32
    %186 = arith.cmpi ne, %185, %c0_i32_107 : i32
    scf.if %186 {
      %c0_108 = arith.constant 0 : index
      %c0_109 = arith.constant 0 : index
      %c0_110 = arith.constant 0 : index
      %187 = vector.load %arg7[%c0_108, %c0_109, %c0_110] : memref<4x32x9xf32, #tpu.memory_space<vmem>>, vector<4x32x9xf32>
      %c0_111 = arith.constant 0 : index
      %c0_112 = arith.constant 0 : index
      %c0_113 = arith.constant 0 : index
      %188 = vector.load %arg8[%c0_111, %c0_112, %c0_113] : memref<4x1x9xf32, #tpu.memory_space<vmem>>, vector<4x1x9xf32>
      %cst_114 = arith.constant 9.99999974E-5 : f32
      %189 = vector.broadcast %cst_114 : f32 to vector<4x1x9xf32>
      %190 = arith.mulf %189, %188 : vector<4x1x9xf32>
      %191 = vector.broadcast %190 : vector<4x1x9xf32> to vector<4x32x9xf32>
      %192 = arith.addf %187, %191 : vector<4x32x9xf32>
      %cst_115 = arith.constant 0.176776692 : f32
      %193 = vector.broadcast %cst_115 : f32 to vector<4x32x9xf32>
      %194 = arith.mulf %193, %192 : vector<4x32x9xf32>
      %c0_116 = arith.constant 0 : index
      %c0_117 = arith.constant 0 : index
      %c0_118 = arith.constant 0 : index
      %c0_119 = arith.constant 0 : index
      %195 = vector.load %arg6[%c0_116, %c0_117, %c0_118, %c0_119] : memref<1x4x32x9xf32, #tpu.memory_space<vmem>>, vector<1x4x32x9xf32>
      %196 = vector.shape_cast %195 : vector<1x4x32x9xf32> to vector<4x32x9xf32>
      %197 = vector.shape_cast %194 : vector<4x32x9xf32> to vector<1x4x32x9xf32>
      tpu.vector_store %arg6[%c0_116, %c0_117, %c0_118, %c0_119], %197 {strides = array<i32>} : memref<1x4x32x9xf32, #tpu.memory_space<vmem>>, vector<1x4x32x9xf32>,
    } else {
    }
    return
  }
  func.func @transform_0(%arg0: i32, %arg1: i32) -> (i32, i32, i32) {
    %c0_i32 = arith.constant 0 : i32
    %c0_i32_0 = arith.constant 0 : i32
    return %arg0, %arg1, %c0_i32 : i32, i32, i32
  }
  func.func @transform_1(%arg0: i32, %arg1: i32) -> (i32, i32) {
    %c0_i32 = arith.constant 0 : i32
    %c0_i32_0 = arith.constant 0 : i32
    %c0_i32_1 = arith.constant 0 : i32
    return %c0_i32, %c0_i32_0 : i32, i32
  }
  func.func @transform_2(%arg0: i32, %arg1: i32) -> (i32, i32) {
    %c0_i32 = arith.constant 0 : i32
    %c0_i32_0 = arith.constant 0 : i32
    %c0_i32_1 = arith.constant 0 : i32
    return %c0_i32, %c0_i32_0 : i32, i32
  }
  func.func @transform_3(%arg0: i32, %arg1: i32) -> (i32, i32) {
    %c0_i32 = arith.constant 0 : i32
    %c0_i32_0 = arith.constant 0 : i32
    %c0_i32_1 = arith.constant 0 : i32
    return %c0_i32, %c0_i32_0 : i32, i32
  }
  func.func @transform_4(%arg0: i32, %arg1: i32) -> (i32, i32, i32, i32) {
    %c0_i32 = arith.constant 0 : i32
    %c0_i32_0 = arith.constant 0 : i32
    %c0_i32_1 = arith.constant 0 : i32
    %c0_i32_2 = arith.constant 0 : i32
    return %arg0, %c0_i32, %c0_i32_0, %c0_i32_1 : i32, i32, i32, i32
  }
}

</mosaic_0001>

<llo_original>
// kernel: tpu_custom_call.1
$region0: #{tpu_custom_call.1}
  #allocation0 [shape = 'u32[]', space=smem, size = 0x4, offset = 0x4, fixed_abs, tag = 'smem constant byte address 0x4 - core index']
  #allocation1 [shape = 'u32[144,128]{1,0:T(1,128)}', space=vmem, size = 0x12000, scoped, tag = 'internal scratch']
  #allocation2 [shape = 'f32[4,32,9]{2,1,0:T(8,128)}', space=vmem, size = 0x10000, scoped, tag = 'scratch operand']
  #allocation3 [shape = 'f32[4,1,9]{2,1,0:T(1,128)}', space=vmem, size = 0x800, scoped, tag = 'scratch operand']
  #allocation4 [shape = 'f32[4,1,1]{2,1,0:T(1,128)}', space=vmem, size = 0x800, scoped, tag = 'scratch operand']
  %s0 = inlined_call_operand.hbm [shape: f32[2,16,32], index: 0, kind: input, shape index: {}]
  %s1 = inlined_call_operand.hbm [shape: f32[32,64], index: 1, kind: input, shape index: {}]
  %s2 = inlined_call_operand.vmem [shape: f32[1,64], index: 2, kind: input, shape index: {}]
  %s3 = inlined_call_operand.vmem [shape: f32[8,32], index: 3, kind: input, shape index: {}]
  %s4 = inlined_call_operand.vmem [shape: f32[2,4,32,9], index: 4, kind: output, shape index: {}]
  %s5 = sld [smem:[#allocation0]]
  $region65: #{tpu_custom_call.1} parent=0
    _
  %s7 = ssub.s32 1, %s5
  %s8 = scalar_select 0, %s7, %s5
  $region1: #{tpu_custom_call.1} parent=0
    #allocation5 [shape = 'u8[8192]{0}', space=vmem, size = 0x2000, scoped, tag = 'input window, operand 0']
    #allocation6 [shape = 's32[2]{0}', space=sflag, size = 0x8, scoped, tag = 'scoped memory for tpu_custom_call.1']
    #allocation7 [shape = 'u8[16384]{0}', space=vmem, size = 0x4000, scoped, tag = 'input window, operand 1, single buffered']
    #allocation8 [shape = 's32[1]{0}', space=sflag, size = 0x4, scoped, tag = 'scoped memory for tpu_custom_call.1']
    %9 = vsyncpa [#allocation6], 0
    %s10 = scalar_lea.sflag [#allocation6], 1
    %11 = vsyncpa %s10, 0
    %12 = vsyncpa [#allocation8], 0
    loop: start=0, step=1, limit=6
    $region2: #{tpu_custom_call.1} parent=1 // loop_pre_header
      _
    $region3: #{tpu_custom_call.1} parent=1 // loop_header
      %s14 = sphi 0, %s18
      %p15 = scmp.ge.s32.totalorder %s14, 6
      %s21 = sphi 0, %s33
      %s22 = sphi 0, %s29
      %s23 = sphi 0, %s21
      %s24 = sphi 0, %s22
      %s25 = sphi 0, %s23
      %s26 = sphi 0, %s24
      %s38 = sphi 0, %s40
      %s41 = sphi 0, %s38
      %s42 = sphi 0, %s41
      %s58 = sphi 0, %s42
      %s62 = sphi 0, %s62
      %s64 = sphi 0, %s62
      %s65 = sphi 0, %s64
      %s79 = sphi 0, %s65
      %s83 = sphi 0, %s83
      %s85 = sphi 0, %s83
      %s86 = sphi 0, %s85
      %s100 = sphi 0, %s86
      %s104 = sphi 0, %s104
      %s106 = sphi 0, %s104
      %s107 = sphi 0, %s106
      %s121 = sphi 0, %s107
      %s127 = sphi 0, %s129
      %s130 = sphi 0, %s127
      %s131 = sphi 0, %s130
      %s147 = sphi 0, %s131
    $region4: #{tpu_custom_call.1} parent=1 // loop_header_branch
      %17 = sbr.rel (%p15) target = $region8
    $region5: #{tpu_custom_call.1} parent=1 // loop_body
      %s19 = ssub.s32 %s14, 1
      %s20 = ssub.s32 %s14, 2
      %s27 = sadd.s32 1, %s22
      %p28 = scmp.ge.s32.totalorder %s27, 2
      %s29 = scalar_select %p28, 0, %s27
      %s30 = sadd.s32 1, %s21
      %s31 = scalar_select %p28, %s30, %s21
      %p32 = scmp.ge.s32.totalorder %s31, 2
      %s33 = scalar_select %p32, 0, %s31
      %s34 = ssub.s32 %s21, %s33
      %s35 = ssub.s32 %s22, %s29
      %s36 = sor.u32 %s34, %s35
      %p37 = scmp.eq.s32.totalorder %s36, 0
      %s39 = sadd.s32 %s38, 1
      %s40 = scalar_select %p37, %s38, %s39
      %p43 = pneg %p37
      %p44 = scmp.eq.s32.totalorder %s14, 3
      %p45 = por %p43, %p44
      %p46 = scmp.ne.s32.totalorder %s38, %s41
      %p47 = scmp.eq.s32.totalorder %s14, 0
      %p48 = por %p46, %p47
      %p49 = scmp.ne.s32.totalorder %s38, %s41
      %p50 = scmp.eq.s32.totalorder %s19, 3
      %p51 = por %p49, %p50
      %p52 = scmp.ne.s32.totalorder %s41, %s42
      %p53 = scmp.eq.s32.totalorder %s19, 0
      %p54 = por %p52, %p53
      %p55 = scmp.ne.s32.totalorder %s41, %s42
      %p56 = scmp.eq.s32.totalorder %s20, 3
      %p57 = por %p55, %p56
      %p59 = scmp.ne.s32.totalorder %s42, %s58
      %p60 = scmp.eq.s32.totalorder %s20, 0
      %p61 = por %p59, %p60
      %s63 = sadd.s32 %s62, 1
      %p66 = scmp.eq.s32.totalorder %s14, 3
      %p67 = scmp.ne.s32.totalorder %s62, %s64
      %p68 = scmp.eq.s32.totalorder %s14, 0
      %p69 = por %p67, %p68
      %p70 = scmp.ne.s32.totalorder %s62, %s64
      %p71 = scmp.eq.s32.totalorder %s19, 3
      %p72 = por %p70, %p71
      %p73 = scmp.ne.s32.totalorder %s64, %s65
      %p74 = scmp.eq.s32.totalorder %s19, 0
      %p75 = por %p73, %p74
      %p76 = scmp.ne.s32.totalorder %s64, %s65
      %p77 = scmp.eq.s32.totalorder %s20, 3
      %p78 = por %p76, %p77
      %p80 = scmp.ne.s32.totalorder %s65, %s79
      %p81 = scmp.eq.s32.totalorder %s20, 0
      %p82 = por %p80, %p81
      %s84 = sadd.s32 %s83, 1
      %p87 = scmp.eq.s32.totalorder %s14, 3
      %p88 = scmp.ne.s32.totalorder %s83, %s85
      %p89 = scmp.eq.s32.totalorder %s14, 0
      %p90 = por %p88, %p89
      %p91 = scmp.ne.s32.totalorder %s83, %s85
      %p92 = scmp.eq.s32.totalorder %s19, 3
      %p93 = por %p91, %p92
      %p94 = scmp.ne.s32.totalorder %s85, %s86
      %p95 = scmp.eq.s32.totalorder %s19, 0
      %p96 = por %p94, %p95
      %p97 = scmp.ne.s32.totalorder %s85, %s86
      %p98 = scmp.eq.s32.totalorder %s20, 3
      %p99 = por %p97, %p98
      %p101 = scmp.ne.s32.totalorder %s86, %s100
      %p102 = scmp.eq.s32.totalorder %s20, 0
      %p103 = por %p101, %p102
      %s105 = sadd.s32 %s104, 1
      %p108 = scmp.eq.s32.totalorder %s14, 3
      %p109 = scmp.ne.s32.totalorder %s104, %s106
      %p110 = scmp.eq.s32.totalorder %s14, 0
      %p111 = por %p109, %p110
      %p112 = scmp.ne.s32.totalorder %s104, %s106
      %p113 = scmp.eq.s32.totalorder %s19, 3
      %p114 = por %p112, %p113
      %p115 = scmp.ne.s32.totalorder %s106, %s107
      %p116 = scmp.eq.s32.totalorder %s19, 0
      %p117 = por %p115, %p116
      %p118 = scmp.ne.s32.totalorder %s106, %s107
      %p119 = scmp.eq.s32.totalorder %s20, 3
      %p120 = por %p118, %p119
      %p122 = scmp.ne.s32.totalorder %s107, %s121
      %p123 = scmp.eq.s32.totalorder %s20, 0
      %p124 = por %p122, %p123
      %s125 = ssub.s32 %s21, %s33
      %p126 = scmp.eq.s32.totalorder %s125, 0
      %s128 = sadd.s32 %s127, 1
      %s129 = scalar_select %p126, %s127, %s128
      %p132 = pneg %p126
      %p133 = scmp.eq.s32.totalorder %s14, 3
      %p134 = por %p132, %p133
      %p135 = scmp.ne.s32.totalorder %s127, %s130
      %p136 = scmp.eq.s32.totalorder %s14, 0
      %p137 = por %p135, %p136
      %p138 = scmp.ne.s32.totalorder %s127, %s130
      %p139 = scmp.eq.s32.totalorder %s19, 3
      %p140 = por %p138, %p139
      %p141 = scmp.ne.s32.totalorder %s130, %s131
      %p142 = scmp.eq.s32.totalorder %s19, 0
      %p143 = por %p141, %p142
      %p144 = scmp.ne.s32.totalorder %s130, %s131
      %p145 = scmp.eq.s32.totalorder %s20, 3
      %p146 = por %p144, %p145
      %p148 = scmp.ne.s32.totalorder %s131, %s147
      %p149 = scmp.eq.s32.totalorder %s20, 0
      %p150 = por %p148, %p149
      %p151 = scmp.le.s32.totalorder 1, %s14
      %p152 = scmp.lt.s32.totalorder %s14, 5
      %p153 = pnand %p151, %p152
      %p154 = pneg %p153
      // Predicated region
      $region9: #{tpu_custom_call.1} parent=5 // pred_check
        _
      $region10: #{tpu_custom_call.1} parent=5 // pred_check_branch
        %156 = sbr.rel (%p153) target = $region12
      $region11: #{tpu_custom_call.1} parent=5 // pred_region
        %s157 = ssub.s32 %s14, 1
        // Predicated region
        $region13: #{tpu_custom_call.1} parent=11 // pred_check
          %p158 = pneg %p75
        $region14: #{tpu_custom_call.1} parent=11 // pred_check_branch
          %160 = sbr.rel (%p158) target = $region16
        $region15: #{tpu_custom_call.1} parent=11 // pred_region
          %s162 = ssub.s32 512, 512
          %163 = vsyncadd [#allocation8], %s162
          %s164 = sshll.u32 [#allocation7], 4
          %s165 = int_to_ptr.vmem [resolvable:$true] %s164
          %170 = dma.hbm_to_vmem [thread:$0]  %s1, 512, %s165, [#allocation8], 128, 128, 8
        $region16: #{tpu_custom_call.1} parent=11 // pred_fallthru
          _
        // Predicated region
        $region17: #{tpu_custom_call.1} parent=11 // pred_check
          %p171 = pneg %p96
        $region18: #{tpu_custom_call.1} parent=11 // pred_check_branch
          %173 = sbr.rel (%p171) target = $region20
        $region19: #{tpu_custom_call.1} parent=11 // pred_region
          _
        $region20: #{tpu_custom_call.1} parent=11 // pred_fallthru
          _
        // Predicated region
        $region21: #{tpu_custom_call.1} parent=11 // pred_check
          %p174 = pneg %p117
        $region22: #{tpu_custom_call.1} parent=11 // pred_check_branch
          %176 = sbr.rel (%p174) target = $region24
        $region23: #{tpu_custom_call.1} parent=11 // pred_region
          _
        $region24: #{tpu_custom_call.1} parent=11 // pred_fallthru
          _
      $region12: #{tpu_custom_call.1} parent=5 // pred_fallthru
        _
      %p177 = scmp.lt.s32.totalorder %s14, 4
      // Predicated region
      $region25: #{tpu_custom_call.1} parent=5 // pred_check
        %p178 = pneg %p177
      $region26: #{tpu_custom_call.1} parent=5 // pred_check_branch
        %180 = sbr.rel (%p178) target = $region28
      $region27: #{tpu_custom_call.1} parent=5 // pred_region
        // Predicated region
        $region29: #{tpu_custom_call.1} parent=27 // pred_check
          %p181 = pneg %p48
        $region30: #{tpu_custom_call.1} parent=27 // pred_check_branch
          %183 = sbr.rel (%p181) target = $region32
        $region31: #{tpu_custom_call.1} parent=27 // pred_region
          %s184 = sand.u32 %s38, 1
          %s185 = scalar_lea.sflag [#allocation6], %s184
          %s186 = sand.u32 %s38, 1
          %s187 = smul.addr %s186, 8
          %s188 = scalar_lea.vmem [#allocation5], %s187
          %s190 = ssub.s32 128, 128
          %191 = vsyncadd %s185, %s190
          %s192 = smul.addr %s21, 2
          %s193 = sadd.s32 %s22, %s192
          %s194 = smul.addr %s193, 128
          %s195 = scalar_lea.hbm %s0, %s194
          %s197 = sshll.u32 %s188, 4
          %s198 = int_to_ptr.vmem [resolvable:$true] %s197
          %200 = dma.hbm_to_vmem [thread:$0]  %s195, 128, %s198, %s185
        $region32: #{tpu_custom_call.1} parent=27 // pred_fallthru
          _
      $region28: #{tpu_custom_call.1} parent=5 // pred_fallthru
        _
      %p201 = scmp.le.s32.totalorder 1, %s14
      %p202 = scmp.lt.s32.totalorder %s14, 5
      %p203 = pnand %p201, %p202
      %p204 = pneg %p203
      // Predicated region
      $region33: #{tpu_custom_call.1} parent=5 // pred_check
        _
      $region34: #{tpu_custom_call.1} parent=5 // pred_check_branch
        %206 = sbr.rel (%p203) target = $region36
      $region35: #{tpu_custom_call.1} parent=5 // pred_region
        %s207 = ssub.s32 %s14, 1
        %s208 = sand.u32 %s41, 1
        %s209 = scalar_lea.sflag [#allocation6], %s208
        %s210 = sand.u32 %s41, 1
        %s211 = smul.addr %s210, 8
        %s212 = scalar_lea.vmem [#allocation5], %s211
        // Predicated region
        $region37: #{tpu_custom_call.1} parent=35 // pred_check
          %p213 = pneg %p54
        $region38: #{tpu_custom_call.1} parent=35 // pred_check_branch
          %215 = sbr.rel (%p213) target = $region40
        $region39: #{tpu_custom_call.1} parent=35 // pred_region
          %216 = dma.done %s209, 128
        $region40: #{tpu_custom_call.1} parent=35 // pred_fallthru
          _
        // Predicated region
        $region41: #{tpu_custom_call.1} parent=35 // pred_check
          %p217 = pneg %p75
        $region42: #{tpu_custom_call.1} parent=35 // pred_check_branch
          %219 = sbr.rel (%p217) target = $region44
        $region43: #{tpu_custom_call.1} parent=35 // pred_region
          %220 = dma.done [#allocation8], 512
        $region44: #{tpu_custom_call.1} parent=35 // pred_fallthru
          _
        %s221 = sand.u32 %s41, 1
        %s222 = scalar_lea.sflag [#allocation6], %s221
        %s223 = sand.u32 %s41, 1
        %s224 = smul.addr %s223, 8
        %s225 = scalar_lea.vmem [#allocation5], %s224
        %p226 = pneg %p54
        %p227 = pneg %p51
        %p228 = pneg %p75
        %p229 = pneg %p72
        %p230 = pneg %p96
        %p231 = pneg %p93
        %p232 = pneg %p117
        %p233 = pneg %p114
        %p234 = pneg %p143
        %p235 = pneg %p140
        %p236 = scmp.lt.s32.totalorder %s23, 1
        %s237 = scalar_select %p236, %s23, 1
        %s238 = smul.addr %s237, 16
        %s239 = smul.addr %s238, 8
        %s240 = scalar_lea.vmem %s4, %s239
        %p241 = scmp.lt.s32.totalorder %s23, 1
        %s242 = scalar_select %p241, %s23, 1
        %s243 = smul.addr %s242, 16
        %s244 = smul.addr %s243, 8
        %s245 = scalar_lea.vmem %s4, %s244
        %p246 = scmp.eq.s32.totalorder %s24, 0
        // Predicated region
        $region45: #{tpu_custom_call.1} parent=35 // pred_check
          %p247 = pneg %p246
        $region46: #{tpu_custom_call.1} parent=35 // pred_check_branch
          %249 = sbr.rel (%p247) target = $region48
        $region47: #{tpu_custom_call.1} parent=35 // pred_region
          %vm250 = vcmask 72704
          %251 = vst.msk [vmem:[#allocation2] sm:$0xff] %vm250, 0.0
          %252 = vst.msk [vmem:[#allocation2 + $0x8] sm:$0xff] %vm250, 0.0
          %253 = vst.msk [vmem:[#allocation2 + $0x10] sm:$0xff] %vm250, 0.0
          %254 = vst.msk [vmem:[#allocation2 + $0x18] sm:$0xff] %vm250, 0.0
          %255 = vst.msk [vmem:[#allocation2 + $0x20] sm:$0xff] %vm250, 0.0
          %256 = vst.msk [vmem:[#allocation2 + $0x28] sm:$0xff] %vm250, 0.0
          %257 = vst.msk [vmem:[#allocation2 + $0x30] sm:$0xff] %vm250, 0.0
          %258 = vst.msk [vmem:[#allocation2 + $0x38] sm:$0xff] %vm250, 0.0
          %259 = vst.msk [vmem:[#allocation2 + $0x40] sm:$0xff] %vm250, 0.0
          %260 = vst.msk [vmem:[#allocation2 + $0x48] sm:$0xff] %vm250, 0.0
          %261 = vst.msk [vmem:[#allocation2 + $0x50] sm:$0xff] %vm250, 0.0
          %262 = vst.msk [vmem:[#allocation2 + $0x58] sm:$0xff] %vm250, 0.0
          %263 = vst.msk [vmem:[#allocation2 + $0x60] sm:$0xff] %vm250, 0.0
          %264 = vst.msk [vmem:[#allocation2 + $0x68] sm:$0xff] %vm250, 0.0
          %265 = vst.msk [vmem:[#allocation2 + $0x70] sm:$0xff] %vm250, 0.0
          %266 = vst.msk [vmem:[#allocation2 + $0x78] sm:$0xff] %vm250, 0.0
          %vm267 = vcmask 65536
          %268 = vst.msk [vmem:[#allocation3] sm:$0x1] %vm267, 0.0
          %269 = vst.msk [vmem:[#allocation3 + $0x1] sm:$0x1] %vm267, 0.0
          %270 = vst.msk [vmem:[#allocation3 + $0x2] sm:$0x1] %vm267, 0.0
          %271 = vst.msk [vmem:[#allocation3 + $0x3] sm:$0x1] %vm267, 0.0
          %vm272 = vcmask 0
          %273 = vst.msk [vmem:[#allocation4] sm:$0x1] %vm272, -inf
          %274 = vst.msk [vmem:[#allocation4 + $0x1] sm:$0x1] %vm272, -inf
          %275 = vst.msk [vmem:[#allocation4 + $0x2] sm:$0x1] %vm272, -inf
          %276 = vst.msk [vmem:[#allocation4 + $0x3] sm:$0x1] %vm272, -inf
        $region48: #{tpu_custom_call.1} parent=35 // pred_fallthru
          _
        %v277 = vld [vmem:[%s212] sm:$0xff]
        %v278 = vld [vmem:[#allocation7] sm:$0xff]
        %v279 = vld [vmem:[#allocation7 + $0x8] sm:$0xff]
        %v280 = vld [vmem:[#allocation7 + $0x10] sm:$0xff]
        %v281 = vld [vmem:[#allocation7 + $0x18] sm:$0xff]
        %v282 = vld [vmem:[%s2] sm:$0x1]
        %v284 = vlaneseq
        %v285 = vshrl.u32 %v284, 7
        %v286 = vsub.s32 0, %v285
        %v287 = vrot.slane %v282, %v286
        %vm289 = vcmask 261120
        %v291 = vsel %vm289, %v277, 0
        %293 = vmatprep.subr.mxu0 0.0
        %v294 = vand.u32 %v278, 4294901760
        %295 = vmatpush1.msra.mxu0 %v294
        %296 = vmatprep.subr.mxu0 0.0
        %v297 = vand.u32 %v279, 4294901760
        %298 = vmatpush1.msra.mxu0 %v297
        %299 = vmatprep.subr.mxu0 0.0
        %v300 = vand.u32 %v280, 4294901760
        %301 = vmatpush1.msra.mxu0 %v300
        %302 = vmatprep.subr.mxu0 0.0
        %v303 = vand.u32 %v281, 4294901760
        %304 = vmatpush1.msra.mxu0 %v303
        %305 = vmatprep.subr.mxu0 0.0
        %306 = vmatpush1.msra.mxu0 0.0
        %307 = vmatprep.subr.mxu0 0.0
        %308 = vmatpush1.msra.mxu0 0.0
        %309 = vmatprep.subr.mxu0 0.0
        %310 = vmatpush1.msra.mxu0 0.0
        %311 = vmatprep.subr.mxu0 0.0
        %312 = vmatpush1.msra.mxu0 0.0
        %313 = vmatprep.subr.mxu0 0.0
        %314 = vmatpush1.msra.mxu0 0.0
        %315 = vmatprep.subr.mxu0 0.0
        %316 = vmatpush1.msra.mxu0 0.0
        %317 = vmatprep.subr.mxu0 0.0
        %318 = vmatpush1.msra.mxu0 0.0
        %319 = vmatprep.subr.mxu0 0.0
        %320 = vmatpush1.msra.mxu0 0.0
        %321 = vmatprep.subr.mxu0 0.0
        %322 = vmatpush1.msra.mxu0 0.0
        %323 = vmatprep.subr.mxu0 0.0
        %324 = vmatpush1.msra.mxu0 0.0
        %325 = vmatprep.subr.mxu0 0.0
        %326 = vmatpush1.msra.mxu0 0.0
        %327 = vmatprep.subr.mxu0 0.0
        %328 = vmatpush1.msra.mxu0 0.0
        %329 = vmatprep.subr.mxu0 0.0
        %330 = vmatpush1.msra.mxu0 0.0
        %331 = vmatprep.subr.mxu0 0.0
        %332 = vmatpush1.msra.mxu0 0.0
        %333 = vmatprep.subr.mxu0 0.0
        %334 = vmatpush1.msra.mxu0 0.0
        %335 = vmatprep.subr.mxu0 0.0
        %336 = vmatpush1.msra.mxu0 0.0
        %337 = vmatprep.subr.mxu0 0.0
        %338 = vmatpush1.msra.mxu0 0.0
        %339 = vmatprep.subr.mxu0 0.0
        %340 = vmatpush1.msra.mxu0 0.0
        %341 = vmatprep.subr.mxu0 0.0
        %342 = vmatpush1.msra.mxu0 0.0
        %343 = vmatprep.subr.mxu0 0.0
        %344 = vmatpush1.msra.mxu0 0.0
        %345 = vmatprep.subr.mxu0 0.0
        %346 = vmatpush1.msra.mxu0 0.0
        %347 = vmatprep.subr.mxu0 0.0
        %348 = vmatpush1.msra.mxu0 0.0
        %349 = vmatprep.subr.mxu0 0.0
        %350 = vmatpush1.msra.mxu0 0.0
        %351 = vmatprep.subr.mxu0 0.0
        %352 = vmatpush1.msra.mxu0 0.0
        %353 = vmatprep.subr.mxu0 0.0
        %354 = vmatpush1.msra.mxu0 0.0
        %355 = vmatprep.subr.mxu0 0.0
        %356 = vmatpush1.msra.mxu0 0.0
        %357 = vmatprep.subr.mxu0 0.0
        %358 = vmatpush1.msra.mxu0 0.0
        %359 = vmatprep.subr.mxu0 0.0
        %360 = vmatpush1.msra.mxu0 0.0
        %361 = vmatprep.mubr.f32.mxu0 0.0
        %v362 = vand.u32 %v291, 4294901760
        %v363 = vsub.f32 %v291, %v362
        %v364 = vand.u32 %v363, 4294901760
        %v365 = vsub.f32 %v363, %v364
        %v366 = vand.u32 %v365, 4294901760
        %367 = vmatmul.mubr.f32.gmra.mrb[0].mxu0 %v366
        %v368 = vpop.f32.mrb[0].mxu0
        %v369 = vadd.f32 %v287, %v368
        %v370 = vpop.f32.mrb[0].mxu0
        %371 = vdwg.mxu0
        %372 = vmatprep.subr.mxu0 0.0
        %v373 = vand.u32 %v278, 4294901760
        %v374 = vsub.f32 %v278, %v373
        %v375 = vand.u32 %v374, 4294901760
        %v376 = vsub.f32 %v374, %v375
        %v377 = vand.u32 %v376, 4294901760
        %378 = vmatpush1.msra.mxu0 %v377
        %379 = vmatprep.subr.mxu0 0.0
        %v380 = vand.u32 %v279, 4294901760
        %v381 = vsub.f32 %v279, %v380
        %v382 = vand.u32 %v381, 4294901760
        %v383 = vsub.f32 %v381, %v382
        %v384 = vand.u32 %v383, 4294901760
        %385 = vmatpush1.msra.mxu0 %v384
        %386 = vmatprep.subr.mxu0 0.0
        %v387 = vand.u32 %v280, 4294901760
        %v388 = vsub.f32 %v280, %v387
        %v389 = vand.u32 %v388, 4294901760
        %v390 = vsub.f32 %v388, %v389
        %v391 = vand.u32 %v390, 4294901760
        %392 = vmatpush1.msra.mxu0 %v391
        %393 = vmatprep.subr.mxu0 0.0
        %v394 = vand.u32 %v281, 4294901760
        %v395 = vsub.f32 %v281, %v394
        %v396 = vand.u32 %v395, 4294901760
        %v397 = vsub.f32 %v395, %v396
        %v398 = vand.u32 %v397, 4294901760
        %399 = vmatpush1.msra.mxu0 %v398
        %400 = vmatprep.subr.mxu0 0.0
        %401 = vmatpush1.msra.mxu0 0.0
        %402 = vmatprep.subr.mxu0 0.0
        %403 = vmatpush1.msra.mxu0 0.0
        %404 = vmatprep.subr.mxu0 0.0
        %405 = vmatpush1.msra.mxu0 0.0
        %406 = vmatprep.subr.mxu0 0.0
        %407 = vmatpush1.msra.mxu0 0.0
        %408 = vmatprep.subr.mxu0 0.0
        %409 = vmatpush1.msra.mxu0 0.0
        %410 = vmatprep.subr.mxu0 0.0
        %411 = vmatpush1.msra.mxu0 0.0
        %412 = vmatprep.subr.mxu0 0.0
        %413 = vmatpush1.msra.mxu0 0.0
        %414 = vmatprep.subr.mxu0 0.0
        %415 = vmatpush1.msra.mxu0 0.0
        %416 = vmatprep.subr.mxu0 0.0
        %417 = vmatpush1.msra.mxu0 0.0
        %418 = vmatprep.subr.mxu0 0.0
        %419 = vmatpush1.msra.mxu0 0.0
        %420 = vmatprep.subr.mxu0 0.0
        %421 = vmatpush1.msra.mxu0 0.0
        %422 = vmatprep.subr.mxu0 0.0
        %423 = vmatpush1.msra.mxu0 0.0
        %424 = vmatprep.subr.mxu0 0.0
        %425 = vmatpush1.msra.mxu0 0.0
        %426 = vmatprep.subr.mxu0 0.0
        %427 = vmatpush1.msra.mxu0 0.0
        %428 = vmatprep.subr.mxu0 0.0
        %429 = vmatpush1.msra.mxu0 0.0
        %430 = vmatprep.subr.mxu0 0.0
        %431 = vmatpush1.msra.mxu0 0.0
        %432 = vmatprep.subr.mxu0 0.0
        %433 = vmatpush1.msra.mxu0 0.0
        %434 = vmatprep.subr.mxu0 0.0
        %435 = vmatpush1.msra.mxu0 0.0
        %436 = vmatprep.subr.mxu0 0.0
        %437 = vmatpush1.msra.mxu0 0.0
        %438 = vmatprep.subr.mxu0 0.0
        %439 = vmatpush1.msra.mxu0 0.0
        %440 = vmatprep.subr.mxu0 0.0
        %441 = vmatpush1.msra.mxu0 0.0
        %442 = vmatprep.subr.mxu0 0.0
        %443 = vmatpush1.msra.mxu0 0.0
        %444 = vmatprep.subr.mxu0 0.0
        %445 = vmatpush1.msra.mxu0 0.0
        %446 = vmatprep.subr.mxu0 0.0
        %447 = vmatpush1.msra.mxu0 0.0
        %448 = vmatprep.subr.mxu0 0.0
        %449 = vmatpush1.msra.mxu0 0.0
        %450 = vmatprep.subr.mxu0 0.0
        %451 = vmatpush1.msra.mxu0 0.0
        %452 = vmatprep.subr.mxu0 0.0
        %453 = vmatpush1.msra.mxu0 0.0
        %454 = vmatprep.subr.mxu0 0.0
        %455 = vmatpush1.msra.mxu0 0.0
        %456 = vmatprep.mubr.f32.mxu0 0.0
        %v457 = vand.u32 %v291, 4294901760
        %458 = vmatmul.mubr.f32.gmra.mrb[0].mxu0 %v457
        %v459 = vpop.f32.mrb[0].mxu0
        %v460 = vadd.f32 %v369, %v459
        %v461 = vpop.f32.mrb[0].mxu0
        %462 = vdwg.mxu0
        %463 = vmatprep.subr.mxu0 0.0
        %v464 = vand.u32 %v278, 4294901760
        %v465 = vsub.f32 %v278, %v464
        %466 = vmatpush1.msra.mxu0 %v465
        %467 = vmatprep.subr.mxu0 0.0
        %v468 = vand.u32 %v279, 4294901760
        %v469 = vsub.f32 %v279, %v468
        %470 = vmatpush1.msra.mxu0 %v469
        %471 = vmatprep.subr.mxu0 0.0
        %v472 = vand.u32 %v280, 4294901760
        %v473 = vsub.f32 %v280, %v472
        %474 = vmatpush1.msra.mxu0 %v473
        %475 = vmatprep.subr.mxu0 0.0
        %v476 = vand.u32 %v281, 4294901760
        %v477 = vsub.f32 %v281, %v476
        %478 = vmatpush1.msra.mxu0 %v477
        %479 = vmatprep.subr.mxu0 0.0
        %480 = vmatpush1.msra.mxu0 0.0
        %481 = vmatprep.subr.mxu0 0.0
        %482 = vmatpush1.msra.mxu0 0.0
        %483 = vmatprep.subr.mxu0 0.0
        %484 = vmatpush1.msra.mxu0 0.0
        %485 = vmatprep.subr.mxu0 0.0
        %486 = vmatpush1.msra.mxu0 0.0
        %487 = vmatprep.subr.mxu0 0.0
        %488 = vmatpush1.msra.mxu0 0.0
        %489 = vmatprep.subr.mxu0 0.0
        %490 = vmatpush1.msra.mxu0 0.0
        %491 = vmatprep.subr.mxu0 0.0
        %492 = vmatpush1.msra.mxu0 0.0
        %493 = vmatprep.subr.mxu0 0.0
        %494 = vmatpush1.msra.mxu0 0.0
        %495 = vmatprep.subr.mxu0 0.0
        %496 = vmatpush1.msra.mxu0 0.0
        %497 = vmatprep.subr.mxu0 0.0
        %498 = vmatpush1.msra.mxu0 0.0
        %499 = vmatprep.subr.mxu0 0.0
        %500 = vmatpush1.msra.mxu0 0.0
        %501 = vmatprep.subr.mxu0 0.0
        %502 = vmatpush1.msra.mxu0 0.0
        %503 = vmatprep.subr.mxu0 0.0
        %504 = vmatpush1.msra.mxu0 0.0
        %505 = vmatprep.subr.mxu0 0.0
        %506 = vmatpush1.msra.mxu0 0.0
        %507 = vmatprep.subr.mxu0 0.0
        %508 = vmatpush1.msra.mxu0 0.0
        %509 = vmatprep.subr.mxu0 0.0
        %510 = vmatpush1.msra.mxu0 0.0
        %511 = vmatprep.subr.mxu0 0.0
        %512 = vmatpush1.msra.mxu0 0.0
        %513 = vmatprep.subr.mxu0 0.0
        %514 = vmatpush1.msra.mxu0 0.0
        %515 = vmatprep.subr.mxu0 0.0
        %516 = vmatpush1.msra.mxu0 0.0
        %517 = vmatprep.subr.mxu0 0.0
        %518 = vmatpush1.msra.mxu0 0.0
        %519 = vmatprep.subr.mxu0 0.0
        %520 = vmatpush1.msra.mxu0 0.0
        %521 = vmatprep.subr.mxu0 0.0
        %522 = vmatpush1.msra.mxu0 0.0
        %523 = vmatprep.subr.mxu0 0.0
        %524 = vmatpush1.msra.mxu0 0.0
        %525 = vmatprep.subr.mxu0 0.0
        %526 = vmatpush1.msra.mxu0 0.0
        %527 = vmatprep.subr.mxu0 0.0
        %528 = vmatpush1.msra.mxu0 0.0
        %529 = vmatprep.subr.mxu0 0.0
        %530 = vmatpush1.msra.mxu0 0.0
        %531 = vmatprep.subr.mxu0 0.0
        %532 = vmatpush1.msra.mxu0 0.0
        %533 = vmatprep.subr.mxu0 0.0
        %534 = vmatpush1.msra.mxu0 0.0
        %535 = vmatprep.mubr.f32.mxu0 0.0
        %v536 = vand.u32 %v291, 4294901760
        %v537 = vsub.f32 %v291, %v536
        %538 = vmatmul.mubr.f32.gmra.mrb[0].mxu0 %v537
        %v539 = vpop.f32.mrb[0].mxu0
        %v540 = vadd.f32 %v460, %v539
        %v541 = vpop.f32.mrb[0].mxu0
        %542 = vdwg.mxu0
        %543 = vmatprep.subr.mxu0 0.0
        %v544 = vand.u32 %v278, 4294901760
        %545 = vmatpush1.msra.mxu0 %v544
        %546 = vmatprep.subr.mxu0 0.0
        %v547 = vand.u32 %v279, 4294901760
        %548 = vmatpush1.msra.mxu0 %v547
        %549 = vmatprep.subr.mxu0 0.0
        %v550 = vand.u32 %v280, 4294901760
        %551 = vmatpush1.msra.mxu0 %v550
        %552 = vmatprep.subr.mxu0 0.0
        %v553 = vand.u32 %v281, 4294901760
        %554 = vmatpush1.msra.mxu0 %v553
        %555 = vmatprep.subr.mxu0 0.0
        %556 = vmatpush1.msra.mxu0 0.0
        %557 = vmatprep.subr.mxu0 0.0
        %558 = vmatpush1.msra.mxu0 0.0
        %559 = vmatprep.subr.mxu0 0.0
        %560 = vmatpush1.msra.mxu0 0.0
        %561 = vmatprep.subr.mxu0 0.0
        %562 = vmatpush1.msra.mxu0 0.0
        %563 = vmatprep.subr.mxu0 0.0
        %564 = vmatpush1.msra.mxu0 0.0
        %565 = vmatprep.subr.mxu0 0.0
        %566 = vmatpush1.msra.mxu0 0.0
        %567 = vmatprep.subr.mxu0 0.0
        %568 = vmatpush1.msra.mxu0 0.0
        %569 = vmatprep.subr.mxu0 0.0
        %570 = vmatpush1.msra.mxu0 0.0
        %571 = vmatprep.subr.mxu0 0.0
        %572 = vmatpush1.msra.mxu0 0.0
        %573 = vmatprep.subr.mxu0 0.0
        %574 = vmatpush1.msra.mxu0 0.0
        %575 = vmatprep.subr.mxu0 0.0
        %576 = vmatpush1.msra.mxu0 0.0
        %577 = vmatprep.subr.mxu0 0.0
        %578 = vmatpush1.msra.mxu0 0.0
        %579 = vmatprep.subr.mxu0 0.0
        %580 = vmatpush1.msra.mxu0 0.0
        %581 = vmatprep.subr.mxu0 0.0
        %582 = vmatpush1.msra.mxu0 0.0
        %583 = vmatprep.subr.mxu0 0.0
        %584 = vmatpush1.msra.mxu0 0.0
        %585 = vmatprep.subr.mxu0 0.0
        %586 = vmatpush1.msra.mxu0 0.0
        %587 = vmatprep.subr.mxu0 0.0
        %588 = vmatpush1.msra.mxu0 0.0
        %589 = vmatprep.subr.mxu0 0.0
        %590 = vmatpush1.msra.mxu0 0.0
        %591 = vmatprep.subr.mxu0 0.0
        %592 = vmatpush1.msra.mxu0 0.0
        %593 = vmatprep.subr.mxu0 0.0
        %594 = vmatpush1.msra.mxu0 0.0
        %595 = vmatprep.subr.mxu0 0.0
        %596 = vmatpush1.msra.mxu0 0.0
        %597 = vmatprep.subr.mxu0 0.0
        %598 = vmatpush1.msra.mxu0 0.0
        %599 = vmatprep.subr.mxu0 0.0
        %600 = vmatpush1.msra.mxu0 0.0
        %601 = vmatprep.subr.mxu0 0.0
        %602 = vmatpush1.msra.mxu0 0.0
        %603 = vmatprep.subr.mxu0 0.0
        %604 = vmatpush1.msra.mxu0 0.0
        %605 = vmatprep.subr.mxu0 0.0
        %606 = vmatpush1.msra.mxu0 0.0
        %607 = vmatprep.subr.mxu0 0.0
        %608 = vmatpush1.msra.mxu0 0.0
        %609 = vmatprep.subr.mxu0 0.0
        %610 = vmatpush1.msra.mxu0 0.0
        %611 = vmatprep.mubr.f32.mxu0 0.0
        %v612 = vand.u32 %v291, 4294901760
        %v613 = vsub.f32 %v291, %v612
        %v614 = vand.u32 %v613, 4294901760
        %615 = vmatmul.mubr.f32.gmra.mrb[0].mxu0 %v614
        %v616 = vpop.f32.mrb[0].mxu0
        %v617 = vadd.f32 %v540, %v616
        %v618 = vpop.f32.mrb[0].mxu0
        %619 = vdwg.mxu0
        %620 = vmatprep.subr.mxu0 0.0
        %v621 = vand.u32 %v278, 4294901760
        %v622 = vsub.f32 %v278, %v621
        %v623 = vand.u32 %v622, 4294901760
        %624 = vmatpush1.msra.mxu0 %v623
        %625 = vmatprep.subr.mxu0 0.0
        %v626 = vand.u32 %v279, 4294901760
        %v627 = vsub.f32 %v279, %v626
        %v628 = vand.u32 %v627, 4294901760
        %629 = vmatpush1.msra.mxu0 %v628
        %630 = vmatprep.subr.mxu0 0.0
        %v631 = vand.u32 %v280, 4294901760
        %v632 = vsub.f32 %v280, %v631
        %v633 = vand.u32 %v632, 4294901760
        %634 = vmatpush1.msra.mxu0 %v633
        %635 = vmatprep.subr.mxu0 0.0
        %v636 = vand.u32 %v281, 4294901760
        %v637 = vsub.f32 %v281, %v636
        %v638 = vand.u32 %v637, 4294901760
        %639 = vmatpush1.msra.mxu0 %v638
        %640 = vmatprep.subr.mxu0 0.0
        %641 = vmatpush1.msra.mxu0 0.0
        %642 = vmatprep.subr.mxu0 0.0
        %643 = vmatpush1.msra.mxu0 0.0
        %644 = vmatprep.subr.mxu0 0.0
        %645 = vmatpush1.msra.mxu0 0.0
        %646 = vmatprep.subr.mxu0 0.0
        %647 = vmatpush1.msra.mxu0 0.0
        %648 = vmatprep.subr.mxu0 0.0
        %649 = vmatpush1.msra.mxu0 0.0
        %650 = vmatprep.subr.mxu0 0.0
        %651 = vmatpush1.msra.mxu0 0.0
        %652 = vmatprep.subr.mxu0 0.0
        %653 = vmatpush1.msra.mxu0 0.0
        %654 = vmatprep.subr.mxu0 0.0
        %655 = vmatpush1.msra.mxu0 0.0
        %656 = vmatprep.subr.mxu0 0.0
        %657 = vmatpush1.msra.mxu0 0.0
        %658 = vmatprep.subr.mxu0 0.0
        %659 = vmatpush1.msra.mxu0 0.0
        %660 = vmatprep.subr.mxu0 0.0
        %661 = vmatpush1.msra.mxu0 0.0
        %662 = vmatprep.subr.mxu0 0.0
        %663 = vmatpush1.msra.mxu0 0.0
        %664 = vmatprep.subr.mxu0 0.0
        %665 = vmatpush1.msra.mxu0 0.0
        %666 = vmatprep.subr.mxu0 0.0
        %667 = vmatpush1.msra.mxu0 0.0
        %668 = vmatprep.subr.mxu0 0.0
        %669 = vmatpush1.msra.mxu0 0.0
        %670 = vmatprep.subr.mxu0 0.0
        %671 = vmatpush1.msra.mxu0 0.0
        %672 = vmatprep.subr.mxu0 0.0
        %673 = vmatpush1.msra.mxu0 0.0
        %674 = vmatprep.subr.mxu0 0.0
        %675 = vmatpush1.msra.mxu0 0.0
        %676 = vmatprep.subr.mxu0 0.0
        %677 = vmatpush1.msra.mxu0 0.0
        %678 = vmatprep.subr.mxu0 0.0
        %679 = vmatpush1.msra.mxu0 0.0
        %680 = vmatprep.subr.mxu0 0.0
        %681 = vmatpush1.msra.mxu0 0.0
        %682 = vmatprep.subr.mxu0 0.0
        %683 = vmatpush1.msra.mxu0 0.0
        %684 = vmatprep.subr.mxu0 0.0
        %685 = vmatpush1.msra.mxu0 0.0
        %686 = vmatprep.subr.mxu0 0.0
        %687 = vmatpush1.msra.mxu0 0.0
        %688 = vmatprep.subr.mxu0 0.0
        %689 = vmatpush1.msra.mxu0 0.0
        %690 = vmatprep.subr.mxu0 0.0
        %691 = vmatpush1.msra.mxu0 0.0
        %692 = vmatprep.subr.mxu0 0.0
        %693 = vmatpush1.msra.mxu0 0.0
        %694 = vmatprep.subr.mxu0 0.0
        %695 = vmatpush1.msra.mxu0 0.0
        %696 = vmatprep.mubr.f32.mxu0 0.0
        %v697 = vand.u32 %v291, 4294901760
        %698 = vmatmul.mubr.f32.gmra.mrb[0].mxu0 %v697
        %v699 = vpop.f32.mrb[0].mxu0
        %v700 = vadd.f32 %v617, %v699
        %v701 = vpop.f32.mrb[0].mxu0
        %702 = vdwg.mxu0
        %703 = vmatprep.subr.mxu0 0.0
        %v704 = vand.u32 %v278, 4294901760
        %705 = vmatpush1.msra.mxu0 %v704
        %706 = vmatprep.subr.mxu0 0.0
        %v707 = vand.u32 %v279, 4294901760
        %708 = vmatpush1.msra.mxu0 %v707
        %709 = vmatprep.subr.mxu0 0.0
        %v710 = vand.u32 %v280, 4294901760
        %711 = vmatpush1.msra.mxu0 %v710
        %712 = vmatprep.subr.mxu0 0.0
        %v713 = vand.u32 %v281, 4294901760
        %714 = vmatpush1.msra.mxu0 %v713
        %715 = vmatprep.subr.mxu0 0.0
        %716 = vmatpush1.msra.mxu0 0.0
        %717 = vmatprep.subr.mxu0 0.0
        %718 = vmatpush1.msra.mxu0 0.0
        %719 = vmatprep.subr.mxu0 0.0
        %720 = vmatpush1.msra.mxu0 0.0
        %721 = vmatprep.subr.mxu0 0.0
        %722 = vmatpush1.msra.mxu0 0.0
        %723 = vmatprep.subr.mxu0 0.0
        %724 = vmatpush1.msra.mxu0 0.0
        %725 = vmatprep.subr.mxu0 0.0
        %726 = vmatpush1.msra.mxu0 0.0
        %727 = vmatprep.subr.mxu0 0.0
        %728 = vmatpush1.msra.mxu0 0.0
        %729 = vmatprep.subr.mxu0 0.0
        %730 = vmatpush1.msra.mxu0 0.0
        %731 = vmatprep.subr.mxu0 0.0
        %732 = vmatpush1.msra.mxu0 0.0
        %733 = vmatprep.subr.mxu0 0.0
        %734 = vmatpush1.msra.mxu0 0.0
        %735 = vmatprep.subr.mxu0 0.0
        %736 = vmatpush1.msra.mxu0 0.0
        %737 = vmatprep.subr.mxu0 0.0
        %738 = vmatpush1.msra.mxu0 0.0
        %739 = vmatprep.subr.mxu0 0.0
        %740 = vmatpush1.msra.mxu0 0.0
        %741 = vmatprep.subr.mxu0 0.0
        %742 = vmatpush1.msra.mxu0 0.0
        %743 = vmatprep.subr.mxu0 0.0
        %744 = vmatpush1.msra.mxu0 0.0
        %745 = vmatprep.subr.mxu0 0.0
        %746 = vmatpush1.msra.mxu0 0.0
        %747 = vmatprep.subr.mxu0 0.0
        %748 = vmatpush1.msra.mxu0 0.0
        %749 = vmatprep.subr.mxu0 0.0
        %750 = vmatpush1.msra.mxu0 0.0
        %751 = vmatprep.subr.mxu0 0.0
        %752 = vmatpush1.msra.mxu0 0.0
        %753 = vmatprep.subr.mxu0 0.0
        %754 = vmatpush1.msra.mxu0 0.0
        %755 = vmatprep.subr.mxu0 0.0
        %756 = vmatpush1.msra.mxu0 0.0
        %757 = vmatprep.subr.mxu0 0.0
        %758 = vmatpush1.msra.mxu0 0.0
        %759 = vmatprep.subr.mxu0 0.0
        %760 = vmatpush1.msra.mxu0 0.0
        %761 = vmatprep.subr.mxu0 0.0
        %762 = vmatpush1.msra.mxu0 0.0
        %763 = vmatprep.subr.mxu0 0.0
        %764 = vmatpush1.msra.mxu0 0.0
        %765 = vmatprep.subr.mxu0 0.0
        %766 = vmatpush1.msra.mxu0 0.0
        %767 = vmatprep.subr.mxu0 0.0
        %768 = vmatpush1.msra.mxu0 0.0
        %769 = vmatprep.subr.mxu0 0.0
        %770 = vmatpush1.msra.mxu0 0.0
        %771 = vmatprep.mubr.f32.mxu0 0.0
        %v772 = vand.u32 %v291, 4294901760
        %773 = vmatmul.mubr.f32.gmra.mrb[0].mxu0 %v772
        %v774 = vpop.f32.mrb[0].mxu0
        %v775 = vadd.f32 %v700, %v774
        %v776 = vpop.f32.mrb[0].mxu0
        %777 = vdwg.mxu0
        %v778 = vld [vmem:[%s3] sm:$0xff]
        %vm779 = vcmask 64512
        %v781 = vsel %vm779, %v775, 0
        %783 = vmatprep.subr.mxu0 0.0
        %v784 = vand.u32 %v778, 4294901760
        %785 = vmatpush1.msra.mxu0 %v784
        %786 = vmatprep.subr.mxu0 0.0
        %787 = vmatpush1.msra.mxu0 0.0
        %788 = vmatprep.subr.mxu0 0.0
        %789 = vmatpush1.msra.mxu0 0.0
        %790 = vmatprep.subr.mxu0 0.0
        %791 = vmatpush1.msra.mxu0 0.0
        %792 = vmatprep.subr.mxu0 0.0
        %793 = vmatpush1.msra.mxu0 0.0
        %794 = vmatprep.subr.mxu0 0.0
        %795 = vmatpush1.msra.mxu0 0.0
        %796 = vmatprep.subr.mxu0 0.0
        %797 = vmatpush1.msra.mxu0 0.0
        %798 = vmatprep.subr.mxu0 0.0
        %799 = vmatpush1.msra.mxu0 0.0
        %800 = vmatprep.subr.mxu0 0.0
        %801 = vmatpush1.msra.mxu0 0.0
        %802 = vmatprep.subr.mxu0 0.0
        %803 = vmatpush1.msra.mxu0 0.0
        %804 = vmatprep.subr.mxu0 0.0
        %805 = vmatpush1.msra.mxu0 0.0
        %806 = vmatprep.subr.mxu0 0.0
        %807 = vmatpush1.msra.mxu0 0.0
        %808 = vmatprep.subr.mxu0 0.0
        %809 = vmatpush1.msra.mxu0 0.0
        %810 = vmatprep.subr.mxu0 0.0
        %811 = vmatpush1.msra.mxu0 0.0
        %812 = vmatprep.subr.mxu0 0.0
        %813 = vmatpush1.msra.mxu0 0.0
        %814 = vmatprep.subr.mxu0 0.0
        %815 = vmatpush1.msra.mxu0 0.0
        %816 = vmatprep.subr.mxu0 0.0
        %817 = vmatpush1.msra.mxu0 0.0
        %818 = vmatprep.subr.mxu0 0.0
        %819 = vmatpush1.msra.mxu0 0.0
        %820 = vmatprep.subr.mxu0 0.0
        %821 = vmatpush1.msra.mxu0 0.0
        %822 = vmatprep.subr.mxu0 0.0
        %823 = vmatpush1.msra.mxu0 0.0
        %824 = vmatprep.subr.mxu0 0.0
        %825 = vmatpush1.msra.mxu0 0.0
        %826 = vmatprep.subr.mxu0 0.0
        %827 = vmatpush1.msra.mxu0 0.0
        %828 = vmatprep.subr.mxu0 0.0
        %829 = vmatpush1.msra.mxu0 0.0
        %830 = vmatprep.subr.mxu0 0.0
        %831 = vmatpush1.msra.mxu0 0.0
        %832 = vmatprep.subr.mxu0 0.0
        %833 = vmatpush1.msra.mxu0 0.0
        %834 = vmatprep.subr.mxu0 0.0
        %835 = vmatpush1.msra.mxu0 0.0
        %836 = vmatprep.subr.mxu0 0.0
        %837 = vmatpush1.msra.mxu0 0.0
        %838 = vmatprep.subr.mxu0 0.0
        %839 = vmatpush1.msra.mxu0 0.0
        %840 = vmatprep.subr.mxu0 0.0
        %841 = vmatpush1.msra.mxu0 0.0
        %842 = vmatprep.subr.mxu0 0.0
        %843 = vmatpush1.msra.mxu0 0.0
        %844 = vmatprep.subr.mxu0 0.0
        %845 = vmatpush1.msra.mxu0 0.0
        %846 = vmatprep.subr.mxu0 0.0
        %847 = vmatpush1.msra.mxu0 0.0
        %848 = vmatprep.mubr.f32.mxu0 0.0
        %v849 = vand.u32 %v781, 4294901760
        %v850 = vsub.f32 %v781, %v849
        %v851 = vand.u32 %v850, 4294901760
        %v852 = vsub.f32 %v850, %v851
        %v853 = vand.u32 %v852, 4294901760
        %854 = vmatmul.mubr.f32.gmra.mrb[0].mxu0 %v853
        %v855 = vpop.f32.mrb[0].mxu0
        %v856 = vadd.f32 0.0, %v855
        %v857 = vpop.f32.mrb[0].mxu0
        %858 = vdwg.mxu0
        %859 = vmatprep.subr.mxu0 0.0
        %v860 = vand.u32 %v778, 4294901760
        %v861 = vsub.f32 %v778, %v860
        %v862 = vand.u32 %v861, 4294901760
        %v863 = vsub.f32 %v861, %v862
        %v864 = vand.u32 %v863, 4294901760
        %865 = vmatpush1.msra.mxu0 %v864
        %866 = vmatprep.subr.mxu0 0.0
        %867 = vmatpush1.msra.mxu0 0.0
        %868 = vmatprep.subr.mxu0 0.0
        %869 = vmatpush1.msra.mxu0 0.0
        %870 = vmatprep.subr.mxu0 0.0
        %871 = vmatpush1.msra.mxu0 0.0
        %872 = vmatprep.subr.mxu0 0.0
        %873 = vmatpush1.msra.mxu0 0.0
        %874 = vmatprep.subr.mxu0 0.0
        %875 = vmatpush1.msra.mxu0 0.0
        %876 = vmatprep.subr.mxu0 0.0
        %877 = vmatpush1.msra.mxu0 0.0
        %878 = vmatprep.subr.mxu0 0.0
        %879 = vmatpush1.msra.mxu0 0.0
        %880 = vmatprep.subr.mxu0 0.0
        %881 = vmatpush1.msra.mxu0 0.0
        %882 = vmatprep.subr.mxu0 0.0
        %883 = vmatpush1.msra.mxu0 0.0
        %884 = vmatprep.subr.mxu0 0.0
        %885 = vmatpush1.msra.mxu0 0.0
        %886 = vmatprep.subr.mxu0 0.0
        %887 = vmatpush1.msra.mxu0 0.0
        %888 = vmatprep.subr.mxu0 0.0
        %889 = vmatpush1.msra.mxu0 0.0
        %890 = vmatprep.subr.mxu0 0.0
        %891 = vmatpush1.msra.mxu0 0.0
        %892 = vmatprep.subr.mxu0 0.0
        %893 = vmatpush1.msra.mxu0 0.0
        %894 = vmatprep.subr.mxu0 0.0
        %895 = vmatpush1.msra.mxu0 0.0
        %896 = vmatprep.subr.mxu0 0.0
        %897 = vmatpush1.msra.mxu0 0.0
        %898 = vmatprep.subr.mxu0 0.0
        %899 = vmatpush1.msra.mxu0 0.0
        %900 = vmatprep.subr.mxu0 0.0
        %901 = vmatpush1.msra.mxu0 0.0
        %902 = vmatprep.subr.mxu0 0.0
        %903 = vmatpush1.msra.mxu0 0.0
        %904 = vmatprep.subr.mxu0 0.0
        %905 = vmatpush1.msra.mxu0 0.0
        %906 = vmatprep.subr.mxu0 0.0
        %907 = vmatpush1.msra.mxu0 0.0
        %908 = vmatprep.subr.mxu0 0.0
        %909 = vmatpush1.msra.mxu0 0.0
        %910 = vmatprep.subr.mxu0 0.0
        %911 = vmatpush1.msra.mxu0 0.0
        %912 = vmatprep.subr.mxu0 0.0
        %913 = vmatpush1.msra.mxu0 0.0
        %914 = vmatprep.subr.mxu0 0.0
        %915 = vmatpush1.msra.mxu0 0.0
        %916 = vmatprep.subr.mxu0 0.0
        %917 = vmatpush1.msra.mxu0 0.0
        %918 = vmatprep.subr.mxu0 0.0
        %919 = vmatpush1.msra.mxu0 0.0
        %920 = vmatprep.subr.mxu0 0.0
        %921 = vmatpush1.msra.mxu0 0.0
        %922 = vmatprep.subr.mxu0 0.0
        %923 = vmatpush1.msra.mxu0 0.0
        %924 = vmatprep.subr.mxu0 0.0
        %925 = vmatpush1.msra.mxu0 0.0
        %926 = vmatprep.subr.mxu0 0.0
        %927 = vmatpush1.msra.mxu0 0.0
        %928 = vmatprep.mubr.f32.mxu0 0.0
        %v929 = vand.u32 %v781, 4294901760
        %930 = vmatmul.mubr.f32.gmra.mrb[0].mxu0 %v929
        %v931 = vpop.f32.mrb[0].mxu0
        %v932 = vadd.f32 %v856, %v931
        %v933 = vpop.f32.mrb[0].mxu0
        %934 = vdwg.mxu0
        %935 = vmatprep.subr.mxu0 0.0
        %v936 = vand.u32 %v778, 4294901760
        %v937 = vsub.f32 %v778, %v936
        %938 = vmatpush1.msra.mxu0 %v937
        %939 = vmatprep.subr.mxu0 0.0
        %940 = vmatpush1.msra.mxu0 0.0
        %941 = vmatprep.subr.mxu0 0.0
        %942 = vmatpush1.msra.mxu0 0.0
        %943 = vmatprep.subr.mxu0 0.0
        %944 = vmatpush1.msra.mxu0 0.0
        %945 = vmatprep.subr.mxu0 0.0
        %946 = vmatpush1.msra.mxu0 0.0
        %947 = vmatprep.subr.mxu0 0.0
        %948 = vmatpush1.msra.mxu0 0.0
        %949 = vmatprep.subr.mxu0 0.0
        %950 = vmatpush1.msra.mxu0 0.0
        %951 = vmatprep.subr.mxu0 0.0
        %952 = vmatpush1.msra.mxu0 0.0
        %953 = vmatprep.subr.mxu0 0.0
        %954 = vmatpush1.msra.mxu0 0.0
        %955 = vmatprep.subr.mxu0 0.0
        %956 = vmatpush1.msra.mxu0 0.0
        %957 = vmatprep.subr.mxu0 0.0
        %958 = vmatpush1.msra.mxu0 0.0
        %959 = vmatprep.subr.mxu0 0.0
        %960 = vmatpush1.msra.mxu0 0.0
        %961 = vmatprep.subr.mxu0 0.0
        %962 = vmatpush1.msra.mxu0 0.0
        %963 = vmatprep.subr.mxu0 0.0
        %964 = vmatpush1.msra.mxu0 0.0
        %965 = vmatprep.subr.mxu0 0.0
        %966 = vmatpush1.msra.mxu0 0.0
        %967 = vmatprep.subr.mxu0 0.0
        %968 = vmatpush1.msra.mxu0 0.0
        %969 = vmatprep.subr.mxu0 0.0
        %970 = vmatpush1.msra.mxu0 0.0
        %971 = vmatprep.subr.mxu0 0.0
        %972 = vmatpush1.msra.mxu0 0.0
        %973 = vmatprep.subr.mxu0 0.0
        %974 = vmatpush1.msra.mxu0 0.0
        %975 = vmatprep.subr.mxu0 0.0
        %976 = vmatpush1.msra.mxu0 0.0
        %977 = vmatprep.subr.mxu0 0.0
        %978 = vmatpush1.msra.mxu0 0.0
        %979 = vmatprep.subr.mxu0 0.0
        %980 = vmatpush1.msra.mxu0 0.0
        %981 = vmatprep.subr.mxu0 0.0
        %982 = vmatpush1.msra.mxu0 0.0
        %983 = vmatprep.subr.mxu0 0.0
        %984 = vmatpush1.msra.mxu0 0.0
        %985 = vmatprep.subr.mxu0 0.0
        %986 = vmatpush1.msra.mxu0 0.0
        %987 = vmatprep.subr.mxu0 0.0
        %988 = vmatpush1.msra.mxu0 0.0
        %989 = vmatprep.subr.mxu0 0.0
        %990 = vmatpush1.msra.mxu0 0.0
        %991 = vmatprep.subr.mxu0 0.0
        %992 = vmatpush1.msra.mxu0 0.0
        %993 = vmatprep.subr.mxu0 0.0
        %994 = vmatpush1.msra.mxu0 0.0
        %995 = vmatprep.subr.mxu0 0.0
        %996 = vmatpush1.msra.mxu0 0.0
        %997 = vmatprep.subr.mxu0 0.0
        %998 = vmatpush1.msra.mxu0 0.0
        %999 = vmatprep.subr.mxu0 0.0
        %1000 = vmatpush1.msra.mxu0 0.0
        %1001 = vmatprep.mubr.f32.mxu0 0.0
        %v1002 = vand.u32 %v781, 4294901760
        %v1003 = vsub.f32 %v781, %v1002
        %1004 = vmatmul.mubr.f32.gmra.mrb[0].mxu0 %v1003
        %v1005 = vpop.f32.mrb[0].mxu0
        %v1006 = vadd.f32 %v932, %v1005
        %v1007 = vpop.f32.mrb[0].mxu0
        %1008 = vdwg.mxu0
        %1009 = vmatprep.subr.mxu0 0.0
        %v1010 = vand.u32 %v778, 4294901760
        %1011 = vmatpush1.msra.mxu0 %v1010
        %1012 = vmatprep.subr.mxu0 0.0
        %1013 = vmatpush1.msra.mxu0 0.0
        %1014 = vmatprep.subr.mxu0 0.0
        %1015 = vmatpush1.msra.mxu0 0.0
        %1016 = vmatprep.subr.mxu0 0.0
        %1017 = vmatpush1.msra.mxu0 0.0
        %1018 = vmatprep.subr.mxu0 0.0
        %1019 = vmatpush1.msra.mxu0 0.0
        %1020 = vmatprep.subr.mxu0 0.0
        %1021 = vmatpush1.msra.mxu0 0.0
        %1022 = vmatprep.subr.mxu0 0.0
        %1023 = vmatpush1.msra.mxu0 0.0
        %1024 = vmatprep.subr.mxu0 0.0
        %1025 = vmatpush1.msra.mxu0 0.0
        %1026 = vmatprep.subr.mxu0 0.0
        %1027 = vmatpush1.msra.mxu0 0.0
        %1028 = vmatprep.subr.mxu0 0.0
        %1029 = vmatpush1.msra.mxu0 0.0
        %1030 = vmatprep.subr.mxu0 0.0
        %1031 = vmatpush1.msra.mxu0 0.0
        %1032 = vmatprep.subr.mxu0 0.0
        %1033 = vmatpush1.msra.mxu0 0.0
        %1034 = vmatprep.subr.mxu0 0.0
        %1035 = vmatpush1.msra.mxu0 0.0
        %1036 = vmatprep.subr.mxu0 0.0
        %1037 = vmatpush1.msra.mxu0 0.0
        %1038 = vmatprep.subr.mxu0 0.0
        %1039 = vmatpush1.msra.mxu0 0.0
        %1040 = vmatprep.subr.mxu0 0.0
        %1041 = vmatpush1.msra.mxu0 0.0
        %1042 = vmatprep.subr.mxu0 0.0
        %1043 = vmatpush1.msra.mxu0 0.0
        %1044 = vmatprep.subr.mxu0 0.0
        %1045 = vmatpush1.msra.mxu0 0.0
        %1046 = vmatprep.subr.mxu0 0.0
        %1047 = vmatpush1.msra.mxu0 0.0
        %1048 = vmatprep.subr.mxu0 0.0
        %1049 = vmatpush1.msra.mxu0 0.0
        %1050 = vmatprep.subr.mxu0 0.0
        %1051 = vmatpush1.msra.mxu0 0.0
        %1052 = vmatprep.subr.mxu0 0.0
        %1053 = vmatpush1.msra.mxu0 0.0
        %1054 = vmatprep.subr.mxu0 0.0
        %1055 = vmatpush1.msra.mxu0 0.0
        %1056 = vmatprep.subr.mxu0 0.0
        %1057 = vmatpush1.msra.mxu0 0.0
        %1058 = vmatprep.subr.mxu0 0.0
        %1059 = vmatpush1.msra.mxu0 0.0
        %1060 = vmatprep.subr.mxu0 0.0
        %1061 = vmatpush1.msra.mxu0 0.0
        %1062 = vmatprep.subr.mxu0 0.0
        %1063 = vmatpush1.msra.mxu0 0.0
        %1064 = vmatprep.subr.mxu0 0.0
        %1065 = vmatpush1.msra.mxu0 0.0
        %1066 = vmatprep.subr.mxu0 0.0
        %1067 = vmatpush1.msra.mxu0 0.0
        %1068 = vmatprep.subr.mxu0 0.0
        %1069 = vmatpush1.msra.mxu0 0.0
        %1070 = vmatprep.subr.mxu0 0.0
        %1071 = vmatpush1.msra.mxu0 0.0
        %1072 = vmatprep.subr.mxu0 0.0
        %1073 = vmatpush1.msra.mxu0 0.0
        %1074 = vmatprep.mubr.f32.mxu0 0.0
        %v1075 = vand.u32 %v781, 4294901760
        %v1076 = vsub.f32 %v781, %v1075
        %v1077 = vand.u32 %v1076, 4294901760
        %1078 = vmatmul.mubr.f32.gmra.mrb[0].mxu0 %v1077
        %v1079 = vpop.f32.mrb[0].mxu0
        %v1080 = vadd.f32 %v1006, %v1079
        %v1081 = vpop.f32.mrb[0].mxu0
        %1082 = vdwg.mxu0
        %1083 = vmatprep.subr.mxu0 0.0
        %v1084 = vand.u32 %v778, 4294901760
        %v1085 = vsub.f32 %v778, %v1084
        %v1086 = vand.u32 %v1085, 4294901760
        %1087 = vmatpush1.msra.mxu0 %v1086
        %1088 = vmatprep.subr.mxu0 0.0
        %1089 = vmatpush1.msra.mxu0 0.0
        %1090 = vmatprep.subr.mxu0 0.0
        %1091 = vmatpush1.msra.mxu0 0.0
        %1092 = vmatprep.subr.mxu0 0.0
        %1093 = vmatpush1.msra.mxu0 0.0
        %1094 = vmatprep.subr.mxu0 0.0
        %1095 = vmatpush1.msra.mxu0 0.0
        %1096 = vmatprep.subr.mxu0 0.0
        %1097 = vmatpush1.msra.mxu0 0.0
        %1098 = vmatprep.subr.mxu0 0.0
        %1099 = vmatpush1.msra.mxu0 0.0
        %1100 = vmatprep.subr.mxu0 0.0
        %1101 = vmatpush1.msra.mxu0 0.0
        %1102 = vmatprep.subr.mxu0 0.0
        %1103 = vmatpush1.msra.mxu0 0.0
        %1104 = vmatprep.subr.mxu0 0.0
        %1105 = vmatpush1.msra.mxu0 0.0
        %1106 = vmatprep.subr.mxu0 0.0
        %1107 = vmatpush1.msra.mxu0 0.0
        %1108 = vmatprep.subr.mxu0 0.0
        %1109 = vmatpush1.msra.mxu0 0.0
        %1110 = vmatprep.subr.mxu0 0.0
        %1111 = vmatpush1.msra.mxu0 0.0
        %1112 = vmatprep.subr.mxu0 0.0
        %1113 = vmatpush1.msra.mxu0 0.0
        %1114 = vmatprep.subr.mxu0 0.0
        %1115 = vmatpush1.msra.mxu0 0.0
        %1116 = vmatprep.subr.mxu0 0.0
        %1117 = vmatpush1.msra.mxu0 0.0
        %1118 = vmatprep.subr.mxu0 0.0
        %1119 = vmatpush1.msra.mxu0 0.0
        %1120 = vmatprep.subr.mxu0 0.0
        %1121 = vmatpush1.msra.mxu0 0.0
        %1122 = vmatprep.subr.mxu0 0.0
        %1123 = vmatpush1.msra.mxu0 0.0
        %1124 = vmatprep.subr.mxu0 0.0
        %1125 = vmatpush1.msra.mxu0 0.0
        %1126 = vmatprep.subr.mxu0 0.0
        %1127 = vmatpush1.msra.mxu0 0.0
        %1128 = vmatprep.subr.mxu0 0.0
        %1129 = vmatpush1.msra.mxu0 0.0
        %1130 = vmatprep.subr.mxu0 0.0
        %1131 = vmatpush1.msra.mxu0 0.0
        %1132 = vmatprep.subr.mxu0 0.0
        %1133 = vmatpush1.msra.mxu0 0.0
        %1134 = vmatprep.subr.mxu0 0.0
        %1135 = vmatpush1.msra.mxu0 0.0
        %1136 = vmatprep.subr.mxu0 0.0
        %1137 = vmatpush1.msra.mxu0 0.0
        %1138 = vmatprep.subr.mxu0 0.0
        %1139 = vmatpush1.msra.mxu0 0.0
        %1140 = vmatprep.subr.mxu0 0.0
        %1141 = vmatpush1.msra.mxu0 0.0
        %1142 = vmatprep.subr.mxu0 0.0
        %1143 = vmatpush1.msra.mxu0 0.0
        %1144 = vmatprep.subr.mxu0 0.0
        %1145 = vmatpush1.msra.mxu0 0.0
        %1146 = vmatprep.subr.mxu0 0.0
        %1147 = vmatpush1.msra.mxu0 0.0
        %1148 = vmatprep.subr.mxu0 0.0
        %1149 = vmatpush1.msra.mxu0 0.0
        %1150 = vmatprep.mubr.f32.mxu0 0.0
        %v1151 = vand.u32 %v781, 4294901760
        %1152 = vmatmul.mubr.f32.gmra.mrb[0].mxu0 %v1151
        %v1153 = vpop.f32.mrb[0].mxu0
        %v1154 = vadd.f32 %v1080, %v1153
        %v1155 = vpop.f32.mrb[0].mxu0
        %1156 = vdwg.mxu0
        %1157 = vmatprep.subr.mxu0 0.0
        %v1158 = vand.u32 %v778, 4294901760
        %1159 = vmatpush1.msra.mxu0 %v1158
        %1160 = vmatprep.subr.mxu0 0.0
        %1161 = vmatpush1.msra.mxu0 0.0
        %1162 = vmatprep.subr.mxu0 0.0
        %1163 = vmatpush1.msra.mxu0 0.0
        %1164 = vmatprep.subr.mxu0 0.0
        %1165 = vmatpush1.msra.mxu0 0.0
        %1166 = vmatprep.subr.mxu0 0.0
        %1167 = vmatpush1.msra.mxu0 0.0
        %1168 = vmatprep.subr.mxu0 0.0
        %1169 = vmatpush1.msra.mxu0 0.0
        %1170 = vmatprep.subr.mxu0 0.0
        %1171 = vmatpush1.msra.mxu0 0.0
        %1172 = vmatprep.subr.mxu0 0.0
        %1173 = vmatpush1.msra.mxu0 0.0
        %1174 = vmatprep.subr.mxu0 0.0
        %1175 = vmatpush1.msra.mxu0 0.0
        %1176 = vmatprep.subr.mxu0 0.0
        %1177 = vmatpush1.msra.mxu0 0.0
        %1178 = vmatprep.subr.mxu0 0.0
        %1179 = vmatpush1.msra.mxu0 0.0
        %1180 = vmatprep.subr.mxu0 0.0
        %1181 = vmatpush1.msra.mxu0 0.0
        %1182 = vmatprep.subr.mxu0 0.0
        %1183 = vmatpush1.msra.mxu0 0.0
        %1184 = vmatprep.subr.mxu0 0.0
        %1185 = vmatpush1.msra.mxu0 0.0
        %1186 = vmatprep.subr.mxu0 0.0
        %1187 = vmatpush1.msra.mxu0 0.0
        %1188 = vmatprep.subr.mxu0 0.0
        %1189 = vmatpush1.msra.mxu0 0.0
        %1190 = vmatprep.subr.mxu0 0.0
        %1191 = vmatpush1.msra.mxu0 0.0
        %1192 = vmatprep.subr.mxu0 0.0
        %1193 = vmatpush1.msra.mxu0 0.0
        %1194 = vmatprep.subr.mxu0 0.0
        %1195 = vmatpush1.msra.mxu0 0.0
        %1196 = vmatprep.subr.mxu0 0.0
        %1197 = vmatpush1.msra.mxu0 0.0
        %1198 = vmatprep.subr.mxu0 0.0
        %1199 = vmatpush1.msra.mxu0 0.0
        %1200 = vmatprep.subr.mxu0 0.0
        %1201 = vmatpush1.msra.mxu0 0.0
        %1202 = vmatprep.subr.mxu0 0.0
        %1203 = vmatpush1.msra.mxu0 0.0
        %1204 = vmatprep.subr.mxu0 0.0
        %1205 = vmatpush1.msra.mxu0 0.0
        %1206 = vmatprep.subr.mxu0 0.0
        %1207 = vmatpush1.msra.mxu0 0.0
        %1208 = vmatprep.subr.mxu0 0.0
        %1209 = vmatpush1.msra.mxu0 0.0
        %1210 = vmatprep.subr.mxu0 0.0
        %1211 = vmatpush1.msra.mxu0 0.0
        %1212 = vmatprep.subr.mxu0 0.0
        %1213 = vmatpush1.msra.mxu0 0.0
        %1214 = vmatprep.subr.mxu0 0.0
        %1215 = vmatpush1.msra.mxu0 0.0
        %1216 = vmatprep.subr.mxu0 0.0
        %1217 = vmatpush1.msra.mxu0 0.0
        %1218 = vmatprep.subr.mxu0 0.0
        %1219 = vmatpush1.msra.mxu0 0.0
        %1220 = vmatprep.subr.mxu0 0.0
        %1221 = vmatpush1.msra.mxu0 0.0
        %1222 = vmatprep.mubr.f32.mxu0 0.0
        %v1223 = vand.u32 %v781, 4294901760
        %1224 = vmatmul.mubr.f32.gmra.mrb[0].mxu0 %v1223
        %v1225 = vpop.f32.mrb[0].mxu0
        %v1226 = vadd.f32 %v1154, %v1225
        %v1227 = vpop.f32.mrb[0].mxu0
        %1228 = vdwg.mxu0
        %v1229 = vmul.f32 %v775, %v775
        %v1230 = vsel %vm779, %v1229, 0.0
        %1231 = vadd.xlane.f32.xlu0 %v1230
        %v1232 = vpop.xlane.xlu0 %1231
        %v1233 = vmul.f32 %v1232, 0.17677669
        %v1234 = vsel %vm289, %v1226, -inf
        %1235 = vmax.xlane.f32.xlu0 %v1234
        %v1236 = vpop.xlane.xlu0 %1235
        %v1237 = vrot.slane %v1236, 4
        %v1238 = vmax.f32 %v1236, %v1237
        %v1239 = vrot.slane %v1238, 2
        %v1240 = vmax.f32 %v1238, %v1239
        %v1241 = vrot.slane %v1240, 1
        %v1242 = vmax.f32 %v1240, %v1241
        %v1243 = vld [vmem:[#allocation4] sm:$0x1]
        %v1244 = vmax.f32 %v1243, %v1242
        %v1245 = vsub.f32 %v1243, %v1244
        %v1246 = vmul.f32 %v1245, 1.442695
        %v1247 = vpow.pop %v1246
        %vm1248 = vcmask 0
        %1249 = vst.msk [vmem:[#allocation4] sm:$0x1] %vm1248, %v1244
        %v1250 = vsub.f32 %v1226, %v1233
        %v1252 = vlaneseq
        %v1253 = vshrl.u32 %v1252, 7
        %v1254 = vsub.s32 0, %v1253
        %v1255 = vrot.slane %v1244, %v1254
        %1256 = vset.pattern.permute.xlu0 0
        %1257 = vperm.xlu0 %1256, %v1255
        %v1258 = vpop.permute.xlu0 %1257
        %v1260 = vsub.f32 %v1250, %v1258
        %v1261 = vmul.f32 %v1260, 1.442695
        %v1262 = vpow.pop %v1261
        %1263 = vrot.lane.b32.xlu0 %v775, 96
        %v1264 = vpop.permute.xlu0 %1263
        %v1266 = vsel %vm779, %v1264, 1.0
        %1267 = vxpose.xlu0.b32.start [1/16] %v1262, 128
        %1268 = vxpose.xlu0.b32.cont [2/16] 0.0, 128
        %1269 = vxpose.xlu0.b32.cont [3/16] 0.0, 128
        %1270 = vxpose.xlu0.b32.cont [4/16] 0.0, 128
        %1271 = vxpose.xlu0.b32.cont [5/16] 0.0, 128
        %1272 = vxpose.xlu0.b32.cont [6/16] 0.0, 128
        %1273 = vxpose.xlu0.b32.cont [7/16] 0.0, 128
        %1274 = vxpose.xlu0.b32.cont [8/16] 0.0, 128
        %1275 = vxpose.xlu0.b32.cont [9/16] 0.0, 128
        %1276 = vxpose.xlu0.b32.cont [10/16] 0.0, 128
        %1277 = vxpose.xlu0.b32.cont [11/16] 0.0, 128
        %1278 = vxpose.xlu0.b32.cont [12/16] 0.0, 128
        %1279 = vxpose.xlu0.b32.cont [13/16] 0.0, 128
        %1280 = vxpose.xlu0.b32.cont [14/16] 0.0, 128
        %1281 = vxpose.xlu0.b32.cont [15/16] 0.0, 128
        %1282 = vxpose.xlu0.b32.end [16/16] 0.0, 128
        %v1283 = vpop.trf.xlu0
        %v1284 = vpop.trf.xlu0
        %v1285 = vpop.trf.xlu0
        %v1286 = vpop.trf.xlu0
        %v1287 = vpop.trf.xlu0
        %v1288 = vpop.trf.xlu0
        %v1289 = vpop.trf.xlu0
        %v1290 = vpop.trf.xlu0
        %v1291 = vpop.trf.xlu0
        %v1292 = vpop.trf.xlu0
        %v1293 = vpop.trf.xlu0
        %v1294 = vpop.trf.xlu0
        %v1295 = vpop.trf.xlu0
        %v1296 = vpop.trf.xlu0
        %v1297 = vpop.trf.xlu0
        %v1298 = vpop.trf.xlu0
        %v1300 = vsel %vm779, %v1283, 0
        %v1303 = vsel %vm779, %v1284, 0
        %v1306 = vsel %vm779, %v1285, 0
        %v1309 = vsel %vm779, %v1286, 0
        %1311 = vmatprep.subr.mxu0 0.0
        %v1312 = vand.u32 %v1266, 4294901760
        %1313 = vmatpush1.msra.mxu0 %v1312
        %1314 = vmatprep.subr.mxu0 0.0
        %1315 = vmatpush1.msra.mxu0 0.0
        %1316 = vmatprep.subr.mxu0 0.0
        %1317 = vmatpush1.msra.mxu0 0.0
        %1318 = vmatprep.subr.mxu0 0.0
        %1319 = vmatpush1.msra.mxu0 0.0
        %1320 = vmatprep.subr.mxu0 0.0
        %1321 = vmatpush1.msra.mxu0 0.0
        %1322 = vmatprep.subr.mxu0 0.0
        %1323 = vmatpush1.msra.mxu0 0.0
        %1324 = vmatprep.subr.mxu0 0.0
        %1325 = vmatpush1.msra.mxu0 0.0
        %1326 = vmatprep.subr.mxu0 0.0
        %1327 = vmatpush1.msra.mxu0 0.0
        %1328 = vmatprep.subr.mxu0 0.0
        %1329 = vmatpush1.msra.mxu0 0.0
        %1330 = vmatprep.subr.mxu0 0.0
        %1331 = vmatpush1.msra.mxu0 0.0
        %1332 = vmatprep.subr.mxu0 0.0
        %1333 = vmatpush1.msra.mxu0 0.0
        %1334 = vmatprep.subr.mxu0 0.0
        %1335 = vmatpush1.msra.mxu0 0.0
        %1336 = vmatprep.subr.mxu0 0.0
        %1337 = vmatpush1.msra.mxu0 0.0
        %1338 = vmatprep.subr.mxu0 0.0
        %1339 = vmatpush1.msra.mxu0 0.0
        %1340 = vmatprep.subr.mxu0 0.0
        %1341 = vmatpush1.msra.mxu0 0.0
        %1342 = vmatprep.subr.mxu0 0.0
        %1343 = vmatpush1.msra.mxu0 0.0
        %1344 = vmatprep.subr.mxu0 0.0
        %1345 = vmatpush1.msra.mxu0 0.0
        %1346 = vmatprep.subr.mxu0 0.0
        %1347 = vmatpush1.msra.mxu0 0.0
        %1348 = vmatprep.subr.mxu0 0.0
        %1349 = vmatpush1.msra.mxu0 0.0
        %1350 = vmatprep.subr.mxu0 0.0
        %1351 = vmatpush1.msra.mxu0 0.0
        %1352 = vmatprep.subr.mxu0 0.0
        %1353 = vmatpush1.msra.mxu0 0.0
        %1354 = vmatprep.subr.mxu0 0.0
        %1355 = vmatpush1.msra.mxu0 0.0
        %1356 = vmatprep.subr.mxu0 0.0
        %1357 = vmatpush1.msra.mxu0 0.0
        %1358 = vmatprep.subr.mxu0 0.0
        %1359 = vmatpush1.msra.mxu0 0.0
        %1360 = vmatprep.subr.mxu0 0.0
        %1361 = vmatpush1.msra.mxu0 0.0
        %1362 = vmatprep.subr.mxu0 0.0
        %1363 = vmatpush1.msra.mxu0 0.0
        %1364 = vmatprep.subr.mxu0 0.0
        %1365 = vmatpush1.msra.mxu0 0.0
        %1366 = vmatprep.subr.mxu0 0.0
        %1367 = vmatpush1.msra.mxu0 0.0
        %1368 = vmatprep.subr.mxu0 0.0
        %1369 = vmatpush1.msra.mxu0 0.0
        %1370 = vmatprep.subr.mxu0 0.0
        %1371 = vmatpush1.msra.mxu0 0.0
        %1372 = vmatprep.subr.mxu0 0.0
        %1373 = vmatpush1.msra.mxu0 0.0
        %1374 = vmatprep.subr.mxu0 0.0
        %1375 = vmatpush1.msra.mxu0 0.0
        %1376 = vmatprep.mubr.f32.mxu0 0.0
        %v1377 = vand.u32 %v1300, 4294901760
        %v1378 = vsub.f32 %v1300, %v1377
        %v1379 = vand.u32 %v1378, 4294901760
        %v1380 = vsub.f32 %v1378, %v1379
        %v1381 = vand.u32 %v1380, 4294901760
        %1382 = vmatmul.mubr.f32.gmra.mrb[0].mxu0 %v1381
        %v1383 = vpop.f32.mrb[0].mxu0
        %v1384 = vadd.f32 0.0, %v1383
        %v1385 = vpop.f32.mrb[0].mxu0
        %1386 = vmatprep.mubr.f32.mxu0 0.0
        %v1387 = vand.u32 %v1303, 4294901760
        %v1388 = vsub.f32 %v1303, %v1387
        %v1389 = vand.u32 %v1388, 4294901760
        %v1390 = vsub.f32 %v1388, %v1389
        %v1391 = vand.u32 %v1390, 4294901760
        %1392 = vmatmul.mubr.f32.gmra.mrb[0].mxu0 %v1391
        %v1393 = vpop.f32.mrb[0].mxu0
        %v1394 = vadd.f32 0.0, %v1393
        %v1395 = vpop.f32.mrb[0].mxu0
        %1396 = vmatprep.mubr.f32.mxu0 0.0
        %v1397 = vand.u32 %v1306, 4294901760
        %v1398 = vsub.f32 %v1306, %v1397
        %v1399 = vand.u32 %v1398, 4294901760
        %v1400 = vsub.f32 %v1398, %v1399
        %v1401 = vand.u32 %v1400, 4294901760
        %1402 = vmatmul.mubr.f32.gmra.mrb[0].mxu0 %v1401
        %v1403 = vpop.f32.mrb[0].mxu0
        %v1404 = vadd.f32 0.0, %v1403
        %v1405 = vpop.f32.mrb[0].mxu0
        %1406 = vmatprep.mubr.f32.mxu0 0.0
        %v1407 = vand.u32 %v1309, 4294901760
        %v1408 = vsub.f32 %v1309, %v1407
        %v1409 = vand.u32 %v1408, 4294901760
        %v1410 = vsub.f32 %v1408, %v1409
        %v1411 = vand.u32 %v1410, 4294901760
        %1412 = vmatmul.mubr.f32.gmra.mrb[0].mxu0 %v1411
        %v1413 = vpop.f32.mrb[0].mxu0
        %v1414 = vadd.f32 0.0, %v1413
        %v1415 = vpop.f32.mrb[0].mxu0
        %1416 = vdwg.mxu0
        %1417 = vmatprep.subr.mxu0 0.0
        %v1418 = vand.u32 %v1266, 4294901760
        %v1419 = vsub.f32 %v1266, %v1418
        %v1420 = vand.u32 %v1419, 4294901760
        %v1421 = vsub.f32 %v1419, %v1420
        %v1422 = vand.u32 %v1421, 4294901760
        %1423 = vmatpush1.msra.mxu0 %v1422
        %1424 = vmatprep.subr.mxu0 0.0
        %1425 = vmatpush1.msra.mxu0 0.0
        %1426 = vmatprep.subr.mxu0 0.0
        %1427 = vmatpush1.msra.mxu0 0.0
        %1428 = vmatprep.subr.mxu0 0.0
        %1429 = vmatpush1.msra.mxu0 0.0
        %1430 = vmatprep.subr.mxu0 0.0
        %1431 = vmatpush1.msra.mxu0 0.0
        %1432 = vmatprep.subr.mxu0 0.0
        %1433 = vmatpush1.msra.mxu0 0.0
        %1434 = vmatprep.subr.mxu0 0.0
        %1435 = vmatpush1.msra.mxu0 0.0
        %1436 = vmatprep.subr.mxu0 0.0
        %1437 = vmatpush1.msra.mxu0 0.0
        %1438 = vmatprep.subr.mxu0 0.0
        %1439 = vmatpush1.msra.mxu0 0.0
        %1440 = vmatprep.subr.mxu0 0.0
        %1441 = vmatpush1.msra.mxu0 0.0
        %1442 = vmatprep.subr.mxu0 0.0
        %1443 = vmatpush1.msra.mxu0 0.0
        %1444 = vmatprep.subr.mxu0 0.0
        %1445 = vmatpush1.msra.mxu0 0.0
        %1446 = vmatprep.subr.mxu0 0.0
        %1447 = vmatpush1.msra.mxu0 0.0
        %1448 = vmatprep.subr.mxu0 0.0
        %1449 = vmatpush1.msra.mxu0 0.0
        %1450 = vmatprep.subr.mxu0 0.0
        %1451 = vmatpush1.msra.mxu0 0.0
        %1452 = vmatprep.subr.mxu0 0.0
        %1453 = vmatpush1.msra.mxu0 0.0
        %1454 = vmatprep.subr.mxu0 0.0
        %1455 = vmatpush1.msra.mxu0 0.0
        %1456 = vmatprep.subr.mxu0 0.0
        %1457 = vmatpush1.msra.mxu0 0.0
        %1458 = vmatprep.subr.mxu0 0.0
        %1459 = vmatpush1.msra.mxu0 0.0
        %1460 = vmatprep.subr.mxu0 0.0
        %1461 = vmatpush1.msra.mxu0 0.0
        %1462 = vmatprep.subr.mxu0 0.0
        %1463 = vmatpush1.msra.mxu0 0.0
        %1464 = vmatprep.subr.mxu0 0.0
        %1465 = vmatpush1.msra.mxu0 0.0
        %1466 = vmatprep.subr.mxu0 0.0
        %1467 = vmatpush1.msra.mxu0 0.0
        %1468 = vmatprep.subr.mxu0 0.0
        %1469 = vmatpush1.msra.mxu0 0.0
        %1470 = vmatprep.subr.mxu0 0.0
        %1471 = vmatpush1.msra.mxu0 0.0
        %1472 = vmatprep.subr.mxu0 0.0
        %1473 = vmatpush1.msra.mxu0 0.0
        %1474 = vmatprep.subr.mxu0 0.0
        %1475 = vmatpush1.msra.mxu0 0.0
        %1476 = vmatprep.subr.mxu0 0.0
        %1477 = vmatpush1.msra.mxu0 0.0
        %1478 = vmatprep.subr.mxu0 0.0
        %1479 = vmatpush1.msra.mxu0 0.0
        %1480 = vmatprep.subr.mxu0 0.0
        %1481 = vmatpush1.msra.mxu0 0.0
        %1482 = vmatprep.subr.mxu0 0.0
        %1483 = vmatpush1.msra.mxu0 0.0
        %1484 = vmatprep.subr.mxu0 0.0
        %1485 = vmatpush1.msra.mxu0 0.0
        %1486 = vmatprep.mubr.f32.mxu0 0.0
        %v1487 = vand.u32 %v1300, 4294901760
        %1488 = vmatmul.mubr.f32.gmra.mrb[0].mxu0 %v1487
        %v1489 = vpop.f32.mrb[0].mxu0
        %v1490 = vadd.f32 %v1384, %v1489
        %v1491 = vpop.f32.mrb[0].mxu0
        %1492 = vmatprep.mubr.f32.mxu0 0.0
        %v1493 = vand.u32 %v1303, 4294901760
        %1494 = vmatmul.mubr.f32.gmra.mrb[0].mxu0 %v1493
        %v1495 = vpop.f32.mrb[0].mxu0
        %v1496 = vadd.f32 %v1394, %v1495
        %v1497 = vpop.f32.mrb[0].mxu0
        %1498 = vmatprep.mubr.f32.mxu0 0.0
        %v1499 = vand.u32 %v1306, 4294901760
        %1500 = vmatmul.mubr.f32.gmra.mrb[0].mxu0 %v1499
        %v1501 = vpop.f32.mrb[0].mxu0
        %v1502 = vadd.f32 %v1404, %v1501
        %v1503 = vpop.f32.mrb[0].mxu0
        %1504 = vmatprep.mubr.f32.mxu0 0.0
        %v1505 = vand.u32 %v1309, 4294901760
        %1506 = vmatmul.mubr.f32.gmra.mrb[0].mxu0 %v1505
        %v1507 = vpop.f32.mrb[0].mxu0
        %v1508 = vadd.f32 %v1414, %v1507
        %v1509 = vpop.f32.mrb[0].mxu0
        %1510 = vdwg.mxu0
        %1511 = vmatprep.subr.mxu0 0.0
        %v1512 = vand.u32 %v1266, 4294901760
        %v1513 = vsub.f32 %v1266, %v1512
        %1514 = vmatpush1.msra.mxu0 %v1513
        %1515 = vmatprep.subr.mxu0 0.0
        %1516 = vmatpush1.msra.mxu0 0.0
        %1517 = vmatprep.subr.mxu0 0.0
        %1518 = vmatpush1.msra.mxu0 0.0
        %1519 = vmatprep.subr.mxu0 0.0
        %1520 = vmatpush1.msra.mxu0 0.0
        %1521 = vmatprep.subr.mxu0 0.0
        %1522 = vmatpush1.msra.mxu0 0.0
        %1523 = vmatprep.subr.mxu0 0.0
        %1524 = vmatpush1.msra.mxu0 0.0
        %1525 = vmatprep.subr.mxu0 0.0
        %1526 = vmatpush1.msra.mxu0 0.0
        %1527 = vmatprep.subr.mxu0 0.0
        %1528 = vmatpush1.msra.mxu0 0.0
        %1529 = vmatprep.subr.mxu0 0.0
        %1530 = vmatpush1.msra.mxu0 0.0
        %1531 = vmatprep.subr.mxu0 0.0
        %1532 = vmatpush1.msra.mxu0 0.0
        %1533 = vmatprep.subr.mxu0 0.0
        %1534 = vmatpush1.msra.mxu0 0.0
        %1535 = vmatprep.subr.mxu0 0.0
        %1536 = vmatpush1.msra.mxu0 0.0
        %1537 = vmatprep.subr.mxu0 0.0
        %1538 = vmatpush1.msra.mxu0 0.0
        %1539 = vmatprep.subr.mxu0 0.0
        %1540 = vmatpush1.msra.mxu0 0.0
        %1541 = vmatprep.subr.mxu0 0.0
        %1542 = vmatpush1.msra.mxu0 0.0
        %1543 = vmatprep.subr.mxu0 0.0
        %1544 = vmatpush1.msra.mxu0 0.0
        %1545 = vmatprep.subr.mxu0 0.0
        %1546 = vmatpush1.msra.mxu0 0.0
        %1547 = vmatprep.subr.mxu0 0.0
        %1548 = vmatpush1.msra.mxu0 0.0
        %1549 = vmatprep.subr.mxu0 0.0
        %1550 = vmatpush1.msra.mxu0 0.0
        %1551 = vmatprep.subr.mxu0 0.0
        %1552 = vmatpush1.msra.mxu0 0.0
        %1553 = vmatprep.subr.mxu0 0.0
        %1554 = vmatpush1.msra.mxu0 0.0
        %1555 = vmatprep.subr.mxu0 0.0
        %1556 = vmatpush1.msra.mxu0 0.0
        %1557 = vmatprep.subr.mxu0 0.0
        %1558 = vmatpush1.msra.mxu0 0.0
        %1559 = vmatprep.subr.mxu0 0.0
        %1560 = vmatpush1.msra.mxu0 0.0
        %1561 = vmatprep.subr.mxu0 0.0
        %1562 = vmatpush1.msra.mxu0 0.0
        %1563 = vmatprep.subr.mxu0 0.0
        %1564 = vmatpush1.msra.mxu0 0.0
        %1565 = vmatprep.subr.mxu0 0.0
        %1566 = vmatpush1.msra.mxu0 0.0
        %1567 = vmatprep.subr.mxu0 0.0
        %1568 = vmatpush1.msra.mxu0 0.0
        %1569 = vmatprep.subr.mxu0 0.0
        %1570 = vmatpush1.msra.mxu0 0.0
        %1571 = vmatprep.subr.mxu0 0.0
        %1572 = vmatpush1.msra.mxu0 0.0
        %1573 = vmatprep.subr.mxu0 0.0
        %1574 = vmatpush1.msra.mxu0 0.0
        %1575 = vmatprep.subr.mxu0 0.0
        %1576 = vmatpush1.msra.mxu0 0.0
        %1577 = vmatprep.mubr.f32.mxu0 0.0
        %v1578 = vand.u32 %v1300, 4294901760
        %v1579 = vsub.f32 %v1300, %v1578
        %1580 = vmatmul.mubr.f32.gmra.mrb[0].mxu0 %v1579
        %v1581 = vpop.f32.mrb[0].mxu0
        %v1582 = vadd.f32 %v1490, %v1581
        %v1583 = vpop.f32.mrb[0].mxu0
        %1584 = vmatprep.mubr.f32.mxu0 0.0
        %v1585 = vand.u32 %v1303, 4294901760
        %v1586 = vsub.f32 %v1303, %v1585
        %1587 = vmatmul.mubr.f32.gmra.mrb[0].mxu0 %v1586
        %v1588 = vpop.f32.mrb[0].mxu0
        %v1589 = vadd.f32 %v1496, %v1588
        %v1590 = vpop.f32.mrb[0].mxu0
        %1591 = vmatprep.mubr.f32.mxu0 0.0
        %v1592 = vand.u32 %v1306, 4294901760
        %v1593 = vsub.f32 %v1306, %v1592
        %1594 = vmatmul.mubr.f32.gmra.mrb[0].mxu0 %v1593
        %v1595 = vpop.f32.mrb[0].mxu0
        %v1596 = vadd.f32 %v1502, %v1595
        %v1597 = vpop.f32.mrb[0].mxu0
        %1598 = vmatprep.mubr.f32.mxu0 0.0
        %v1599 = vand.u32 %v1309, 4294901760
        %v1600 = vsub.f32 %v1309, %v1599
        %1601 = vmatmul.mubr.f32.gmra.mrb[0].mxu0 %v1600
        %v1602 = vpop.f32.mrb[0].mxu0
        %v1603 = vadd.f32 %v1508, %v1602
        %v1604 = vpop.f32.mrb[0].mxu0
        %1605 = vdwg.mxu0
        %1606 = vmatprep.subr.mxu0 0.0
        %v1607 = vand.u32 %v1266, 4294901760
        %1608 = vmatpush1.msra.mxu0 %v1607
        %1609 = vmatprep.subr.mxu0 0.0
        %1610 = vmatpush1.msra.mxu0 0.0
        %1611 = vmatprep.subr.mxu0 0.0
        %1612 = vmatpush1.msra.mxu0 0.0
        %1613 = vmatprep.subr.mxu0 0.0
        %1614 = vmatpush1.msra.mxu0 0.0
        %1615 = vmatprep.subr.mxu0 0.0
        %1616 = vmatpush1.msra.mxu0 0.0
        %1617 = vmatprep.subr.mxu0 0.0
        %1618 = vmatpush1.msra.mxu0 0.0
        %1619 = vmatprep.subr.mxu0 0.0
        %1620 = vmatpush1.msra.mxu0 0.0
        %1621 = vmatprep.subr.mxu0 0.0
        %1622 = vmatpush1.msra.mxu0 0.0
        %1623 = vmatprep.subr.mxu0 0.0
        %1624 = vmatpush1.msra.mxu0 0.0
        %1625 = vmatprep.subr.mxu0 0.0
        %1626 = vmatpush1.msra.mxu0 0.0
        %1627 = vmatprep.subr.mxu0 0.0
        %1628 = vmatpush1.msra.mxu0 0.0
        %1629 = vmatprep.subr.mxu0 0.0
        %1630 = vmatpush1.msra.mxu0 0.0
        %1631 = vmatprep.subr.mxu0 0.0
        %1632 = vmatpush1.msra.mxu0 0.0
        %1633 = vmatprep.subr.mxu0 0.0
        %1634 = vmatpush1.msra.mxu0 0.0
        %1635 = vmatprep.subr.mxu0 0.0
        %1636 = vmatpush1.msra.mxu0 0.0
        %1637 = vmatprep.subr.mxu0 0.0
        %1638 = vmatpush1.msra.mxu0 0.0
        %1639 = vmatprep.subr.mxu0 0.0
        %1640 = vmatpush1.msra.mxu0 0.0
        %1641 = vmatprep.subr.mxu0 0.0
        %1642 = vmatpush1.msra.mxu0 0.0
        %1643 = vmatprep.subr.mxu0 0.0
        %1644 = vmatpush1.msra.mxu0 0.0
        %1645 = vmatprep.subr.mxu0 0.0
        %1646 = vmatpush1.msra.mxu0 0.0
        %1647 = vmatprep.subr.mxu0 0.0
        %1648 = vmatpush1.msra.mxu0 0.0
        %1649 = vmatprep.subr.mxu0 0.0
        %1650 = vmatpush1.msra.mxu0 0.0
        %1651 = vmatprep.subr.mxu0 0.0
        %1652 = vmatpush1.msra.mxu0 0.0
        %1653 = vmatprep.subr.mxu0 0.0
        %1654 = vmatpush1.msra.mxu0 0.0
        %1655 = vmatprep.subr.mxu0 0.0
        %1656 = vmatpush1.msra.mxu0 0.0
        %1657 = vmatprep.subr.mxu0 0.0
        %1658 = vmatpush1.msra.mxu0 0.0
        %1659 = vmatprep.subr.mxu0 0.0
        %1660 = vmatpush1.msra.mxu0 0.0
        %1661 = vmatprep.subr.mxu0 0.0
        %1662 = vmatpush1.msra.mxu0 0.0
        %1663 = vmatprep.subr.mxu0 0.0
        %1664 = vmatpush1.msra.mxu0 0.0
        %1665 = vmatprep.subr.mxu0 0.0
        %1666 = vmatpush1.msra.mxu0 0.0
        %1667 = vmatprep.subr.mxu0 0.0
        %1668 = vmatpush1.msra.mxu0 0.0
        %1669 = vmatprep.subr.mxu0 0.0
        %1670 = vmatpush1.msra.mxu0 0.0
        %1671 = vmatprep.mubr.f32.mxu0 0.0
        %v1672 = vand.u32 %v1300, 4294901760
        %v1673 = vsub.f32 %v1300, %v1672
        %v1674 = vand.u32 %v1673, 4294901760
        %1675 = vmatmul.mubr.f32.gmra.mrb[0].mxu0 %v1674
        %v1676 = vpop.f32.mrb[0].mxu0
        %v1677 = vadd.f32 %v1582, %v1676
        %v1678 = vpop.f32.mrb[0].mxu0
        %1679 = vmatprep.mubr.f32.mxu0 0.0
        %v1680 = vand.u32 %v1303, 4294901760
        %v1681 = vsub.f32 %v1303, %v1680
        %v1682 = vand.u32 %v1681, 4294901760
        %1683 = vmatmul.mubr.f32.gmra.mrb[0].mxu0 %v1682
        %v1684 = vpop.f32.mrb[0].mxu0
        %v1685 = vadd.f32 %v1589, %v1684
        %v1686 = vpop.f32.mrb[0].mxu0
        %1687 = vmatprep.mubr.f32.mxu0 0.0
        %v1688 = vand.u32 %v1306, 4294901760
        %v1689 = vsub.f32 %v1306, %v1688
        %v1690 = vand.u32 %v1689, 4294901760
        %1691 = vmatmul.mubr.f32.gmra.mrb[0].mxu0 %v1690
        %v1692 = vpop.f32.mrb[0].mxu0
        %v1693 = vadd.f32 %v1596, %v1692
        %v1694 = vpop.f32.mrb[0].mxu0
        %1695 = vmatprep.mubr.f32.mxu0 0.0
        %v1696 = vand.u32 %v1309, 4294901760
        %v1697 = vsub.f32 %v1309, %v1696
        %v1698 = vand.u32 %v1697, 4294901760
        %1699 = vmatmul.mubr.f32.gmra.mrb[0].mxu0 %v1698
        %v1700 = vpop.f32.mrb[0].mxu0
        %v1701 = vadd.f32 %v1603, %v1700
        %v1702 = vpop.f32.mrb[0].mxu0
        %1703 = vdwg.mxu0
        %1704 = vmatprep.subr.mxu0 0.0
        %v1705 = vand.u32 %v1266, 4294901760
        %v1706 = vsub.f32 %v1266, %v1705
        %v1707 = vand.u32 %v1706, 4294901760
        %1708 = vmatpush1.msra.mxu0 %v1707
        %1709 = vmatprep.subr.mxu0 0.0
        %1710 = vmatpush1.msra.mxu0 0.0
        %1711 = vmatprep.subr.mxu0 0.0
        %1712 = vmatpush1.msra.mxu0 0.0
        %1713 = vmatprep.subr.mxu0 0.0
        %1714 = vmatpush1.msra.mxu0 0.0
        %1715 = vmatprep.subr.mxu0 0.0
        %1716 = vmatpush1.msra.mxu0 0.0
        %1717 = vmatprep.subr.mxu0 0.0
        %1718 = vmatpush1.msra.mxu0 0.0
        %1719 = vmatprep.subr.mxu0 0.0
        %1720 = vmatpush1.msra.mxu0 0.0
        %1721 = vmatprep.subr.mxu0 0.0
        %1722 = vmatpush1.msra.mxu0 0.0
        %1723 = vmatprep.subr.mxu0 0.0
        %1724 = vmatpush1.msra.mxu0 0.0
        %1725 = vmatprep.subr.mxu0 0.0
        %1726 = vmatpush1.msra.mxu0 0.0
        %1727 = vmatprep.subr.mxu0 0.0
        %1728 = vmatpush1.msra.mxu0 0.0
        %1729 = vmatprep.subr.mxu0 0.0
        %1730 = vmatpush1.msra.mxu0 0.0
        %1731 = vmatprep.subr.mxu0 0.0
        %1732 = vmatpush1.msra.mxu0 0.0
        %1733 = vmatprep.subr.mxu0 0.0
        %1734 = vmatpush1.msra.mxu0 0.0
        %1735 = vmatprep.subr.mxu0 0.0
        %1736 = vmatpush1.msra.mxu0 0.0
        %1737 = vmatprep.subr.mxu0 0.0
        %1738 = vmatpush1.msra.mxu0 0.0
        %1739 = vmatprep.subr.mxu0 0.0
        %1740 = vmatpush1.msra.mxu0 0.0
        %1741 = vmatprep.subr.mxu0 0.0
        %1742 = vmatpush1.msra.mxu0 0.0
        %1743 = vmatprep.subr.mxu0 0.0
        %1744 = vmatpush1.msra.mxu0 0.0
        %1745 = vmatprep.subr.mxu0 0.0
        %1746 = vmatpush1.msra.mxu0 0.0
        %1747 = vmatprep.subr.mxu0 0.0
        %1748 = vmatpush1.msra.mxu0 0.0
        %1749 = vmatprep.subr.mxu0 0.0
        %1750 = vmatpush1.msra.mxu0 0.0
        %1751 = vmatprep.subr.mxu0 0.0
        %1752 = vmatpush1.msra.mxu0 0.0
        %1753 = vmatprep.subr.mxu0 0.0
        %1754 = vmatpush1.msra.mxu0 0.0
        %1755 = vmatprep.subr.mxu0 0.0
        %1756 = vmatpush1.msra.mxu0 0.0
        %1757 = vmatprep.subr.mxu0 0.0
        %1758 = vmatpush1.msra.mxu0 0.0
        %1759 = vmatprep.subr.mxu0 0.0
        %1760 = vmatpush1.msra.mxu0 0.0
        %1761 = vmatprep.subr.mxu0 0.0
        %1762 = vmatpush1.msra.mxu0 0.0
        %1763 = vmatprep.subr.mxu0 0.0
        %1764 = vmatpush1.msra.mxu0 0.0
        %1765 = vmatprep.subr.mxu0 0.0
        %1766 = vmatpush1.msra.mxu0 0.0
        %1767 = vmatprep.subr.mxu0 0.0
        %1768 = vmatpush1.msra.mxu0 0.0
        %1769 = vmatprep.subr.mxu0 0.0
        %1770 = vmatpush1.msra.mxu0 0.0
        %1771 = vmatprep.mubr.f32.mxu0 0.0
        %v1772 = vand.u32 %v1300, 4294901760
        %1773 = vmatmul.mubr.f32.gmra.mrb[0].mxu0 %v1772
        %v1774 = vpop.f32.mrb[0].mxu0
        %v1775 = vadd.f32 %v1677, %v1774
        %v1776 = vpop.f32.mrb[0].mxu0
        %1777 = vmatprep.mubr.f32.mxu0 0.0
        %v1778 = vand.u32 %v1303, 4294901760
        %1779 = vmatmul.mubr.f32.gmra.mrb[0].mxu0 %v1778
        %v1780 = vpop.f32.mrb[0].mxu0
        %v1781 = vadd.f32 %v1685, %v1780
        %v1782 = vpop.f32.mrb[0].mxu0
        %1783 = vmatprep.mubr.f32.mxu0 0.0
        %v1784 = vand.u32 %v1306, 4294901760
        %1785 = vmatmul.mubr.f32.gmra.mrb[0].mxu0 %v1784
        %v1786 = vpop.f32.mrb[0].mxu0
        %v1787 = vadd.f32 %v1693, %v1786
        %v1788 = vpop.f32.mrb[0].mxu0
        %1789 = vmatprep.mubr.f32.mxu0 0.0
        %v1790 = vand.u32 %v1309, 4294901760
        %1791 = vmatmul.mubr.f32.gmra.mrb[0].mxu0 %v1790
        %v1792 = vpop.f32.mrb[0].mxu0
        %v1793 = vadd.f32 %v1701, %v1792
        %v1794 = vpop.f32.mrb[0].mxu0
        %1795 = vdwg.mxu0
        %1796 = vmatprep.subr.mxu0 0.0
        %v1797 = vand.u32 %v1266, 4294901760
        %1798 = vmatpush1.msra.mxu0 %v1797
        %1799 = vmatprep.subr.mxu0 0.0
        %1800 = vmatpush1.msra.mxu0 0.0
        %1801 = vmatprep.subr.mxu0 0.0
        %1802 = vmatpush1.msra.mxu0 0.0
        %1803 = vmatprep.subr.mxu0 0.0
        %1804 = vmatpush1.msra.mxu0 0.0
        %1805 = vmatprep.subr.mxu0 0.0
        %1806 = vmatpush1.msra.mxu0 0.0
        %1807 = vmatprep.subr.mxu0 0.0
        %1808 = vmatpush1.msra.mxu0 0.0
        %1809 = vmatprep.subr.mxu0 0.0
        %1810 = vmatpush1.msra.mxu0 0.0
        %1811 = vmatprep.subr.mxu0 0.0
        %1812 = vmatpush1.msra.mxu0 0.0
        %1813 = vmatprep.subr.mxu0 0.0
        %1814 = vmatpush1.msra.mxu0 0.0
        %1815 = vmatprep.subr.mxu0 0.0
        %1816 = vmatpush1.msra.mxu0 0.0
        %1817 = vmatprep.subr.mxu0 0.0
        %1818 = vmatpush1.msra.mxu0 0.0
        %1819 = vmatprep.subr.mxu0 0.0
        %1820 = vmatpush1.msra.mxu0 0.0
        %1821 = vmatprep.subr.mxu0 0.0
        %1822 = vmatpush1.msra.mxu0 0.0
        %1823 = vmatprep.subr.mxu0 0.0
        %1824 = vmatpush1.msra.mxu0 0.0
        %1825 = vmatprep.subr.mxu0 0.0
        %1826 = vmatpush1.msra.mxu0 0.0
        %1827 = vmatprep.subr.mxu0 0.0
        %1828 = vmatpush1.msra.mxu0 0.0
        %1829 = vmatprep.subr.mxu0 0.0
        %1830 = vmatpush1.msra.mxu0 0.0
        %1831 = vmatprep.subr.mxu0 0.0
        %1832 = vmatpush1.msra.mxu0 0.0
        %1833 = vmatprep.subr.mxu0 0.0
        %1834 = vmatpush1.msra.mxu0 0.0
        %1835 = vmatprep.subr.mxu0 0.0
        %1836 = vmatpush1.msra.mxu0 0.0
        %1837 = vmatprep.subr.mxu0 0.0
        %1838 = vmatpush1.msra.mxu0 0.0
        %1839 = vmatprep.subr.mxu0 0.0
        %1840 = vmatpush1.msra.mxu0 0.0
        %1841 = vmatprep.subr.mxu0 0.0
        %1842 = vmatpush1.msra.mxu0 0.0
        %1843 = vmatprep.subr.mxu0 0.0
        %1844 = vmatpush1.msra.mxu0 0.0
        %1845 = vmatprep.subr.mxu0 0.0
        %1846 = vmatpush1.msra.mxu0 0.0
        %1847 = vmatprep.subr.mxu0 0.0
        %1848 = vmatpush1.msra.mxu0 0.0
        %1849 = vmatprep.subr.mxu0 0.0
        %1850 = vmatpush1.msra.mxu0 0.0
        %1851 = vmatprep.subr.mxu0 0.0
        %1852 = vmatpush1.msra.mxu0 0.0
        %1853 = vmatprep.subr.mxu0 0.0
        %1854 = vmatpush1.msra.mxu0 0.0
        %1855 = vmatprep.subr.mxu0 0.0
        %1856 = vmatpush1.msra.mxu0 0.0
        %1857 = vmatprep.subr.mxu0 0.0
        %1858 = vmatpush1.msra.mxu0 0.0
        %1859 = vmatprep.subr.mxu0 0.0
        %1860 = vmatpush1.msra.mxu0 0.0
        %1861 = vmatprep.mubr.f32.mxu0 0.0
        %v1862 = vand.u32 %v1300, 4294901760
        %1863 = vmatmul.mubr.f32.gmra.mrb[0].mxu0 %v1862
        %v1864 = vpop.f32.mrb[0].mxu0
        %v1865 = vadd.f32 %v1775, %v1864
        %v1866 = vpop.f32.mrb[0].mxu0
        %1867 = vmatprep.mubr.f32.mxu0 0.0
        %v1868 = vand.u32 %v1303, 4294901760
        %1869 = vmatmul.mubr.f32.gmra.mrb[0].mxu0 %v1868
        %v1870 = vpop.f32.mrb[0].mxu0
        %v1871 = vadd.f32 %v1781, %v1870
        %v1872 = vpop.f32.mrb[0].mxu0
        %1873 = vmatprep.mubr.f32.mxu0 0.0
        %v1874 = vand.u32 %v1306, 4294901760
        %1875 = vmatmul.mubr.f32.gmra.mrb[0].mxu0 %v1874
        %v1876 = vpop.f32.mrb[0].mxu0
        %v1877 = vadd.f32 %v1787, %v1876
        %v1878 = vpop.f32.mrb[0].mxu0
        %1879 = vmatprep.mubr.f32.mxu0 0.0
        %v1880 = vand.u32 %v1309, 4294901760
        %1881 = vmatmul.mubr.f32.gmra.mrb[0].mxu0 %v1880
        %v1882 = vpop.f32.mrb[0].mxu0
        %v1883 = vadd.f32 %v1793, %v1882
        %v1884 = vpop.f32.mrb[0].mxu0
        %1885 = vdwg.mxu0
        %v1886 = vld [vmem:[#allocation2] sm:$0xff]
        %v1887 = vld [vmem:[#allocation2 + $0x8] sm:$0xff]
        %v1888 = vld [vmem:[#allocation2 + $0x10] sm:$0xff]
        %v1889 = vld [vmem:[#allocation2 + $0x18] sm:$0xff]
        %v1891 = vlaneseq
        %v1892 = vshrl.u32 %v1891, 7
        %v1893 = vsub.s32 0, %v1892
        %v1894 = vrot.slane %v1247, %v1893
        %1895 = vset.pattern.permute.xlu0 0
        %1896 = vperm.xlu0 %1895, %v1894
        %v1897 = vpop.permute.xlu0 %1896
        %v1899 = vmul.f32 %v1886, %v1897
        %v1900 = vmul.f32 %v1887, %v1897
        %v1901 = vmul.f32 %v1888, %v1897
        %v1902 = vmul.f32 %v1889, %v1897
        %v1903 = vadd.f32 %v1899, %v1865
        %v1904 = vadd.f32 %v1900, %v1871
        %v1905 = vadd.f32 %v1901, %v1877
        %v1906 = vadd.f32 %v1902, %v1883
        %vm1907 = vcmask 72704
        %1908 = vst.msk [vmem:[#allocation2] sm:$0xff] %vm1907, %v1903
        %1909 = vst.msk [vmem:[#allocation2 + $0x8] sm:$0xff] %vm1907, %v1904
        %1910 = vst.msk [vmem:[#allocation2 + $0x10] sm:$0xff] %vm1907, %v1905
        %1911 = vst.msk [vmem:[#allocation2 + $0x18] sm:$0xff] %vm1907, %v1906
        %v1912 = vld [vmem:[#allocation3] sm:$0x1]
        %v1913 = vsel %vm1907, %v1266, 0.0
        %v1914 = vrot.slane %v1913, 4
        %v1915 = vadd.f32 %v1913, %v1914
        %v1916 = vrot.slane %v1915, 2
        %v1917 = vadd.f32 %v1915, %v1916
        %v1918 = vrot.slane %v1917, 1
        %v1919 = vadd.f32 %v1917, %v1918
        %v1920 = vadd.f32 %v1912, %v1919
        %vm1921 = vcmask 65536
        %1922 = vst.msk [vmem:[#allocation3] sm:$0x1] %vm1921, %v1920
        %1923 = vrot.lane.b32.xlu0 %v775, 120
        %v1924 = vpop.permute.xlu0 %1923
        %v1925 = vsel %vm779, %v1924, 0
        %1927 = vmatprep.subr.mxu0 0.0
        %v1928 = vand.u32 %v778, 4294901760
        %1929 = vmatpush1.msra.mxu0 %v1928
        %1930 = vmatprep.subr.mxu0 0.0
        %1931 = vmatpush1.msra.mxu0 0.0
        %1932 = vmatprep.subr.mxu0 0.0
        %1933 = vmatpush1.msra.mxu0 0.0
        %1934 = vmatprep.subr.mxu0 0.0
        %1935 = vmatpush1.msra.mxu0 0.0
        %1936 = vmatprep.subr.mxu0 0.0
        %1937 = vmatpush1.msra.mxu0 0.0
        %1938 = vmatprep.subr.mxu0 0.0
        %1939 = vmatpush1.msra.mxu0 0.0
        %1940 = vmatprep.subr.mxu0 0.0
        %1941 = vmatpush1.msra.mxu0 0.0
        %1942 = vmatprep.subr.mxu0 0.0
        %1943 = vmatpush1.msra.mxu0 0.0
        %1944 = vmatprep.subr.mxu0 0.0
        %1945 = vmatpush1.msra.mxu0 0.0
        %1946 = vmatprep.subr.mxu0 0.0
        %1947 = vmatpush1.msra.mxu0 0.0
        %1948 = vmatprep.subr.mxu0 0.0
        %1949 = vmatpush1.msra.mxu0 0.0
        %1950 = vmatprep.subr.mxu0 0.0
        %1951 = vmatpush1.msra.mxu0 0.0
        %1952 = vmatprep.subr.mxu0 0.0
        %1953 = vmatpush1.msra.mxu0 0.0
        %1954 = vmatprep.subr.mxu0 0.0
        %1955 = vmatpush1.msra.mxu0 0.0
        %1956 = vmatprep.subr.mxu0 0.0
        %1957 = vmatpush1.msra.mxu0 0.0
        %1958 = vmatprep.subr.mxu0 0.0
        %1959 = vmatpush1.msra.mxu0 0.0
        %1960 = vmatprep.subr.mxu0 0.0
        %1961 = vmatpush1.msra.mxu0 0.0
        %1962 = vmatprep.subr.mxu0 0.0
        %1963 = vmatpush1.msra.mxu0 0.0
        %1964 = vmatprep.subr.mxu0 0.0
        %1965 = vmatpush1.msra.mxu0 0.0
        %1966 = vmatprep.subr.mxu0 0.0
        %1967 = vmatpush1.msra.mxu0 0.0
        %1968 = vmatprep.subr.mxu0 0.0
        %1969 = vmatpush1.msra.mxu0 0.0
        %1970 = vmatprep.subr.mxu0 0.0
        %1971 = vmatpush1.msra.mxu0 0.0
        %1972 = vmatprep.subr.mxu0 0.0
        %1973 = vmatpush1.msra.mxu0 0.0
        %1974 = vmatprep.subr.mxu0 0.0
        %1975 = vmatpush1.msra.mxu0 0.0
        %1976 = vmatprep.subr.mxu0 0.0
        %1977 = vmatpush1.msra.mxu0 0.0
        %1978 = vmatprep.subr.mxu0 0.0
        %1979 = vmatpush1.msra.mxu0 0.0
        %1980 = vmatprep.subr.mxu0 0.0
        %1981 = vmatpush1.msra.mxu0 0.0
        %1982 = vmatprep.subr.mxu0 0.0
        %1983 = vmatpush1.msra.mxu0 0.0
        %1984 = vmatprep.subr.mxu0 0.0
        %1985 = vmatpush1.msra.mxu0 0.0
        %1986 = vmatprep.subr.mxu0 0.0
        %1987 = vmatpush1.msra.mxu0 0.0
        %1988 = vmatprep.subr.mxu0 0.0
        %1989 = vmatpush1.msra.mxu0 0.0
        %1990 = vmatprep.subr.mxu0 0.0
        %1991 = vmatpush1.msra.mxu0 0.0
        %1992 = vmatprep.mubr.f32.mxu0 0.0
        %v1993 = vand.u32 %v1925, 4294901760
        %v1994 = vsub.f32 %v1925, %v1993
        %v1995 = vand.u32 %v1994, 4294901760
        %v1996 = vsub.f32 %v1994, %v1995
        %v1997 = vand.u32 %v1996, 4294901760
        %1998 = vmatmul.mubr.f32.gmra.mrb[0].mxu0 %v1997
        %v1999 = vpop.f32.mrb[0].mxu0
        %v2000 = vadd.f32 0.0, %v1999
        %v2001 = vpop.f32.mrb[0].mxu0
        %2002 = vdwg.mxu0
        %2003 = vmatprep.subr.mxu0 0.0
        %v2004 = vand.u32 %v778, 4294901760
        %v2005 = vsub.f32 %v778, %v2004
        %v2006 = vand.u32 %v2005, 4294901760
        %v2007 = vsub.f32 %v2005, %v2006
        %v2008 = vand.u32 %v2007, 4294901760
        %2009 = vmatpush1.msra.mxu0 %v2008
        %2010 = vmatprep.subr.mxu0 0.0
        %2011 = vmatpush1.msra.mxu0 0.0
        %2012 = vmatprep.subr.mxu0 0.0
        %2013 = vmatpush1.msra.mxu0 0.0
        %2014 = vmatprep.subr.mxu0 0.0
        %2015 = vmatpush1.msra.mxu0 0.0
        %2016 = vmatprep.subr.mxu0 0.0
        %2017 = vmatpush1.msra.mxu0 0.0
        %2018 = vmatprep.subr.mxu0 0.0
        %2019 = vmatpush1.msra.mxu0 0.0
        %2020 = vmatprep.subr.mxu0 0.0
        %2021 = vmatpush1.msra.mxu0 0.0
        %2022 = vmatprep.subr.mxu0 0.0
        %2023 = vmatpush1.msra.mxu0 0.0
        %2024 = vmatprep.subr.mxu0 0.0
        %2025 = vmatpush1.msra.mxu0 0.0
        %2026 = vmatprep.subr.mxu0 0.0
        %2027 = vmatpush1.msra.mxu0 0.0
        %2028 = vmatprep.subr.mxu0 0.0
        %2029 = vmatpush1.msra.mxu0 0.0
        %2030 = vmatprep.subr.mxu0 0.0
        %2031 = vmatpush1.msra.mxu0 0.0
        %2032 = vmatprep.subr.mxu0 0.0
        %2033 = vmatpush1.msra.mxu0 0.0
        %2034 = vmatprep.subr.mxu0 0.0
        %2035 = vmatpush1.msra.mxu0 0.0
        %2036 = vmatprep.subr.mxu0 0.0
        %2037 = vmatpush1.msra.mxu0 0.0
        %2038 = vmatprep.subr.mxu0 0.0
        %2039 = vmatpush1.msra.mxu0 0.0
        %2040 = vmatprep.subr.mxu0 0.0
        %2041 = vmatpush1.msra.mxu0 0.0
        %2042 = vmatprep.subr.mxu0 0.0
        %2043 = vmatpush1.msra.mxu0 0.0
        %2044 = vmatprep.subr.mxu0 0.0
        %2045 = vmatpush1.msra.mxu0 0.0
        %2046 = vmatprep.subr.mxu0 0.0
        %2047 = vmatpush1.msra.mxu0 0.0
        %2048 = vmatprep.subr.mxu0 0.0
        %2049 = vmatpush1.msra.mxu0 0.0
        %2050 = vmatprep.subr.mxu0 0.0
        %2051 = vmatpush1.msra.mxu0 0.0
        %2052 = vmatprep.subr.mxu0 0.0
        %2053 = vmatpush1.msra.mxu0 0.0
        %2054 = vmatprep.subr.mxu0 0.0
        %2055 = vmatpush1.msra.mxu0 0.0
        %2056 = vmatprep.subr.mxu0 0.0
        %2057 = vmatpush1.msra.mxu0 0.0
        %2058 = vmatprep.subr.mxu0 0.0
        %2059 = vmatpush1.msra.mxu0 0.0
        %2060 = vmatprep.subr.mxu0 0.0
        %2061 = vmatpush1.msra.mxu0 0.0
        %2062 = vmatprep.subr.mxu0 0.0
        %2063 = vmatpush1.msra.mxu0 0.0
        %2064 = vmatprep.subr.mxu0 0.0
        %2065 = vmatpush1.msra.mxu0 0.0
        %2066 = vmatprep.subr.mxu0 0.0
        %2067 = vmatpush1.msra.mxu0 0.0
        %2068 = vmatprep.subr.mxu0 0.0
        %2069 = vmatpush1.msra.mxu0 0.0
        %2070 = vmatprep.subr.mxu0 0.0
        %2071 = vmatpush1.msra.mxu0 0.0
        %2072 = vmatprep.mubr.f32.mxu0 0.0
        %v2073 = vand.u32 %v1925, 4294901760
        %2074 = vmatmul.mubr.f32.gmra.mrb[0].mxu0 %v2073
        %v2075 = vpop.f32.mrb[0].mxu0
        %v2076 = vadd.f32 %v2000, %v2075
        %v2077 = vpop.f32.mrb[0].mxu0
        %2078 = vdwg.mxu0
        %2079 = vmatprep.subr.mxu0 0.0
        %v2080 = vand.u32 %v778, 4294901760
        %v2081 = vsub.f32 %v778, %v2080
        %2082 = vmatpush1.msra.mxu0 %v2081
        %2083 = vmatprep.subr.mxu0 0.0
        %2084 = vmatpush1.msra.mxu0 0.0
        %2085 = vmatprep.subr.mxu0 0.0
        %2086 = vmatpush1.msra.mxu0 0.0
        %2087 = vmatprep.subr.mxu0 0.0
        %2088 = vmatpush1.msra.mxu0 0.0
        %2089 = vmatprep.subr.mxu0 0.0
        %2090 = vmatpush1.msra.mxu0 0.0
        %2091 = vmatprep.subr.mxu0 0.0
        %2092 = vmatpush1.msra.mxu0 0.0
        %2093 = vmatprep.subr.mxu0 0.0
        %2094 = vmatpush1.msra.mxu0 0.0
        %2095 = vmatprep.subr.mxu0 0.0
        %2096 = vmatpush1.msra.mxu0 0.0
        %2097 = vmatprep.subr.mxu0 0.0
        %2098 = vmatpush1.msra.mxu0 0.0
        %2099 = vmatprep.subr.mxu0 0.0
        %2100 = vmatpush1.msra.mxu0 0.0
        %2101 = vmatprep.subr.mxu0 0.0
        %2102 = vmatpush1.msra.mxu0 0.0
        %2103 = vmatprep.subr.mxu0 0.0
        %2104 = vmatpush1.msra.mxu0 0.0
        %2105 = vmatprep.subr.mxu0 0.0
        %2106 = vmatpush1.msra.mxu0 0.0
        %2107 = vmatprep.subr.mxu0 0.0
        %2108 = vmatpush1.msra.mxu0 0.0
        %2109 = vmatprep.subr.mxu0 0.0
        %2110 = vmatpush1.msra.mxu0 0.0
        %2111 = vmatprep.subr.mxu0 0.0
        %2112 = vmatpush1.msra.mxu0 0.0
        %2113 = vmatprep.subr.mxu0 0.0
        %2114 = vmatpush1.msra.mxu0 0.0
        %2115 = vmatprep.subr.mxu0 0.0
        %2116 = vmatpush1.msra.mxu0 0.0
        %2117 = vmatprep.subr.mxu0 0.0
        %2118 = vmatpush1.msra.mxu0 0.0
        %2119 = vmatprep.subr.mxu0 0.0
        %2120 = vmatpush1.msra.mxu0 0.0
        %2121 = vmatprep.subr.mxu0 0.0
        %2122 = vmatpush1.msra.mxu0 0.0
        %2123 = vmatprep.subr.mxu0 0.0
        %2124 = vmatpush1.msra.mxu0 0.0
        %2125 = vmatprep.subr.mxu0 0.0
        %2126 = vmatpush1.msra.mxu0 0.0
        %2127 = vmatprep.subr.mxu0 0.0
        %2128 = vmatpush1.msra.mxu0 0.0
        %2129 = vmatprep.subr.mxu0 0.0
        %2130 = vmatpush1.msra.mxu0 0.0
        %2131 = vmatprep.subr.mxu0 0.0
        %2132 = vmatpush1.msra.mxu0 0.0
        %2133 = vmatprep.subr.mxu0 0.0
        %2134 = vmatpush1.msra.mxu0 0.0
        %2135 = vmatprep.subr.mxu0 0.0
        %2136 = vmatpush1.msra.mxu0 0.0
        %2137 = vmatprep.subr.mxu0 0.0
        %2138 = vmatpush1.msra.mxu0 0.0
        %2139 = vmatprep.subr.mxu0 0.0
        %2140 = vmatpush1.msra.mxu0 0.0
        %2141 = vmatprep.subr.mxu0 0.0
        %2142 = vmatpush1.msra.mxu0 0.0
        %2143 = vmatprep.subr.mxu0 0.0
        %2144 = vmatpush1.msra.mxu0 0.0
        %2145 = vmatprep.mubr.f32.mxu0 0.0
        %v2146 = vand.u32 %v1925, 4294901760
        %v2147 = vsub.f32 %v1925, %v2146
        %2148 = vmatmul.mubr.f32.gmra.mrb[0].mxu0 %v2147
        %v2149 = vpop.f32.mrb[0].mxu0
        %v2150 = vadd.f32 %v2076, %v2149
        %v2151 = vpop.f32.mrb[0].mxu0
        %2152 = vdwg.mxu0
        %2153 = vmatprep.subr.mxu0 0.0
        %v2154 = vand.u32 %v778, 4294901760
        %2155 = vmatpush1.msra.mxu0 %v2154
        %2156 = vmatprep.subr.mxu0 0.0
        %2157 = vmatpush1.msra.mxu0 0.0
        %2158 = vmatprep.subr.mxu0 0.0
        %2159 = vmatpush1.msra.mxu0 0.0
        %2160 = vmatprep.subr.mxu0 0.0
        %2161 = vmatpush1.msra.mxu0 0.0
        %2162 = vmatprep.subr.mxu0 0.0
        %2163 = vmatpush1.msra.mxu0 0.0
        %2164 = vmatprep.subr.mxu0 0.0
        %2165 = vmatpush1.msra.mxu0 0.0
        %2166 = vmatprep.subr.mxu0 0.0
        %2167 = vmatpush1.msra.mxu0 0.0
        %2168 = vmatprep.subr.mxu0 0.0
        %2169 = vmatpush1.msra.mxu0 0.0
        %2170 = vmatprep.subr.mxu0 0.0
        %2171 = vmatpush1.msra.mxu0 0.0
        %2172 = vmatprep.subr.mxu0 0.0
        %2173 = vmatpush1.msra.mxu0 0.0
        %2174 = vmatprep.subr.mxu0 0.0
        %2175 = vmatpush1.msra.mxu0 0.0
        %2176 = vmatprep.subr.mxu0 0.0
        %2177 = vmatpush1.msra.mxu0 0.0
        %2178 = vmatprep.subr.mxu0 0.0
        %2179 = vmatpush1.msra.mxu0 0.0
        %2180 = vmatprep.subr.mxu0 0.0
        %2181 = vmatpush1.msra.mxu0 0.0
        %2182 = vmatprep.subr.mxu0 0.0
        %2183 = vmatpush1.msra.mxu0 0.0
        %2184 = vmatprep.subr.mxu0 0.0
        %2185 = vmatpush1.msra.mxu0 0.0
        %2186 = vmatprep.subr.mxu0 0.0
        %2187 = vmatpush1.msra.mxu0 0.0
        %2188 = vmatprep.subr.mxu0 0.0
        %2189 = vmatpush1.msra.mxu0 0.0
        %2190 = vmatprep.subr.mxu0 0.0
        %2191 = vmatpush1.msra.mxu0 0.0
        %2192 = vmatprep.subr.mxu0 0.0
        %2193 = vmatpush1.msra.mxu0 0.0
        %2194 = vmatprep.subr.mxu0 0.0
        %2195 = vmatpush1.msra.mxu0 0.0
        %2196 = vmatprep.subr.mxu0 0.0
        %2197 = vmatpush1.msra.mxu0 0.0
        %2198 = vmatprep.subr.mxu0 0.0
        %2199 = vmatpush1.msra.mxu0 0.0
        %2200 = vmatprep.subr.mxu0 0.0
        %2201 = vmatpush1.msra.mxu0 0.0
        %2202 = vmatprep.subr.mxu0 0.0
        %2203 = vmatpush1.msra.mxu0 0.0
        %2204 = vmatprep.subr.mxu0 0.0
        %2205 = vmatpush1.msra.mxu0 0.0
        %2206 = vmatprep.subr.mxu0 0.0
        %2207 = vmatpush1.msra.mxu0 0.0
        %2208 = vmatprep.subr.mxu0 0.0
        %2209 = vmatpush1.msra.mxu0 0.0
        %2210 = vmatprep.subr.mxu0 0.0
        %2211 = vmatpush1.msra.mxu0 0.0
        %2212 = vmatprep.subr.mxu0 0.0
        %2213 = vmatpush1.msra.mxu0 0.0
        %2214 = vmatprep.subr.mxu0 0.0
        %2215 = vmatpush1.msra.mxu0 0.0
        %2216 = vmatprep.subr.mxu0 0.0
        %2217 = vmatpush1.msra.mxu0 0.0
        %2218 = vmatprep.mubr.f32.mxu0 0.0
        %v2219 = vand.u32 %v1925, 4294901760
        %v2220 = vsub.f32 %v1925, %v2219
        %v2221 = vand.u32 %v2220, 4294901760
        %2222 = vmatmul.mubr.f32.gmra.mrb[0].mxu0 %v2221
        %v2223 = vpop.f32.mrb[0].mxu0
        %v2224 = vadd.f32 %v2150, %v2223
        %v2225 = vpop.f32.mrb[0].mxu0
        %2226 = vdwg.mxu0
        %2227 = vmatprep.subr.mxu0 0.0
        %v2228 = vand.u32 %v778, 4294901760
        %v2229 = vsub.f32 %v778, %v2228
        %v2230 = vand.u32 %v2229, 4294901760
        %2231 = vmatpush1.msra.mxu0 %v2230
        %2232 = vmatprep.subr.mxu0 0.0
        %2233 = vmatpush1.msra.mxu0 0.0
        %2234 = vmatprep.subr.mxu0 0.0
        %2235 = vmatpush1.msra.mxu0 0.0
        %2236 = vmatprep.subr.mxu0 0.0
        %2237 = vmatpush1.msra.mxu0 0.0
        %2238 = vmatprep.subr.mxu0 0.0
        %2239 = vmatpush1.msra.mxu0 0.0
        %2240 = vmatprep.subr.mxu0 0.0
        %2241 = vmatpush1.msra.mxu0 0.0
        %2242 = vmatprep.subr.mxu0 0.0
        %2243 = vmatpush1.msra.mxu0 0.0
        %2244 = vmatprep.subr.mxu0 0.0
        %2245 = vmatpush1.msra.mxu0 0.0
        %2246 = vmatprep.subr.mxu0 0.0
        %2247 = vmatpush1.msra.mxu0 0.0
        %2248 = vmatprep.subr.mxu0 0.0
        %2249 = vmatpush1.msra.mxu0 0.0
        %2250 = vmatprep.subr.mxu0 0.0
        %2251 = vmatpush1.msra.mxu0 0.0
        %2252 = vmatprep.subr.mxu0 0.0
        %2253 = vmatpush1.msra.mxu0 0.0
        %2254 = vmatprep.subr.mxu0 0.0
        %2255 = vmatpush1.msra.mxu0 0.0
        %2256 = vmatprep.subr.mxu0 0.0
        %2257 = vmatpush1.msra.mxu0 0.0
        %2258 = vmatprep.subr.mxu0 0.0
        %2259 = vmatpush1.msra.mxu0 0.0
        %2260 = vmatprep.subr.mxu0 0.0
        %2261 = vmatpush1.msra.mxu0 0.0
        %2262 = vmatprep.subr.mxu0 0.0
        %2263 = vmatpush1.msra.mxu0 0.0
        %2264 = vmatprep.subr.mxu0 0.0
        %2265 = vmatpush1.msra.mxu0 0.0
        %2266 = vmatprep.subr.mxu0 0.0
        %2267 = vmatpush1.msra.mxu0 0.0
        %2268 = vmatprep.subr.mxu0 0.0
        %2269 = vmatpush1.msra.mxu0 0.0
        %2270 = vmatprep.subr.mxu0 0.0
        %2271 = vmatpush1.msra.mxu0 0.0
        %2272 = vmatprep.subr.mxu0 0.0
        %2273 = vmatpush1.msra.mxu0 0.0
        %2274 = vmatprep.subr.mxu0 0.0
        %2275 = vmatpush1.msra.mxu0 0.0
        %2276 = vmatprep.subr.mxu0 0.0
        %2277 = vmatpush1.msra.mxu0 0.0
        %2278 = vmatprep.subr.mxu0 0.0
        %2279 = vmatpush1.msra.mxu0 0.0
        %2280 = vmatprep.subr.mxu0 0.0
        %2281 = vmatpush1.msra.mxu0 0.0
        %2282 = vmatprep.subr.mxu0 0.0
        %2283 = vmatpush1.msra.mxu0 0.0
        %2284 = vmatprep.subr.mxu0 0.0
        %2285 = vmatpush1.msra.mxu0 0.0
        %2286 = vmatprep.subr.mxu0 0.0
        %2287 = vmatpush1.msra.mxu0 0.0
        %2288 = vmatprep.subr.mxu0 0.0
        %2289 = vmatpush1.msra.mxu0 0.0
        %2290 = vmatprep.subr.mxu0 0.0
        %2291 = vmatpush1.msra.mxu0 0.0
        %2292 = vmatprep.subr.mxu0 0.0
        %2293 = vmatpush1.msra.mxu0 0.0
        %2294 = vmatprep.mubr.f32.mxu0 0.0
        %v2295 = vand.u32 %v1925, 4294901760
        %2296 = vmatmul.mubr.f32.gmra.mrb[0].mxu0 %v2295
        %v2297 = vpop.f32.mrb[0].mxu0
        %v2298 = vadd.f32 %v2224, %v2297
        %v2299 = vpop.f32.mrb[0].mxu0
        %2300 = vdwg.mxu0
        %2301 = vmatprep.subr.mxu0 0.0
        %v2302 = vand.u32 %v778, 4294901760
        %2303 = vmatpush1.msra.mxu0 %v2302
        %2304 = vmatprep.subr.mxu0 0.0
        %2305 = vmatpush1.msra.mxu0 0.0
        %2306 = vmatprep.subr.mxu0 0.0
        %2307 = vmatpush1.msra.mxu0 0.0
        %2308 = vmatprep.subr.mxu0 0.0
        %2309 = vmatpush1.msra.mxu0 0.0
        %2310 = vmatprep.subr.mxu0 0.0
        %2311 = vmatpush1.msra.mxu0 0.0
        %2312 = vmatprep.subr.mxu0 0.0
        %2313 = vmatpush1.msra.mxu0 0.0
        %2314 = vmatprep.subr.mxu0 0.0
        %2315 = vmatpush1.msra.mxu0 0.0
        %2316 = vmatprep.subr.mxu0 0.0
        %2317 = vmatpush1.msra.mxu0 0.0
        %2318 = vmatprep.subr.mxu0 0.0
        %2319 = vmatpush1.msra.mxu0 0.0
        %2320 = vmatprep.subr.mxu0 0.0
        %2321 = vmatpush1.msra.mxu0 0.0
        %2322 = vmatprep.subr.mxu0 0.0
        %2323 = vmatpush1.msra.mxu0 0.0
        %2324 = vmatprep.subr.mxu0 0.0
        %2325 = vmatpush1.msra.mxu0 0.0
        %2326 = vmatprep.subr.mxu0 0.0
        %2327 = vmatpush1.msra.mxu0 0.0
        %2328 = vmatprep.subr.mxu0 0.0
        %2329 = vmatpush1.msra.mxu0 0.0
        %2330 = vmatprep.subr.mxu0 0.0
        %2331 = vmatpush1.msra.mxu0 0.0
        %2332 = vmatprep.subr.mxu0 0.0
        %2333 = vmatpush1.msra.mxu0 0.0
        %2334 = vmatprep.subr.mxu0 0.0
        %2335 = vmatpush1.msra.mxu0 0.0
        %2336 = vmatprep.subr.mxu0 0.0
        %2337 = vmatpush1.msra.mxu0 0.0
        %2338 = vmatprep.subr.mxu0 0.0
        %2339 = vmatpush1.msra.mxu0 0.0
        %2340 = vmatprep.subr.mxu0 0.0
        %2341 = vmatpush1.msra.mxu0 0.0
        %2342 = vmatprep.subr.mxu0 0.0
        %2343 = vmatpush1.msra.mxu0 0.0
        %2344 = vmatprep.subr.mxu0 0.0
        %2345 = vmatpush1.msra.mxu0 0.0
        %2346 = vmatprep.subr.mxu0 0.0
        %2347 = vmatpush1.msra.mxu0 0.0
        %2348 = vmatprep.subr.mxu0 0.0
        %2349 = vmatpush1.msra.mxu0 0.0
        %2350 = vmatprep.subr.mxu0 0.0
        %2351 = vmatpush1.msra.mxu0 0.0
        %2352 = vmatprep.subr.mxu0 0.0
        %2353 = vmatpush1.msra.mxu0 0.0
        %2354 = vmatprep.subr.mxu0 0.0
        %2355 = vmatpush1.msra.mxu0 0.0
        %2356 = vmatprep.subr.mxu0 0.0
        %2357 = vmatpush1.msra.mxu0 0.0
        %2358 = vmatprep.subr.mxu0 0.0
        %2359 = vmatpush1.msra.mxu0 0.0
        %2360 = vmatprep.subr.mxu0 0.0
        %2361 = vmatpush1.msra.mxu0 0.0
        %2362 = vmatprep.subr.mxu0 0.0
        %2363 = vmatpush1.msra.mxu0 0.0
        %2364 = vmatprep.subr.mxu0 0.0
        %2365 = vmatpush1.msra.mxu0 0.0
        %2366 = vmatprep.mubr.f32.mxu0 0.0
        %v2367 = vand.u32 %v1925, 4294901760
        %2368 = vmatmul.mubr.f32.gmra.mrb[0].mxu0 %v2367
        %v2369 = vpop.f32.mrb[0].mxu0
        %v2370 = vadd.f32 %v2298, %v2369
        %v2371 = vpop.f32.mrb[0].mxu0
        %2372 = vdwg.mxu0
        %2374 = vrot.lane.b32.xlu0 %v1229, 120
        %v2375 = vpop.permute.xlu0 %2374
        %v2377 = vsel %vm779, %v2375, 0.0
        %2378 = vadd.xlane.f32.xlu0 %v2377
        %v2379 = vpop.xlane.xlu0 %2378
        %v2380 = vmul.f32 %v2379, 0.17677669
        %v2381 = vsel %vm289, %v2370, -inf
        %2382 = vmax.xlane.f32.xlu0 %v2381
        %v2383 = vpop.xlane.xlu0 %2382
        %v2384 = vrot.slane %v2383, 4
        %v2385 = vmax.f32 %v2383, %v2384
        %v2386 = vrot.slane %v2385, 2
        %v2387 = vmax.f32 %v2385, %v2386
        %v2388 = vrot.slane %v2387, 1
        %v2389 = vmax.f32 %v2387, %v2388
        %s2390 = scalar_lea.vmem [#allocation4], 1
        %v2391 = vld [vmem:[%s2390] sm:$0x1]
        %v2392 = vmax.f32 %v2391, %v2389
        %v2393 = vsub.f32 %v2391, %v2392
        %v2394 = vmul.f32 %v2393, 1.442695
        %v2395 = vpow.pop %v2394
        %2396 = vst.msk [vmem:[%s2390] sm:$0x1] %vm1248, %v2392
        %v2397 = vsub.f32 %v2370, %v2380
        %v2399 = vlaneseq
        %v2400 = vshrl.u32 %v2399, 7
        %v2401 = vsub.s32 0, %v2400
        %v2402 = vrot.slane %v2392, %v2401
        %2403 = vset.pattern.permute.xlu0 0
        %2404 = vperm.xlu0 %2403, %v2402
        %v2405 = vpop.permute.xlu0 %2404
        %v2407 = vsub.f32 %v2397, %v2405
        %v2408 = vmul.f32 %v2407, 1.442695
        %v2409 = vpow.pop %v2408
        %2410 = vrot.lane.b32.xlu0 %v775, 88
        %v2411 = vpop.permute.xlu0 %2410
        %v2413 = vsel %vm779, %v2411, 1.0
        %2414 = vxpose.xlu0.b32.start [1/16] %v2409, 128
        %2415 = vxpose.xlu0.b32.cont [2/16] 0.0, 128
        %2416 = vxpose.xlu0.b32.cont [3/16] 0.0, 128
        %2417 = vxpose.xlu0.b32.cont [4/16] 0.0, 128
        %2418 = vxpose.xlu0.b32.cont [5/16] 0.0, 128
        %2419 = vxpose.xlu0.b32.cont [6/16] 0.0, 128
        %2420 = vxpose.xlu0.b32.cont [7/16] 0.0, 128
        %2421 = vxpose.xlu0.b32.cont [8/16] 0.0, 128
        %2422 = vxpose.xlu0.b32.cont [9/16] 0.0, 128
        %2423 = vxpose.xlu0.b32.cont [10/16] 0.0, 128
        %2424 = vxpose.xlu0.b32.cont [11/16] 0.0, 128
        %2425 = vxpose.xlu0.b32.cont [12/16] 0.0, 128
        %2426 = vxpose.xlu0.b32.cont [13/16] 0.0, 128
        %2427 = vxpose.xlu0.b32.cont [14/16] 0.0, 128
        %2428 = vxpose.xlu0.b32.cont [15/16] 0.0, 128
        %2429 = vxpose.xlu0.b32.end [16/16] 0.0, 128
        %v2430 = vpop.trf.xlu0
        %v2431 = vpop.trf.xlu0
        %v2432 = vpop.trf.xlu0
        %v2433 = vpop.trf.xlu0
        %v2434 = vpop.trf.xlu0
        %v2435 = vpop.trf.xlu0
        %v2436 = vpop.trf.xlu0
        %v2437 = vpop.trf.xlu0
        %v2438 = vpop.trf.xlu0
        %v2439 = vpop.trf.xlu0
        %v2440 = vpop.trf.xlu0
        %v2441 = vpop.trf.xlu0
        %v2442 = vpop.trf.xlu0
        %v2443 = vpop.trf.xlu0
        %v2444 = vpop.trf.xlu0
        %v2445 = vpop.trf.xlu0
        %v2447 = vsel %vm779, %v2430, 0
        %v2450 = vsel %vm779, %v2431, 0
        %v2453 = vsel %vm779, %v2432, 0
        %v2456 = vsel %vm779, %v2433, 0
        %2458 = vmatprep.subr.mxu0 0.0
        %v2459 = vand.u32 %v2413, 4294901760
        %2460 = vmatpush1.msra.mxu0 %v2459
        %2461 = vmatprep.subr.mxu0 0.0
        %2462 = vmatpush1.msra.mxu0 0.0
        %2463 = vmatprep.subr.mxu0 0.0
        %2464 = vmatpush1.msra.mxu0 0.0
        %2465 = vmatprep.subr.mxu0 0.0
        %2466 = vmatpush1.msra.mxu0 0.0
        %2467 = vmatprep.subr.mxu0 0.0
        %2468 = vmatpush1.msra.mxu0 0.0
        %2469 = vmatprep.subr.mxu0 0.0
        %2470 = vmatpush1.msra.mxu0 0.0
        %2471 = vmatprep.subr.mxu0 0.0
        %2472 = vmatpush1.msra.mxu0 0.0
        %2473 = vmatprep.subr.mxu0 0.0
        %2474 = vmatpush1.msra.mxu0 0.0
        %2475 = vmatprep.subr.mxu0 0.0
        %2476 = vmatpush1.msra.mxu0 0.0
        %2477 = vmatprep.subr.mxu0 0.0
        %2478 = vmatpush1.msra.mxu0 0.0
        %2479 = vmatprep.subr.mxu0 0.0
        %2480 = vmatpush1.msra.mxu0 0.0
        %2481 = vmatprep.subr.mxu0 0.0
        %2482 = vmatpush1.msra.mxu0 0.0
        %2483 = vmatprep.subr.mxu0 0.0
        %2484 = vmatpush1.msra.mxu0 0.0
        %2485 = vmatprep.subr.mxu0 0.0
        %2486 = vmatpush1.msra.mxu0 0.0
        %2487 = vmatprep.subr.mxu0 0.0
        %2488 = vmatpush1.msra.mxu0 0.0
        %2489 = vmatprep.subr.mxu0 0.0
        %2490 = vmatpush1.msra.mxu0 0.0
        %2491 = vmatprep.subr.mxu0 0.0
        %2492 = vmatpush1.msra.mxu0 0.0
        %2493 = vmatprep.subr.mxu0 0.0
        %2494 = vmatpush1.msra.mxu0 0.0
        %2495 = vmatprep.subr.mxu0 0.0
        %2496 = vmatpush1.msra.mxu0 0.0
        %2497 = vmatprep.subr.mxu0 0.0
        %2498 = vmatpush1.msra.mxu0 0.0
        %2499 = vmatprep.subr.mxu0 0.0
        %2500 = vmatpush1.msra.mxu0 0.0
        %2501 = vmatprep.subr.mxu0 0.0
        %2502 = vmatpush1.msra.mxu0 0.0
        %2503 = vmatprep.subr.mxu0 0.0
        %2504 = vmatpush1.msra.mxu0 0.0
        %2505 = vmatprep.subr.mxu0 0.0
        %2506 = vmatpush1.msra.mxu0 0.0
        %2507 = vmatprep.subr.mxu0 0.0
        %2508 = vmatpush1.msra.mxu0 0.0
        %2509 = vmatprep.subr.mxu0 0.0
        %2510 = vmatpush1.msra.mxu0 0.0
        %2511 = vmatprep.subr.mxu0 0.0
        %2512 = vmatpush1.msra.mxu0 0.0
        %2513 = vmatprep.subr.mxu0 0.0
        %2514 = vmatpush1.msra.mxu0 0.0
        %2515 = vmatprep.subr.mxu0 0.0
        %2516 = vmatpush1.msra.mxu0 0.0
        %2517 = vmatprep.subr.mxu0 0.0
        %2518 = vmatpush1.msra.mxu0 0.0
        %2519 = vmatprep.subr.mxu0 0.0
        %2520 = vmatpush1.msra.mxu0 0.0
        %2521 = vmatprep.subr.mxu0 0.0
        %2522 = vmatpush1.msra.mxu0 0.0
        %2523 = vmatprep.mubr.f32.mxu0 0.0
        %v2524 = vand.u32 %v2447, 4294901760
        %v2525 = vsub.f32 %v2447, %v2524
        %v2526 = vand.u32 %v2525, 4294901760
        %v2527 = vsub.f32 %v2525, %v2526
        %v2528 = vand.u32 %v2527, 4294901760
        %2529 = vmatmul.mubr.f32.gmra.mrb[0].mxu0 %v2528
        %v2530 = vpop.f32.mrb[0].mxu0
        %v2531 = vadd.f32 0.0, %v2530
        %v2532 = vpop.f32.mrb[0].mxu0
        %2533 = vmatprep.mubr.f32.mxu0 0.0
        %v2534 = vand.u32 %v2450, 4294901760
        %v2535 = vsub.f32 %v2450, %v2534
        %v2536 = vand.u32 %v2535, 4294901760
        %v2537 = vsub.f32 %v2535, %v2536
        %v2538 = vand.u32 %v2537, 4294901760
        %2539 = vmatmul.mubr.f32.gmra.mrb[0].mxu0 %v2538
        %v2540 = vpop.f32.mrb[0].mxu0
        %v2541 = vadd.f32 0.0, %v2540
        %v2542 = vpop.f32.mrb[0].mxu0
        %2543 = vmatprep.mubr.f32.mxu0 0.0
        %v2544 = vand.u32 %v2453, 4294901760
        %v2545 = vsub.f32 %v2453, %v2544
        %v2546 = vand.u32 %v2545, 4294901760
        %v2547 = vsub.f32 %v2545, %v2546
        %v2548 = vand.u32 %v2547, 4294901760
        %2549 = vmatmul.mubr.f32.gmra.mrb[0].mxu0 %v2548
        %v2550 = vpop.f32.mrb[0].mxu0
        %v2551 = vadd.f32 0.0, %v2550
        %v2552 = vpop.f32.mrb[0].mxu0
        %2553 = vmatprep.mubr.f32.mxu0 0.0
        %v2554 = vand.u32 %v2456, 4294901760
        %v2555 = vsub.f32 %v2456, %v2554
        %v2556 = vand.u32 %v2555, 4294901760
        %v2557 = vsub.f32 %v2555, %v2556
        %v2558 = vand.u32 %v2557, 4294901760
        %2559 = vmatmul.mubr.f32.gmra.mrb[0].mxu0 %v2558
        %v2560 = vpop.f32.mrb[0].mxu0
        %v2561 = vadd.f32 0.0, %v2560
        %v2562 = vpop.f32.mrb[0].mxu0
        %2563 = vdwg.mxu0
        %2564 = vmatprep.subr.mxu0 0.0
        %v2565 = vand.u32 %v2413, 4294901760
        %v2566 = vsub.f32 %v2413, %v2565
        %v2567 = vand.u32 %v2566, 4294901760
        %v2568 = vsub.f32 %v2566, %v2567
        %v2569 = vand.u32 %v2568, 4294901760
        %2570 = vmatpush1.msra.mxu0 %v2569
        %2571 = vmatprep.subr.mxu0 0.0
        %2572 = vmatpush1.msra.mxu0 0.0
        %2573 = vmatprep.subr.mxu0 0.0
        %2574 = vmatpush1.msra.mxu0 0.0
        %2575 = vmatprep.subr.mxu0 0.0
        %2576 = vmatpush1.msra.mxu0 0.0
        %2577 = vmatprep.subr.mxu0 0.0
        %2578 = vmatpush1.msra.mxu0 0.0
        %2579 = vmatprep.subr.mxu0 0.0
        %2580 = vmatpush1.msra.mxu0 0.0
        %2581 = vmatprep.subr.mxu0 0.0
        %2582 = vmatpush1.msra.mxu0 0.0
        %2583 = vmatprep.subr.mxu0 0.0
        %2584 = vmatpush1.msra.mxu0 0.0
        %2585 = vmatprep.subr.mxu0 0.0
        %2586 = vmatpush1.msra.mxu0 0.0
        %2587 = vmatprep.subr.mxu0 0.0
        %2588 = vmatpush1.msra.mxu0 0.0
        %2589 = vmatprep.subr.mxu0 0.0
        %2590 = vmatpush1.msra.mxu0 0.0
        %2591 = vmatprep.subr.mxu0 0.0
        %2592 = vmatpush1.msra.mxu0 0.0
        %2593 = vmatprep.subr.mxu0 0.0
        %2594 = vmatpush1.msra.mxu0 0.0
        %2595 = vmatprep.subr.mxu0 0.0
        %2596 = vmatpush1.msra.mxu0 0.0
        %2597 = vmatprep.subr.mxu0 0.0
        %2598 = vmatpush1.msra.mxu0 0.0
        %2599 = vmatprep.subr.mxu0 0.0
        %2600 = vmatpush1.msra.mxu0 0.0
        %2601 = vmatprep.subr.mxu0 0.0
        %2602 = vmatpush1.msra.mxu0 0.0
        %2603 = vmatprep.subr.mxu0 0.0
        %2604 = vmatpush1.msra.mxu0 0.0
        %2605 = vmatprep.subr.mxu0 0.0
        %2606 = vmatpush1.msra.mxu0 0.0
        %2607 = vmatprep.subr.mxu0 0.0
        %2608 = vmatpush1.msra.mxu0 0.0
        %2609 = vmatprep.subr.mxu0 0.0
        %2610 = vmatpush1.msra.mxu0 0.0
        %2611 = vmatprep.subr.mxu0 0.0
        %2612 = vmatpush1.msra.mxu0 0.0
        %2613 = vmatprep.subr.mxu0 0.0
        %2614 = vmatpush1.msra.mxu0 0.0
        %2615 = vmatprep.subr.mxu0 0.0
        %2616 = vmatpush1.msra.mxu0 0.0
        %2617 = vmatprep.subr.mxu0 0.0
        %2618 = vmatpush1.msra.mxu0 0.0
        %2619 = vmatprep.subr.mxu0 0.0
        %2620 = vmatpush1.msra.mxu0 0.0
        %2621 = vmatprep.subr.mxu0 0.0
        %2622 = vmatpush1.msra.mxu0 0.0
        %2623 = vmatprep.subr.mxu0 0.0
        %2624 = vmatpush1.msra.mxu0 0.0
        %2625 = vmatprep.subr.mxu0 0.0
        %2626 = vmatpush1.msra.mxu0 0.0
        %2627 = vmatprep.subr.mxu0 0.0
        %2628 = vmatpush1.msra.mxu0 0.0
        %2629 = vmatprep.subr.mxu0 0.0
        %2630 = vmatpush1.msra.mxu0 0.0
        %2631 = vmatprep.subr.mxu0 0.0
        %2632 = vmatpush1.msra.mxu0 0.0
        %2633 = vmatprep.mubr.f32.mxu0 0.0
        %v2634 = vand.u32 %v2447, 4294901760
        %2635 = vmatmul.mubr.f32.gmra.mrb[0].mxu0 %v2634
        %v2636 = vpop.f32.mrb[0].mxu0
        %v2637 = vadd.f32 %v2531, %v2636
        %v2638 = vpop.f32.mrb[0].mxu0
        %2639 = vmatprep.mubr.f32.mxu0 0.0
        %v2640 = vand.u32 %v2450, 4294901760
        %2641 = vmatmul.mubr.f32.gmra.mrb[0].mxu0 %v2640
        %v2642 = vpop.f32.mrb[0].mxu0
        %v2643 = vadd.f32 %v2541, %v2642
        %v2644 = vpop.f32.mrb[0].mxu0
        %2645 = vmatprep.mubr.f32.mxu0 0.0
        %v2646 = vand.u32 %v2453, 4294901760
        %2647 = vmatmul.mubr.f32.gmra.mrb[0].mxu0 %v2646
        %v2648 = vpop.f32.mrb[0].mxu0
        %v2649 = vadd.f32 %v2551, %v2648
        %v2650 = vpop.f32.mrb[0].mxu0
        %2651 = vmatprep.mubr.f32.mxu0 0.0
        %v2652 = vand.u32 %v2456, 4294901760
        %2653 = vmatmul.mubr.f32.gmra.mrb[0].mxu0 %v2652
        %v2654 = vpop.f32.mrb[0].mxu0
        %v2655 = vadd.f32 %v2561, %v2654
        %v2656 = vpop.f32.mrb[0].mxu0
        %2657 = vdwg.mxu0
        %2658 = vmatprep.subr.mxu0 0.0
        %v2659 = vand.u32 %v2413, 4294901760
        %v2660 = vsub.f32 %v2413, %v2659
        %2661 = vmatpush1.msra.mxu0 %v2660
        %2662 = vmatprep.subr.mxu0 0.0
        %2663 = vmatpush1.msra.mxu0 0.0
        %2664 = vmatprep.subr.mxu0 0.0
        %2665 = vmatpush1.msra.mxu0 0.0
        %2666 = vmatprep.subr.mxu0 0.0
        %2667 = vmatpush1.msra.mxu0 0.0
        %2668 = vmatprep.subr.mxu0 0.0
        %2669 = vmatpush1.msra.mxu0 0.0
        %2670 = vmatprep.subr.mxu0 0.0
        %2671 = vmatpush1.msra.mxu0 0.0
        %2672 = vmatprep.subr.mxu0 0.0
        %2673 = vmatpush1.msra.mxu0 0.0
        %2674 = vmatprep.subr.mxu0 0.0
        %2675 = vmatpush1.msra.mxu0 0.0
        %2676 = vmatprep.subr.mxu0 0.0
        %2677 = vmatpush1.msra.mxu0 0.0
        %2678 = vmatprep.subr.mxu0 0.0
        %2679 = vmatpush1.msra.mxu0 0.0
        %2680 = vmatprep.subr.mxu0 0.0
        %2681 = vmatpush1.msra.mxu0 0.0
        %2682 = vmatprep.subr.mxu0 0.0
        %2683 = vmatpush1.msra.mxu0 0.0
        %2684 = vmatprep.subr.mxu0 0.0
        %2685 = vmatpush1.msra.mxu0 0.0
        %2686 = vmatprep.subr.mxu0 0.0
        %2687 = vmatpush1.msra.mxu0 0.0
        %2688 = vmatprep.subr.mxu0 0.0
        %2689 = vmatpush1.msra.mxu0 0.0
        %2690 = vmatprep.subr.mxu0 0.0
        %2691 = vmatpush1.msra.mxu0 0.0
        %2692 = vmatprep.subr.mxu0 0.0
        %2693 = vmatpush1.msra.mxu0 0.0
        %2694 = vmatprep.subr.mxu0 0.0
        %2695 = vmatpush1.msra.mxu0 0.0
        %2696 = vmatprep.subr.mxu0 0.0
        %2697 = vmatpush1.msra.mxu0 0.0
        %2698 = vmatprep.subr.mxu0 0.0
        %2699 = vmatpush1.msra.mxu0 0.0
        %2700 = vmatprep.subr.mxu0 0.0
        %2701 = vmatpush1.msra.mxu0 0.0
        %2702 = vmatprep.subr.mxu0 0.0
        %2703 = vmatpush1.msra.mxu0 0.0
        %2704 = vmatprep.subr.mxu0 0.0
        %2705 = vmatpush1.msra.mxu0 0.0
        %2706 = vmatprep.subr.mxu0 0.0
        %2707 = vmatpush1.msra.mxu0 0.0
        %2708 = vmatprep.subr.mxu0 0.0
        %2709 = vmatpush1.msra.mxu0 0.0
        %2710 = vmatprep.subr.mxu0 0.0
        %2711 = vmatpush1.msra.mxu0 0.0
        %2712 = vmatprep.subr.mxu0 0.0
        %2713 = vmatpush1.msra.mxu0 0.0
        %2714 = vmatprep.subr.mxu0 0.0
        %2715 = vmatpush1.msra.mxu0 0.0
        %2716 = vmatprep.subr.mxu0 0.0
        %2717 = vmatpush1.msra.mxu0 0.0
        %2718 = vmatprep.subr.mxu0 0.0
        %2719 = vmatpush1.msra.mxu0 0.0
        %2720 = vmatprep.subr.mxu0 0.0
        %2721 = vmatpush1.msra.mxu0 0.0
        %2722 = vmatprep.subr.mxu0 0.0
        %2723 = vmatpush1.msra.mxu0 0.0
        %2724 = vmatprep.mubr.f32.mxu0 0.0
        %v2725 = vand.u32 %v2447, 4294901760
        %v2726 = vsub.f32 %v2447, %v2725
        %2727 = vmatmul.mubr.f32.gmra.mrb[0].mxu0 %v2726
        %v2728 = vpop.f32.mrb[0].mxu0
        %v2729 = vadd.f32 %v2637, %v2728
        %v2730 = vpop.f32.mrb[0].mxu0
        %2731 = vmatprep.mubr.f32.mxu0 0.0
        %v2732 = vand.u32 %v2450, 4294901760
        %v2733 = vsub.f32 %v2450, %v2732
        %2734 = vmatmul.mubr.f32.gmra.mrb[0].mxu0 %v2733
        %v2735 = vpop.f32.mrb[0].mxu0
        %v2736 = vadd.f32 %v2643, %v2735
        %v2737 = vpop.f32.mrb[0].mxu0
        %2738 = vmatprep.mubr.f32.mxu0 0.0
        %v2739 = vand.u32 %v2453, 4294901760
        %v2740 = vsub.f32 %v2453, %v2739
        %2741 = vmatmul.mubr.f32.gmra.mrb[0].mxu0 %v2740
        %v2742 = vpop.f32.mrb[0].mxu0
        %v2743 = vadd.f32 %v2649, %v2742
        %v2744 = vpop.f32.mrb[0].mxu0
        %2745 = vmatprep.mubr.f32.mxu0 0.0
        %v2746 = vand.u32 %v2456, 4294901760
        %v2747 = vsub.f32 %v2456, %v2746
        %2748 = vmatmul.mubr.f32.gmra.mrb[0].mxu0 %v2747
        %v2749 = vpop.f32.mrb[0].mxu0
        %v2750 = vadd.f32 %v2655, %v2749
        %v2751 = vpop.f32.mrb[0].mxu0
        %2752 = vdwg.mxu0
        %2753 = vmatprep.subr.mxu0 0.0
        %v2754 = vand.u32 %v2413, 4294901760
        %2755 = vmatpush1.msra.mxu0 %v2754
        %2756 = vmatprep.subr.mxu0 0.0
        %2757 = vmatpush1.msra.mxu0 0.0
        %2758 = vmatprep.subr.mxu0 0.0
        %2759 = vmatpush1.msra.mxu0 0.0
        %2760 = vmatprep.subr.mxu0 0.0
        %2761 = vmatpush1.msra.mxu0 0.0
        %2762 = vmatprep.subr.mxu0 0.0
        %2763 = vmatpush1.msra.mxu0 0.0
        %2764 = vmatprep.subr.mxu0 0.0
        %2765 = vmatpush1.msra.mxu0 0.0
        %2766 = vmatprep.subr.mxu0 0.0
        %2767 = vmatpush1.msra.mxu0 0.0
        %2768 = vmatprep.subr.mxu0 0.0
        %2769 = vmatpush1.msra.mxu0 0.0
        %2770 = vmatprep.subr.mxu0 0.0
        %2771 = vmatpush1.msra.mxu0 0.0
        %2772 = vmatprep.subr.mxu0 0.0
        %2773 = vmatpush1.msra.mxu0 0.0
        %2774 = vmatprep.subr.mxu0 0.0
        %2775 = vmatpush1.msra.mxu0 0.0
        %2776 = vmatprep.subr.mxu0 0.0
        %2777 = vmatpush1.msra.mxu0 0.0
        %2778 = vmatprep.subr.mxu0 0.0
        %2779 = vmatpush1.msra.mxu0 0.0
        %2780 = vmatprep.subr.mxu0 0.0
        %2781 = vmatpush1.msra.mxu0 0.0
        %2782 = vmatprep.subr.mxu0 0.0
        %2783 = vmatpush1.msra.mxu0 0.0
        %2784 = vmatprep.subr.mxu0 0.0
        %2785 = vmatpush1.msra.mxu0 0.0
        %2786 = vmatprep.subr.mxu0 0.0
        %2787 = vmatpush1.msra.mxu0 0.0
        %2788 = vmatprep.subr.mxu0 0.0
        %2789 = vmatpush1.msra.mxu0 0.0
        %2790 = vmatprep.subr.mxu0 0.0
        %2791 = vmatpush1.msra.mxu0 0.0
        %2792 = vmatprep.subr.mxu0 0.0
        %2793 = vmatpush1.msra.mxu0 0.0
        %2794 = vmatprep.subr.mxu0 0.0
        %2795 = vmatpush1.msra.mxu0 0.0
        %2796 = vmatprep.subr.mxu0 0.0
        %2797 = vmatpush1.msra.mxu0 0.0
        %2798 = vmatprep.subr.mxu0 0.0
        %2799 = vmatpush1.msra.mxu0 0.0
        %2800 = vmatprep.subr.mxu0 0.0
        %2801 = vmatpush1.msra.mxu0 0.0
        %2802 = vmatprep.subr.mxu0 0.0
        %2803 = vmatpush1.msra.mxu0 0.0
        %2804 = vmatprep.subr.mxu0 0.0
        %2805 = vmatpush1.msra.mxu0 0.0
        %2806 = vmatprep.subr.mxu0 0.0
        %2807 = vmatpush1.msra.mxu0 0.0
        %2808 = vmatprep.subr.mxu0 0.0
        %2809 = vmatpush1.msra.mxu0 0.0
        %2810 = vmatprep.subr.mxu0 0.0
        %2811 = vmatpush1.msra.mxu0 0.0
        %2812 = vmatprep.subr.mxu0 0.0
        %2813 = vmatpush1.msra.mxu0 0.0
        %2814 = vmatprep.subr.mxu0 0.0
        %2815 = vmatpush1.msra.mxu0 0.0
        %2816 = vmatprep.subr.mxu0 0.0
        %2817 = vmatpush1.msra.mxu0 0.0
        %2818 = vmatprep.mubr.f32.mxu0 0.0
        %v2819 = vand.u32 %v2447, 4294901760
        %v2820 = vsub.f32 %v2447, %v2819
        %v2821 = vand.u32 %v2820, 4294901760
        %2822 = vmatmul.mubr.f32.gmra.mrb[0].mxu0 %v2821
        %v2823 = vpop.f32.mrb[0].mxu0
        %v2824 = vadd.f32 %v2729, %v2823
        %v2825 = vpop.f32.mrb[0].mxu0
        %2826 = vmatprep.mubr.f32.mxu0 0.0
        %v2827 = vand.u32 %v2450, 4294901760
        %v2828 = vsub.f32 %v2450, %v2827
        %v2829 = vand.u32 %v2828, 4294901760
        %2830 = vmatmul.mubr.f32.gmra.mrb[0].mxu0 %v2829
        %v2831 = vpop.f32.mrb[0].mxu0
        %v2832 = vadd.f32 %v2736, %v2831
        %v2833 = vpop.f32.mrb[0].mxu0
        %2834 = vmatprep.mubr.f32.mxu0 0.0
        %v2835 = vand.u32 %v2453, 4294901760
        %v2836 = vsub.f32 %v2453, %v2835
        %v2837 = vand.u32 %v2836, 4294901760
        %2838 = vmatmul.mubr.f32.gmra.mrb[0].mxu0 %v2837
        %v2839 = vpop.f32.mrb[0].mxu0
        %v2840 = vadd.f32 %v2743, %v2839
        %v2841 = vpop.f32.mrb[0].mxu0
        %2842 = vmatprep.mubr.f32.mxu0 0.0
        %v2843 = vand.u32 %v2456, 4294901760
        %v2844 = vsub.f32 %v2456, %v2843
        %v2845 = vand.u32 %v2844, 4294901760
        %2846 = vmatmul.mubr.f32.gmra.mrb[0].mxu0 %v2845
        %v2847 = vpop.f32.mrb[0].mxu0
        %v2848 = vadd.f32 %v2750, %v2847
        %v2849 = vpop.f32.mrb[0].mxu0
        %2850 = vdwg.mxu0
        %2851 = vmatprep.subr.mxu0 0.0
        %v2852 = vand.u32 %v2413, 4294901760
        %v2853 = vsub.f32 %v2413, %v2852
        %v2854 = vand.u32 %v2853, 4294901760
        %2855 = vmatpush1.msra.mxu0 %v2854
        %2856 = vmatprep.subr.mxu0 0.0
        %2857 = vmatpush1.msra.mxu0 0.0
        %2858 = vmatprep.subr.mxu0 0.0
        %2859 = vmatpush1.msra.mxu0 0.0
        %2860 = vmatprep.subr.mxu0 0.0
        %2861 = vmatpush1.msra.mxu0 0.0
        %2862 = vmatprep.subr.mxu0 0.0
        %2863 = vmatpush1.msra.mxu0 0.0
        %2864 = vmatprep.subr.mxu0 0.0
        %2865 = vmatpush1.msra.mxu0 0.0
        %2866 = vmatprep.subr.mxu0 0.0
        %2867 = vmatpush1.msra.mxu0 0.0
        %2868 = vmatprep.subr.mxu0 0.0
        %2869 = vmatpush1.msra.mxu0 0.0
        %2870 = vmatprep.subr.mxu0 0.0
        %2871 = vmatpush1.msra.mxu0 0.0
        %2872 = vmatprep.subr.mxu0 0.0
        %2873 = vmatpush1.msra.mxu0 0.0
        %2874 = vmatprep.subr.mxu0 0.0
        %2875 = vmatpush1.msra.mxu0 0.0
        %2876 = vmatprep.subr.mxu0 0.0
        %2877 = vmatpush1.msra.mxu0 0.0
        %2878 = vmatprep.subr.mxu0 0.0
        %2879 = vmatpush1.msra.mxu0 0.0
        %2880 = vmatprep.subr.mxu0 0.0
        %2881 = vmatpush1.msra.mxu0 0.0
        %2882 = vmatprep.subr.mxu0 0.0
        %2883 = vmatpush1.msra.mxu0 0.0
        %2884 = vmatprep.subr.mxu0 0.0
        %2885 = vmatpush1.msra.mxu0 0.0
        %2886 = vmatprep.subr.mxu0 0.0
        %2887 = vmatpush1.msra.mxu0 0.0
        %2888 = vmatprep.subr.mxu0 0.0
        %2889 = vmatpush1.msra.mxu0 0.0
        %2890 = vmatprep.subr.mxu0 0.0
        %2891 = vmatpush1.msra.mxu0 0.0
        %2892 = vmatprep.subr.mxu0 0.0
        %2893 = vmatpush1.msra.mxu0 0.0
        %2894 = vmatprep.subr.mxu0 0.0
        %2895 = vmatpush1.msra.mxu0 0.0
        %2896 = vmatprep.subr.mxu0 0.0
        %2897 = vmatpush1.msra.mxu0 0.0
        %2898 = vmatprep.subr.mxu0 0.0
        %2899 = vmatpush1.msra.mxu0 0.0
        %2900 = vmatprep.subr.mxu0 0.0
        %2901 = vmatpush1.msra.mxu0 0.0
        %2902 = vmatprep.subr.mxu0 0.0
        %2903 = vmatpush1.msra.mxu0 0.0
        %2904 = vmatprep.subr.mxu0 0.0
        %2905 = vmatpush1.msra.mxu0 0.0
        %2906 = vmatprep.subr.mxu0 0.0
        %2907 = vmatpush1.msra.mxu0 0.0
        %2908 = vmatprep.subr.mxu0 0.0
        %2909 = vmatpush1.msra.mxu0 0.0
        %2910 = vmatprep.subr.mxu0 0.0
        %2911 = vmatpush1.msra.mxu0 0.0
        %2912 = vmatprep.subr.mxu0 0.0
        %2913 = vmatpush1.msra.mxu0 0.0
        %2914 = vmatprep.subr.mxu0 0.0
        %2915 = vmatpush1.msra.mxu0 0.0
        %2916 = vmatprep.subr.mxu0 0.0
        %2917 = vmatpush1.msra.mxu0 0.0
        %2918 = vmatprep.mubr.f32.mxu0 0.0
        %v2919 = vand.u32 %v2447, 4294901760
        %2920 = vmatmul.mubr.f32.gmra.mrb[0].mxu0 %v2919
        %v2921 = vpop.f32.mrb[0].mxu0
        %v2922 = vadd.f32 %v2824, %v2921
        %v2923 = vpop.f32.mrb[0].mxu0
        %2924 = vmatprep.mubr.f32.mxu0 0.0
        %v2925 = vand.u32 %v2450, 4294901760
        %2926 = vmatmul.mubr.f32.gmra.mrb[0].mxu0 %v2925
        %v2927 = vpop.f32.mrb[0].mxu0
        %v2928 = vadd.f32 %v2832, %v2927
        %v2929 = vpop.f32.mrb[0].mxu0
        %2930 = vmatprep.mubr.f32.mxu0 0.0
        %v2931 = vand.u32 %v2453, 4294901760
        %2932 = vmatmul.mubr.f32.gmra.mrb[0].mxu0 %v2931
        %v2933 = vpop.f32.mrb[0].mxu0
        %v2934 = vadd.f32 %v2840, %v2933
        %v2935 = vpop.f32.mrb[0].mxu0
        %2936 = vmatprep.mubr.f32.mxu0 0.0
        %v2937 = vand.u32 %v2456, 4294901760
        %2938 = vmatmul.mubr.f32.gmra.mrb[0].mxu0 %v2937
        %v2939 = vpop.f32.mrb[0].mxu0
        %v2940 = vadd.f32 %v2848, %v2939
        %v2941 = vpop.f32.mrb[0].mxu0
        %2942 = vdwg.mxu0
        %2943 = vmatprep.subr.mxu0 0.0
        %v2944 = vand.u32 %v2413, 4294901760
        %2945 = vmatpush1.msra.mxu0 %v2944
        %2946 = vmatprep.subr.mxu0 0.0
        %2947 = vmatpush1.msra.mxu0 0.0
        %2948 = vmatprep.subr.mxu0 0.0
        %2949 = vmatpush1.msra.mxu0 0.0
        %2950 = vmatprep.subr.mxu0 0.0
        %2951 = vmatpush1.msra.mxu0 0.0
        %2952 = vmatprep.subr.mxu0 0.0
        %2953 = vmatpush1.msra.mxu0 0.0
        %2954 = vmatprep.subr.mxu0 0.0
        %2955 = vmatpush1.msra.mxu0 0.0
        %2956 = vmatprep.subr.mxu0 0.0
        %2957 = vmatpush1.msra.mxu0 0.0
        %2958 = vmatprep.subr.mxu0 0.0
        %2959 = vmatpush1.msra.mxu0 0.0
        %2960 = vmatprep.subr.mxu0 0.0
        %2961 = vmatpush1.msra.mxu0 0.0
        %2962 = vmatprep.subr.mxu0 0.0
        %2963 = vmatpush1.msra.mxu0 0.0
        %2964 = vmatprep.subr.mxu0 0.0
        %2965 = vmatpush1.msra.mxu0 0.0
        %2966 = vmatprep.subr.mxu0 0.0
        %2967 = vmatpush1.msra.mxu0 0.0
        %2968 = vmatprep.subr.mxu0 0.0
        %2969 = vmatpush1.msra.mxu0 0.0
        %2970 = vmatprep.subr.mxu0 0.0
        %2971 = vmatpush1.msra.mxu0 0.0
        %2972 = vmatprep.subr.mxu0 0.0
        %2973 = vmatpush1.msra.mxu0 0.0
        %2974 = vmatprep.subr.mxu0 0.0
        %2975 = vmatpush1.msra.mxu0 0.0
        %2976 = vmatprep.subr.mxu0 0.0
        %2977 = vmatpush1.msra.mxu0 0.0
        %2978 = vmatprep.subr.mxu0 0.0
        %2979 = vmatpush1.msra.mxu0 0.0
        %2980 = vmatprep.subr.mxu0 0.0
        %2981 = vmatpush1.msra.mxu0 0.0
        %2982 = vmatprep.subr.mxu0 0.0
        %2983 = vmatpush1.msra.mxu0 0.0
        %2984 = vmatprep.subr.mxu0 0.0
        %2985 = vmatpush1.msra.mxu0 0.0
        %2986 = vmatprep.subr.mxu0 0.0
        %2987 = vmatpush1.msra.mxu0 0.0
        %2988 = vmatprep.subr.mxu0 0.0
        %2989 = vmatpush1.msra.mxu0 0.0
        %2990 = vmatprep.subr.mxu0 0.0
        %2991 = vmatpush1.msra.mxu0 0.0
        %2992 = vmatprep.subr.mxu0 0.0
        %2993 = vmatpush1.msra.mxu0 0.0
        %2994 = vmatprep.subr.mxu0 0.0
        %2995 = vmatpush1.msra.mxu0 0.0
        %2996 = vmatprep.subr.mxu0 0.0
        %2997 = vmatpush1.msra.mxu0 0.0
        %2998 = vmatprep.subr.mxu0 0.0
        %2999 = vmatpush1.msra.mxu0 0.0
        %3000 = vmatprep.subr.mxu0 0.0
        %3001 = vmatpush1.msra.mxu0 0.0
        %3002 = vmatprep.subr.mxu0 0.0
        %3003 = vmatpush1.msra.mxu0 0.0
        %3004 = vmatprep.subr.mxu0 0.0
        %3005 = vmatpush1.msra.mxu0 0.0
        %3006 = vmatprep.subr.mxu0 0.0
        %3007 = vmatpush1.msra.mxu0 0.0
        %3008 = vmatprep.mubr.f32.mxu0 0.0
        %v3009 = vand.u32 %v2447, 4294901760
        %3010 = vmatmul.mubr.f32.gmra.mrb[0].mxu0 %v3009
        %v3011 = vpop.f32.mrb[0].mxu0
        %v3012 = vadd.f32 %v2922, %v3011
        %v3013 = vpop.f32.mrb[0].mxu0
        %3014 = vmatprep.mubr.f32.mxu0 0.0
        %v3015 = vand.u32 %v2450, 4294901760
        %3016 = vmatmul.mubr.f32.gmra.mrb[0].mxu0 %v3015
        %v3017 = vpop.f32.mrb[0].mxu0
        %v3018 = vadd.f32 %v2928, %v3017
        %v3019 = vpop.f32.mrb[0].mxu0
        %3020 = vmatprep.mubr.f32.mxu0 0.0
        %v3021 = vand.u32 %v2453, 4294901760
        %3022 = vmatmul.mubr.f32.gmra.mrb[0].mxu0 %v3021
        %v3023 = vpop.f32.mrb[0].mxu0
        %v3024 = vadd.f32 %v2934, %v3023
        %v3025 = vpop.f32.mrb[0].mxu0
        %3026 = vmatprep.mubr.f32.mxu0 0.0
        %v3027 = vand.u32 %v2456, 4294901760
        %3028 = vmatmul.mubr.f32.gmra.mrb[0].mxu0 %v3027
        %v3029 = vpop.f32.mrb[0].mxu0
        %v3030 = vadd.f32 %v2940, %v3029
        %v3031 = vpop.f32.mrb[0].mxu0
        %3032 = vdwg.mxu0
        %s3033 = scalar_lea.vmem [#allocation2], 32
        %v3034 = vld [vmem:[%s3033] sm:$0xff]
        %v3035 = vld [vmem:[%s3033 + $0x8] sm:$0xff]
        %v3036 = vld [vmem:[%s3033 + $0x10] sm:$0xff]
        %v3037 = vld [vmem:[%s3033 + $0x18] sm:$0xff]
        %v3039 = vlaneseq
        %v3040 = vshrl.u32 %v3039, 7
        %v3041 = vsub.s32 0, %v3040
        %v3042 = vrot.slane %v2395, %v3041
        %3043 = vset.pattern.permute.xlu0 0
        %3044 = vperm.xlu0 %3043, %v3042
        %v3045 = vpop.permute.xlu0 %3044
        %v3047 = vmul.f32 %v3034, %v3045
        %v3048 = vmul.f32 %v3035, %v3045
        %v3049 = vmul.f32 %v3036, %v3045
        %v3050 = vmul.f32 %v3037, %v3045
        %v3051 = vadd.f32 %v3047, %v3012
        %v3052 = vadd.f32 %v3048, %v3018
        %v3053 = vadd.f32 %v3049, %v3024
        %v3054 = vadd.f32 %v3050, %v3030
        %3055 = vst.msk [vmem:[%s3033] sm:$0xff] %vm1907, %v3051
        %3056 = vst.msk [vmem:[%s3033 + $0x8] sm:$0xff] %vm1907, %v3052
        %3057 = vst.msk [vmem:[%s3033 + $0x10] sm:$0xff] %vm1907, %v3053
        %3058 = vst.msk [vmem:[%s3033 + $0x18] sm:$0xff] %vm1907, %v3054
        %s3059 = scalar_lea.vmem [#allocation3], 1
        %v3060 = vld [vmem:[%s3059] sm:$0x1]
        %v3061 = vsel %vm1907, %v2413, 0.0
        %v3062 = vrot.slane %v3061, 4
        %v3063 = vadd.f32 %v3061, %v3062
        %v3064 = vrot.slane %v3063, 2
        %v3065 = vadd.f32 %v3063, %v3064
        %v3066 = vrot.slane %v3065, 1
        %v3067 = vadd.f32 %v3065, %v3066
        %v3068 = vadd.f32 %v3060, %v3067
        %3069 = vst.msk [vmem:[%s3059] sm:$0x1] %vm1921, %v3068
        %3070 = vrot.lane.b32.xlu0 %v775, 112
        %v3071 = vpop.permute.xlu0 %3070
        %v3072 = vsel %vm779, %v3071, 0
        %3074 = vmatprep.subr.mxu0 0.0
        %v3075 = vand.u32 %v778, 4294901760
        %3076 = vmatpush1.msra.mxu0 %v3075
        %3077 = vmatprep.subr.mxu0 0.0
        %3078 = vmatpush1.msra.mxu0 0.0
        %3079 = vmatprep.subr.mxu0 0.0
        %3080 = vmatpush1.msra.mxu0 0.0
        %3081 = vmatprep.subr.mxu0 0.0
        %3082 = vmatpush1.msra.mxu0 0.0
        %3083 = vmatprep.subr.mxu0 0.0
        %3084 = vmatpush1.msra.mxu0 0.0
        %3085 = vmatprep.subr.mxu0 0.0
        %3086 = vmatpush1.msra.mxu0 0.0
        %3087 = vmatprep.subr.mxu0 0.0
        %3088 = vmatpush1.msra.mxu0 0.0
        %3089 = vmatprep.subr.mxu0 0.0
        %3090 = vmatpush1.msra.mxu0 0.0
        %3091 = vmatprep.subr.mxu0 0.0
        %3092 = vmatpush1.msra.mxu0 0.0
        %3093 = vmatprep.subr.mxu0 0.0
        %3094 = vmatpush1.msra.mxu0 0.0
        %3095 = vmatprep.subr.mxu0 0.0
        %3096 = vmatpush1.msra.mxu0 0.0
        %3097 = vmatprep.subr.mxu0 0.0
        %3098 = vmatpush1.msra.mxu0 0.0
        %3099 = vmatprep.subr.mxu0 0.0
        %3100 = vmatpush1.msra.mxu0 0.0
        %3101 = vmatprep.subr.mxu0 0.0
        %3102 = vmatpush1.msra.mxu0 0.0
        %3103 = vmatprep.subr.mxu0 0.0
        %3104 = vmatpush1.msra.mxu0 0.0
        %3105 = vmatprep.subr.mxu0 0.0
        %3106 = vmatpush1.msra.mxu0 0.0
        %3107 = vmatprep.subr.mxu0 0.0
        %3108 = vmatpush1.msra.mxu0 0.0
        %3109 = vmatprep.subr.mxu0 0.0
        %3110 = vmatpush1.msra.mxu0 0.0
        %3111 = vmatprep.subr.mxu0 0.0
        %3112 = vmatpush1.msra.mxu0 0.0
        %3113 = vmatprep.subr.mxu0 0.0
        %3114 = vmatpush1.msra.mxu0 0.0
        %3115 = vmatprep.subr.mxu0 0.0
        %3116 = vmatpush1.msra.mxu0 0.0
        %3117 = vmatprep.subr.mxu0 0.0
        %3118 = vmatpush1.msra.mxu0 0.0
        %3119 = vmatprep.subr.mxu0 0.0
        %3120 = vmatpush1.msra.mxu0 0.0
        %3121 = vmatprep.subr.mxu0 0.0
        %3122 = vmatpush1.msra.mxu0 0.0
        %3123 = vmatprep.subr.mxu0 0.0
        %3124 = vmatpush1.msra.mxu0 0.0
        %3125 = vmatprep.subr.mxu0 0.0
        %3126 = vmatpush1.msra.mxu0 0.0
        %3127 = vmatprep.subr.mxu0 0.0
        %3128 = vmatpush1.msra.mxu0 0.0
        %3129 = vmatprep.subr.mxu0 0.0
        %3130 = vmatpush1.msra.mxu0 0.0
        %3131 = vmatprep.subr.mxu0 0.0
        %3132 = vmatpush1.msra.mxu0 0.0
        %3133 = vmatprep.subr.mxu0 0.0
        %3134 = vmatpush1.msra.mxu0 0.0
        %3135 = vmatprep.subr.mxu0 0.0
        %3136 = vmatpush1.msra.mxu0 0.0
        %3137 = vmatprep.subr.mxu0 0.0
        %3138 = vmatpush1.msra.mxu0 0.0
        %3139 = vmatprep.mubr.f32.mxu0 0.0
        %v3140 = vand.u32 %v3072, 4294901760
        %v3141 = vsub.f32 %v3072, %v3140
        %v3142 = vand.u32 %v3141, 4294901760
        %v3143 = vsub.f32 %v3141, %v3142
        %v3144 = vand.u32 %v3143, 4294901760
        %3145 = vmatmul.mubr.f32.gmra.mrb[0].mxu0 %v3144
        %v3146 = vpop.f32.mrb[0].mxu0
        %v3147 = vadd.f32 0.0, %v3146
        %v3148 = vpop.f32.mrb[0].mxu0
        %3149 = vdwg.mxu0
        %3150 = vmatprep.subr.mxu0 0.0
        %v3151 = vand.u32 %v778, 4294901760
        %v3152 = vsub.f32 %v778, %v3151
        %v3153 = vand.u32 %v3152, 4294901760
        %v3154 = vsub.f32 %v3152, %v3153
        %v3155 = vand.u32 %v3154, 4294901760
        %3156 = vmatpush1.msra.mxu0 %v3155
        %3157 = vmatprep.subr.mxu0 0.0
        %3158 = vmatpush1.msra.mxu0 0.0
        %3159 = vmatprep.subr.mxu0 0.0
        %3160 = vmatpush1.msra.mxu0 0.0
        %3161 = vmatprep.subr.mxu0 0.0
        %3162 = vmatpush1.msra.mxu0 0.0
        %3163 = vmatprep.subr.mxu0 0.0
        %3164 = vmatpush1.msra.mxu0 0.0
        %3165 = vmatprep.subr.mxu0 0.0
        %3166 = vmatpush1.msra.mxu0 0.0
        %3167 = vmatprep.subr.mxu0 0.0
        %3168 = vmatpush1.msra.mxu0 0.0
        %3169 = vmatprep.subr.mxu0 0.0
        %3170 = vmatpush1.msra.mxu0 0.0
        %3171 = vmatprep.subr.mxu0 0.0
        %3172 = vmatpush1.msra.mxu0 0.0
        %3173 = vmatprep.subr.mxu0 0.0
        %3174 = vmatpush1.msra.mxu0 0.0
        %3175 = vmatprep.subr.mxu0 0.0
        %3176 = vmatpush1.msra.mxu0 0.0
        %3177 = vmatprep.subr.mxu0 0.0
        %3178 = vmatpush1.msra.mxu0 0.0
        %3179 = vmatprep.subr.mxu0 0.0
        %3180 = vmatpush1.msra.mxu0 0.0
        %3181 = vmatprep.subr.mxu0 0.0
        %3182 = vmatpush1.msra.mxu0 0.0
        %3183 = vmatprep.subr.mxu0 0.0
        %3184 = vmatpush1.msra.mxu0 0.0
        %3185 = vmatprep.subr.mxu0 0.0
        %3186 = vmatpush1.msra.mxu0 0.0
        %3187 = vmatprep.subr.mxu0 0.0
        %3188 = vmatpush1.msra.mxu0 0.0
        %3189 = vmatprep.subr.mxu0 0.0
        %3190 = vmatpush1.msra.mxu0 0.0
        %3191 = vmatprep.subr.mxu0 0.0
        %3192 = vmatpush1.msra.mxu0 0.0
        %3193 = vmatprep.subr.mxu0 0.0
        %3194 = vmatpush1.msra.mxu0 0.0
        %3195 = vmatprep.subr.mxu0 0.0
        %3196 = vmatpush1.msra.mxu0 0.0
        %3197 = vmatprep.subr.mxu0 0.0
        %3198 = vmatpush1.msra.mxu0 0.0
        %3199 = vmatprep.subr.mxu0 0.0
        %3200 = vmatpush1.msra.mxu0 0.0
        %3201 = vmatprep.subr.mxu0 0.0
        %3202 = vmatpush1.msra.mxu0 0.0
        %3203 = vmatprep.subr.mxu0 0.0
        %3204 = vmatpush1.msra.mxu0 0.0
        %3205 = vmatprep.subr.mxu0 0.0
        %3206 = vmatpush1.msra.mxu0 0.0
        %3207 = vmatprep.subr.mxu0 0.0
        %3208 = vmatpush1.msra.mxu0 0.0
        %3209 = vmatprep.subr.mxu0 0.0
        %3210 = vmatpush1.msra.mxu0 0.0
        %3211 = vmatprep.subr.mxu0 0.0
        %3212 = vmatpush1.msra.mxu0 0.0
        %3213 = vmatprep.subr.mxu0 0.0
        %3214 = vmatpush1.msra.mxu0 0.0
        %3215 = vmatprep.subr.mxu0 0.0
        %3216 = vmatpush1.msra.mxu0 0.0
        %3217 = vmatprep.subr.mxu0 0.0
        %3218 = vmatpush1.msra.mxu0 0.0
        %3219 = vmatprep.mubr.f32.mxu0 0.0
        %v3220 = vand.u32 %v3072, 4294901760
        %3221 = vmatmul.mubr.f32.gmra.mrb[0].mxu0 %v3220
        %v3222 = vpop.f32.mrb[0].mxu0
        %v3223 = vadd.f32 %v3147, %v3222
        %v3224 = vpop.f32.mrb[0].mxu0
        %3225 = vdwg.mxu0
        %3226 = vmatprep.subr.mxu0 0.0
        %v3227 = vand.u32 %v778, 4294901760
        %v3228 = vsub.f32 %v778, %v3227
        %3229 = vmatpush1.msra.mxu0 %v3228
        %3230 = vmatprep.subr.mxu0 0.0
        %3231 = vmatpush1.msra.mxu0 0.0
        %3232 = vmatprep.subr.mxu0 0.0
        %3233 = vmatpush1.msra.mxu0 0.0
        %3234 = vmatprep.subr.mxu0 0.0
        %3235 = vmatpush1.msra.mxu0 0.0
        %3236 = vmatprep.subr.mxu0 0.0
        %3237 = vmatpush1.msra.mxu0 0.0
        %3238 = vmatprep.subr.mxu0 0.0
        %3239 = vmatpush1.msra.mxu0 0.0
        %3240 = vmatprep.subr.mxu0 0.0
        %3241 = vmatpush1.msra.mxu0 0.0
        %3242 = vmatprep.subr.mxu0 0.0
        %3243 = vmatpush1.msra.mxu0 0.0
        %3244 = vmatprep.subr.mxu0 0.0
        %3245 = vmatpush1.msra.mxu0 0.0
        %3246 = vmatprep.subr.mxu0 0.0
        %3247 = vmatpush1.msra.mxu0 0.0
        %3248 = vmatprep.subr.mxu0 0.0
        %3249 = vmatpush1.msra.mxu0 0.0
        %3250 = vmatprep.subr.mxu0 0.0
        %3251 = vmatpush1.msra.mxu0 0.0
        %3252 = vmatprep.subr.mxu0 0.0
        %3253 = vmatpush1.msra.mxu0 0.0
        %3254 = vmatprep.subr.mxu0 0.0
        %3255 = vmatpush1.msra.mxu0 0.0
        %3256 = vmatprep.subr.mxu0 0.0
        %3257 = vmatpush1.msra.mxu0 0.0
        %3258 = vmatprep.subr.mxu0 0.0
        %3259 = vmatpush1.msra.mxu0 0.0
        %3260 = vmatprep.subr.mxu0 0.0
        %3261 = vmatpush1.msra.mxu0 0.0
        %3262 = vmatprep.subr.mxu0 0.0
        %3263 = vmatpush1.msra.mxu0 0.0
        %3264 = vmatprep.subr.mxu0 0.0
        %3265 = vmatpush1.msra.mxu0 0.0
        %3266 = vmatprep.subr.mxu0 0.0
        %3267 = vmatpush1.msra.mxu0 0.0
        %3268 = vmatprep.subr.mxu0 0.0
        %3269 = vmatpush1.msra.mxu0 0.0
        %3270 = vmatprep.subr.mxu0 0.0
        %3271 = vmatpush1.msra.mxu0 0.0
        %3272 = vmatprep.subr.mxu0 0.0
        %3273 = vmatpush1.msra.mxu0 0.0
        %3274 = vmatprep.subr.mxu0 0.0
        %3275 = vmatpush1.msra.mxu0 0.0
        %3276 = vmatprep.subr.mxu0 0.0
        %3277 = vmatpush1.msra.mxu0 0.0
        %3278 = vmatprep.subr.mxu0 0.0
        %3279 = vmatpush1.msra.mxu0 0.0
        %3280 = vmatprep.subr.mxu0 0.0
        %3281 = vmatpush1.msra.mxu0 0.0
        %3282 = vmatprep.subr.mxu0 0.0
        %3283 = vmatpush1.msra.mxu0 0.0
        %3284 = vmatprep.subr.mxu0 0.0
        %3285 = vmatpush1.msra.mxu0 0.0
        %3286 = vmatprep.subr.mxu0 0.0
        %3287 = vmatpush1.msra.mxu0 0.0
        %3288 = vmatprep.subr.mxu0 0.0
        %3289 = vmatpush1.msra.mxu0 0.0
        %3290 = vmatprep.subr.mxu0 0.0
        %3291 = vmatpush1.msra.mxu0 0.0
        %3292 = vmatprep.mubr.f32.mxu0 0.0
        %v3293 = vand.u32 %v3072, 4294901760
        %v3294 = vsub.f32 %v3072, %v3293
        %3295 = vmatmul.mubr.f32.gmra.mrb[0].mxu0 %v3294
        %v3296 = vpop.f32.mrb[0].mxu0
        %v3297 = vadd.f32 %v3223, %v3296
        %v3298 = vpop.f32.mrb[0].mxu0
        %3299 = vdwg.mxu0
        %3300 = vmatprep.subr.mxu0 0.0
        %v3301 = vand.u32 %v778, 4294901760
        %3302 = vmatpush1.msra.mxu0 %v3301
        %3303 = vmatprep.subr.mxu0 0.0
        %3304 = vmatpush1.msra.mxu0 0.0
        %3305 = vmatprep.subr.mxu0 0.0
        %3306 = vmatpush1.msra.mxu0 0.0
        %3307 = vmatprep.subr.mxu0 0.0
        %3308 = vmatpush1.msra.mxu0 0.0
        %3309 = vmatprep.subr.mxu0 0.0
        %3310 = vmatpush1.msra.mxu0 0.0
        %3311 = vmatprep.subr.mxu0 0.0
        %3312 = vmatpush1.msra.mxu0 0.0
        %3313 = vmatprep.subr.mxu0 0.0
        %3314 = vmatpush1.msra.mxu0 0.0
        %3315 = vmatprep.subr.mxu0 0.0
        %3316 = vmatpush1.msra.mxu0 0.0
        %3317 = vmatprep.subr.mxu0 0.0
        %3318 = vmatpush1.msra.mxu0 0.0
        %3319 = vmatprep.subr.mxu0 0.0
        %3320 = vmatpush1.msra.mxu0 0.0
        %3321 = vmatprep.subr.mxu0 0.0
        %3322 = vmatpush1.msra.mxu0 0.0
        %3323 = vmatprep.subr.mxu0 0.0
        %3324 = vmatpush1.msra.mxu0 0.0
        %3325 = vmatprep.subr.mxu0 0.0
        %3326 = vmatpush1.msra.mxu0 0.0
        %3327 = vmatprep.subr.mxu0 0.0
        %3328 = vmatpush1.msra.mxu0 0.0
        %3329 = vmatprep.subr.mxu0 0.0
        %3330 = vmatpush1.msra.mxu0 0.0
        %3331 = vmatprep.subr.mxu0 0.0
        %3332 = vmatpush1.msra.mxu0 0.0
        %3333 = vmatprep.subr.mxu0 0.0
        %3334 = vmatpush1.msra.mxu0 0.0
        %3335 = vmatprep.subr.mxu0 0.0
        %3336 = vmatpush1.msra.mxu0 0.0
        %3337 = vmatprep.subr.mxu0 0.0
        %3338 = vmatpush1.msra.mxu0 0.0
        %3339 = vmatprep.subr.mxu0 0.0
        %3340 = vmatpush1.msra.mxu0 0.0
        %3341 = vmatprep.subr.mxu0 0.0
        %3342 = vmatpush1.msra.mxu0 0.0
        %3343 = vmatprep.subr.mxu0 0.0
        %3344 = vmatpush1.msra.mxu0 0.0
        %3345 = vmatprep.subr.mxu0 0.0
        %3346 = vmatpush1.msra.mxu0 0.0
        %3347 = vmatprep.subr.mxu0 0.0
        %3348 = vmatpush1.msra.mxu0 0.0
        %3349 = vmatprep.subr.mxu0 0.0
        %3350 = vmatpush1.msra.mxu0 0.0
        %3351 = vmatprep.subr.mxu0 0.0
        %3352 = vmatpush1.msra.mxu0 0.0
        %3353 = vmatprep.subr.mxu0 0.0
        %3354 = vmatpush1.msra.mxu0 0.0
        %3355 = vmatprep.subr.mxu0 0.0
        %3356 = vmatpush1.msra.mxu0 0.0
        %3357 = vmatprep.subr.mxu0 0.0
        %3358 = vmatpush1.msra.mxu0 0.0
        %3359 = vmatprep.subr.mxu0 0.0
        %3360 = vmatpush1.msra.mxu0 0.0
        %3361 = vmatprep.subr.mxu0 0.0
        %3362 = vmatpush1.msra.mxu0 0.0
        %3363 = vmatprep.subr.mxu0 0.0
        %3364 = vmatpush1.msra.mxu0 0.0
        %3365 = vmatprep.mubr.f32.mxu0 0.0
        %v3366 = vand.u32 %v3072, 4294901760
        %v3367 = vsub.f32 %v3072, %v3366
        %v3368 = vand.u32 %v3367, 4294901760
        %3369 = vmatmul.mubr.f32.gmra.mrb[0].mxu0 %v3368
        %v3370 = vpop.f32.mrb[0].mxu0
        %v3371 = vadd.f32 %v3297, %v3370
        %v3372 = vpop.f32.mrb[0].mxu0
        %3373 = vdwg.mxu0
        %3374 = vmatprep.subr.mxu0 0.0
        %v3375 = vand.u32 %v778, 4294901760
        %v3376 = vsub.f32 %v778, %v3375
        %v3377 = vand.u32 %v3376, 4294901760
        %3378 = vmatpush1.msra.mxu0 %v3377
        %3379 = vmatprep.subr.mxu0 0.0
        %3380 = vmatpush1.msra.mxu0 0.0
        %3381 = vmatprep.subr.mxu0 0.0
        %3382 = vmatpush1.msra.mxu0 0.0
        %3383 = vmatprep.subr.mxu0 0.0
        %3384 = vmatpush1.msra.mxu0 0.0
        %3385 = vmatprep.subr.mxu0 0.0
        %3386 = vmatpush1.msra.mxu0 0.0
        %3387 = vmatprep.subr.mxu0 0.0
        %3388 = vmatpush1.msra.mxu0 0.0
        %3389 = vmatprep.subr.mxu0 0.0
        %3390 = vmatpush1.msra.mxu0 0.0
        %3391 = vmatprep.subr.mxu0 0.0
        %3392 = vmatpush1.msra.mxu0 0.0
        %3393 = vmatprep.subr.mxu0 0.0
        %3394 = vmatpush1.msra.mxu0 0.0
        %3395 = vmatprep.subr.mxu0 0.0
        %3396 = vmatpush1.msra.mxu0 0.0
        %3397 = vmatprep.subr.mxu0 0.0
        %3398 = vmatpush1.msra.mxu0 0.0
        %3399 = vmatprep.subr.mxu0 0.0
        %3400 = vmatpush1.msra.mxu0 0.0
        %3401 = vmatprep.subr.mxu0 0.0
        %3402 = vmatpush1.msra.mxu0 0.0
        %3403 = vmatprep.subr.mxu0 0.0
        %3404 = vmatpush1.msra.mxu0 0.0
        %3405 = vmatprep.subr.mxu0 0.0
        %3406 = vmatpush1.msra.mxu0 0.0
        %3407 = vmatprep.subr.mxu0 0.0
        %3408 = vmatpush1.msra.mxu0 0.0
        %3409 = vmatprep.subr.mxu0 0.0
        %3410 = vmatpush1.msra.mxu0 0.0
        %3411 = vmatprep.subr.mxu0 0.0
        %3412 = vmatpush1.msra.mxu0 0.0
        %3413 = vmatprep.subr.mxu0 0.0
        %3414 = vmatpush1.msra.mxu0 0.0
        %3415 = vmatprep.subr.mxu0 0.0
        %3416 = vmatpush1.msra.mxu0 0.0
        %3417 = vmatprep.subr.mxu0 0.0
        %3418 = vmatpush1.msra.mxu0 0.0
        %3419 = vmatprep.subr.mxu0 0.0
        %3420 = vmatpush1.msra.mxu0 0.0
        %3421 = vmatprep.subr.mxu0 0.0
        %3422 = vmatpush1.msra.mxu0 0.0
        %3423 = vmatprep.subr.mxu0 0.0
        %3424 = vmatpush1.msra.mxu0 0.0
        %3425 = vmatprep.subr.mxu0 0.0
        %3426 = vmatpush1.msra.mxu0 0.0
        %3427 = vmatprep.subr.mxu0 0.0
        %3428 = vmatpush1.msra.mxu0 0.0
        %3429 = vmatprep.subr.mxu0 0.0
        %3430 = vmatpush1.msra.mxu0 0.0
        %3431 = vmatprep.subr.mxu0 0.0
        %3432 = vmatpush1.msra.mxu0 0.0
        %3433 = vmatprep.subr.mxu0 0.0
        %3434 = vmatpush1.msra.mxu0 0.0
        %3435 = vmatprep.subr.mxu0 0.0
        %3436 = vmatpush1.msra.mxu0 0.0
        %3437 = vmatprep.subr.mxu0 0.0
        %3438 = vmatpush1.msra.mxu0 0.0
        %3439 = vmatprep.subr.mxu0 0.0
        %3440 = vmatpush1.msra.mxu0 0.0
        %3441 = vmatprep.mubr.f32.mxu0 0.0
        %v3442 = vand.u32 %v3072, 4294901760
        %3443 = vmatmul.mubr.f32.gmra.mrb[0].mxu0 %v3442
        %v3444 = vpop.f32.mrb[0].mxu0
        %v3445 = vadd.f32 %v3371, %v3444
        %v3446 = vpop.f32.mrb[0].mxu0
        %3447 = vdwg.mxu0
        %3448 = vmatprep.subr.mxu0 0.0
        %v3449 = vand.u32 %v778, 4294901760
        %3450 = vmatpush1.msra.mxu0 %v3449
        %3451 = vmatprep.subr.mxu0 0.0
        %3452 = vmatpush1.msra.mxu0 0.0
        %3453 = vmatprep.subr.mxu0 0.0
        %3454 = vmatpush1.msra.mxu0 0.0
        %3455 = vmatprep.subr.mxu0 0.0
        %3456 = vmatpush1.msra.mxu0 0.0
        %3457 = vmatprep.subr.mxu0 0.0
        %3458 = vmatpush1.msra.mxu0 0.0
        %3459 = vmatprep.subr.mxu0 0.0
        %3460 = vmatpush1.msra.mxu0 0.0
        %3461 = vmatprep.subr.mxu0 0.0
        %3462 = vmatpush1.msra.mxu0 0.0
        %3463 = vmatprep.subr.mxu0 0.0
        %3464 = vmatpush1.msra.mxu0 0.0
        %3465 = vmatprep.subr.mxu0 0.0
        %3466 = vmatpush1.msra.mxu0 0.0
        %3467 = vmatprep.subr.mxu0 0.0
        %3468 = vmatpush1.msra.mxu0 0.0
        %3469 = vmatprep.subr.mxu0 0.0
        %3470 = vmatpush1.msra.mxu0 0.0
        %3471 = vmatprep.subr.mxu0 0.0
        %3472 = vmatpush1.msra.mxu0 0.0
        %3473 = vmatprep.subr.mxu0 0.0
        %3474 = vmatpush1.msra.mxu0 0.0
        %3475 = vmatprep.subr.mxu0 0.0
        %3476 = vmatpush1.msra.mxu0 0.0
        %3477 = vmatprep.subr.mxu0 0.0
        %3478 = vmatpush1.msra.mxu0 0.0
        %3479 = vmatprep.subr.mxu0 0.0
        %3480 = vmatpush1.msra.mxu0 0.0
        %3481 = vmatprep.subr.mxu0 0.0
        %3482 = vmatpush1.msra.mxu0 0.0
        %3483 = vmatprep.subr.mxu0 0.0
        %3484 = vmatpush1.msra.mxu0 0.0
        %3485 = vmatprep.subr.mxu0 0.0
        %3486 = vmatpush1.msra.mxu0 0.0
        %3487 = vmatprep.subr.mxu0 0.0
        %3488 = vmatpush1.msra.mxu0 0.0
        %3489 = vmatprep.subr.mxu0 0.0
        %3490 = vmatpush1.msra.mxu0 0.0
        %3491 = vmatprep.subr.mxu0 0.0
        %3492 = vmatpush1.msra.mxu0 0.0
        %3493 = vmatprep.subr.mxu0 0.0
        %3494 = vmatpush1.msra.mxu0 0.0
        %3495 = vmatprep.subr.mxu0 0.0
        %3496 = vmatpush1.msra.mxu0 0.0
        %3497 = vmatprep.subr.mxu0 0.0
        %3498 = vmatpush1.msra.mxu0 0.0
        %3499 = vmatprep.subr.mxu0 0.0
        %3500 = vmatpush1.msra.mxu0 0.0
        %3501 = vmatprep.subr.mxu0 0.0
        %3502 = vmatpush1.msra.mxu0 0.0
        %3503 = vmatprep.subr.mxu0 0.0
        %3504 = vmatpush1.msra.mxu0 0.0
        %3505 = vmatprep.subr.mxu0 0.0
        %3506 = vmatpush1.msra.mxu0 0.0
        %3507 = vmatprep.subr.mxu0 0.0
        %3508 = vmatpush1.msra.mxu0 0.0
        %3509 = vmatprep.subr.mxu0 0.0
        %3510 = vmatpush1.msra.mxu0 0.0
        %3511 = vmatprep.subr.mxu0 0.0
        %3512 = vmatpush1.msra.mxu0 0.0
        %3513 = vmatprep.mubr.f32.mxu0 0.0
        %v3514 = vand.u32 %v3072, 4294901760
        %3515 = vmatmul.mubr.f32.gmra.mrb[0].mxu0 %v3514
        %v3516 = vpop.f32.mrb[0].mxu0
        %v3517 = vadd.f32 %v3445, %v3516
        %v3518 = vpop.f32.mrb[0].mxu0
        %3519 = vdwg.mxu0
        %3520 = vrot.lane.b32.xlu0 %v1229, 112
        %v3521 = vpop.permute.xlu0 %3520
        %v3523 = vsel %vm779, %v3521, 0.0
        %3524 = vadd.xlane.f32.xlu0 %v3523
        %v3525 = vpop.xlane.xlu0 %3524
        %v3526 = vmul.f32 %v3525, 0.17677669
        %v3527 = vsel %vm289, %v3517, -inf
        %3528 = vmax.xlane.f32.xlu0 %v3527
        %v3529 = vpop.xlane.xlu0 %3528
        %v3530 = vrot.slane %v3529, 4
        %v3531 = vmax.f32 %v3529, %v3530
        %v3532 = vrot.slane %v3531, 2
        %v3533 = vmax.f32 %v3531, %v3532
        %v3534 = vrot.slane %v3533, 1
        %v3535 = vmax.f32 %v3533, %v3534
        %s3536 = scalar_lea.vmem [#allocation4], 2
        %v3537 = vld [vmem:[%s3536] sm:$0x1]
        %v3538 = vmax.f32 %v3537, %v3535
        %v3539 = vsub.f32 %v3537, %v3538
        %v3540 = vmul.f32 %v3539, 1.442695
        %v3541 = vpow.pop %v3540
        %3542 = vst.msk [vmem:[%s3536] sm:$0x1] %vm1248, %v3538
        %v3543 = vsub.f32 %v3517, %v3526
        %v3545 = vlaneseq
        %v3546 = vshrl.u32 %v3545, 7
        %v3547 = vsub.s32 0, %v3546
        %v3548 = vrot.slane %v3538, %v3547
        %3549 = vset.pattern.permute.xlu0 0
        %3550 = vperm.xlu0 %3549, %v3548
        %v3551 = vpop.permute.xlu0 %3550
        %v3553 = vsub.f32 %v3543, %v3551
        %v3554 = vmul.f32 %v3553, 1.442695
        %v3555 = vpow.pop %v3554
        %3556 = vrot.lane.b32.xlu0 %v775, 80
        %v3557 = vpop.permute.xlu0 %3556
        %v3559 = vsel %vm779, %v3557, 1.0
        %3560 = vxpose.xlu0.b32.start [1/16] %v3555, 128
        %3561 = vxpose.xlu0.b32.cont [2/16] 0.0, 128
        %3562 = vxpose.xlu0.b32.cont [3/16] 0.0, 128
        %3563 = vxpose.xlu0.b32.cont [4/16] 0.0, 128
        %3564 = vxpose.xlu0.b32.cont [5/16] 0.0, 128
        %3565 = vxpose.xlu0.b32.cont [6/16] 0.0, 128
        %3566 = vxpose.xlu0.b32.cont [7/16] 0.0, 128
        %3567 = vxpose.xlu0.b32.cont [8/16] 0.0, 128
        %3568 = vxpose.xlu0.b32.cont [9/16] 0.0, 128
        %3569 = vxpose.xlu0.b32.cont [10/16] 0.0, 128
        %3570 = vxpose.xlu0.b32.cont [11/16] 0.0, 128
        %3571 = vxpose.xlu0.b32.cont [12/16] 0.0, 128
        %3572 = vxpose.xlu0.b32.cont [13/16] 0.0, 128
        %3573 = vxpose.xlu0.b32.cont [14/16] 0.0, 128
        %3574 = vxpose.xlu0.b32.cont [15/16] 0.0, 128
        %3575 = vxpose.xlu0.b32.end [16/16] 0.0, 128
        %v3576 = vpop.trf.xlu0
        %v3577 = vpop.trf.xlu0
        %v3578 = vpop.trf.xlu0
        %v3579 = vpop.trf.xlu0
        %v3580 = vpop.trf.xlu0
        %v3581 = vpop.trf.xlu0
        %v3582 = vpop.trf.xlu0
        %v3583 = vpop.trf.xlu0
        %v3584 = vpop.trf.xlu0
        %v3585 = vpop.trf.xlu0
        %v3586 = vpop.trf.xlu0
        %v3587 = vpop.trf.xlu0
        %v3588 = vpop.trf.xlu0
        %v3589 = vpop.trf.xlu0
        %v3590 = vpop.trf.xlu0
        %v3591 = vpop.trf.xlu0
        %v3593 = vsel %vm779, %v3576, 0
        %v3596 = vsel %vm779, %v3577, 0
        %v3599 = vsel %vm779, %v3578, 0
        %v3602 = vsel %vm779, %v3579, 0
        %3604 = vmatprep.subr.mxu0 0.0
        %v3605 = vand.u32 %v3559, 4294901760
        %3606 = vmatpush1.msra.mxu0 %v3605
        %3607 = vmatprep.subr.mxu0 0.0
        %3608 = vmatpush1.msra.mxu0 0.0
        %3609 = vmatprep.subr.mxu0 0.0
        %3610 = vmatpush1.msra.mxu0 0.0
        %3611 = vmatprep.subr.mxu0 0.0
        %3612 = vmatpush1.msra.mxu0 0.0
        %3613 = vmatprep.subr.mxu0 0.0
        %3614 = vmatpush1.msra.mxu0 0.0
        %3615 = vmatprep.subr.mxu0 0.0
        %3616 = vmatpush1.msra.mxu0 0.0
        %3617 = vmatprep.subr.mxu0 0.0
        %3618 = vmatpush1.msra.mxu0 0.0
        %3619 = vmatprep.subr.mxu0 0.0
        %3620 = vmatpush1.msra.mxu0 0.0
        %3621 = vmatprep.subr.mxu0 0.0
        %3622 = vmatpush1.msra.mxu0 0.0
        %3623 = vmatprep.subr.mxu0 0.0
        %3624 = vmatpush1.msra.mxu0 0.0
        %3625 = vmatprep.subr.mxu0 0.0
        %3626 = vmatpush1.msra.mxu0 0.0
        %3627 = vmatprep.subr.mxu0 0.0
        %3628 = vmatpush1.msra.mxu0 0.0
        %3629 = vmatprep.subr.mxu0 0.0
        %3630 = vmatpush1.msra.mxu0 0.0
        %3631 = vmatprep.subr.mxu0 0.0
        %3632 = vmatpush1.msra.mxu0 0.0
        %3633 = vmatprep.subr.mxu0 0.0
        %3634 = vmatpush1.msra.mxu0 0.0
        %3635 = vmatprep.subr.mxu0 0.0
        %3636 = vmatpush1.msra.mxu0 0.0
        %3637 = vmatprep.subr.mxu0 0.0
        %3638 = vmatpush1.msra.mxu0 0.0
        %3639 = vmatprep.subr.mxu0 0.0
        %3640 = vmatpush1.msra.mxu0 0.0
        %3641 = vmatprep.subr.mxu0 0.0
        %3642 = vmatpush1.msra.mxu0 0.0
        %3643 = vmatprep.subr.mxu0 0.0
        %3644 = vmatpush1.msra.mxu0 0.0
        %3645 = vmatprep.subr.mxu0 0.0
        %3646 = vmatpush1.msra.mxu0 0.0
        %3647 = vmatprep.subr.mxu0 0.0
        %3648 = vmatpush1.msra.mxu0 0.0
        %3649 = vmatprep.subr.mxu0 0.0
        %3650 = vmatpush1.msra.mxu0 0.0
        %3651 = vmatprep.subr.mxu0 0.0
        %3652 = vmatpush1.msra.mxu0 0.0
        %3653 = vmatprep.subr.mxu0 0.0
        %3654 = vmatpush1.msra.mxu0 0.0
        %3655 = vmatprep.subr.mxu0 0.0
        %3656 = vmatpush1.msra.mxu0 0.0
        %3657 = vmatprep.subr.mxu0 0.0
        %3658 = vmatpush1.msra.mxu0 0.0
        %3659 = vmatprep.subr.mxu0 0.0
        %3660 = vmatpush1.msra.mxu0 0.0
        %3661 = vmatprep.subr.mxu0 0.0
        %3662 = vmatpush1.msra.mxu0 0.0
        %3663 = vmatprep.subr.mxu0 0.0
        %3664 = vmatpush1.msra.mxu0 0.0
        %3665 = vmatprep.subr.mxu0 0.0
        %3666 = vmatpush1.msra.mxu0 0.0
        %3667 = vmatprep.subr.mxu0 0.0
        %3668 = vmatpush1.msra.mxu0 0.0
        %3669 = vmatprep.mubr.f32.mxu0 0.0
        %v3670 = vand.u32 %v3593, 4294901760
        %v3671 = vsub.f32 %v3593, %v3670
        %v3672 = vand.u32 %v3671, 4294901760
        %v3673 = vsub.f32 %v3671, %v3672
        %v3674 = vand.u32 %v3673, 4294901760
        %3675 = vmatmul.mubr.f32.gmra.mrb[0].mxu0 %v3674
        %v3676 = vpop.f32.mrb[0].mxu0
        %v3677 = vadd.f32 0.0, %v3676
        %v3678 = vpop.f32.mrb[0].mxu0
        %3679 = vmatprep.mubr.f32.mxu0 0.0
        %v3680 = vand.u32 %v3596, 4294901760
        %v3681 = vsub.f32 %v3596, %v3680
        %v3682 = vand.u32 %v3681, 4294901760
        %v3683 = vsub.f32 %v3681, %v3682
        %v3684 = vand.u32 %v3683, 4294901760
        %3685 = vmatmul.mubr.f32.gmra.mrb[0].mxu0 %v3684
        %v3686 = vpop.f32.mrb[0].mxu0
        %v3687 = vadd.f32 0.0, %v3686
        %v3688 = vpop.f32.mrb[0].mxu0
        %3689 = vmatprep.mubr.f32.mxu0 0.0
        %v3690 = vand.u32 %v3599, 4294901760
        %v3691 = vsub.f32 %v3599, %v3690
        %v3692 = vand.u32 %v3691, 4294901760
        %v3693 = vsub.f32 %v3691, %v3692
        %v3694 = vand.u32 %v3693, 4294901760
        %3695 = vmatmul.mubr.f32.gmra.mrb[0].mxu0 %v3694
        %v3696 = vpop.f32.mrb[0].mxu0
        %v3697 = vadd.f32 0.0, %v3696
        %v3698 = vpop.f32.mrb[0].mxu0
        %3699 = vmatprep.mubr.f32.mxu0 0.0
        %v3700 = vand.u32 %v3602, 4294901760
        %v3701 = vsub.f32 %v3602, %v3700
        %v3702 = vand.u32 %v3701, 4294901760
        %v3703 = vsub.f32 %v3701, %v3702
        %v3704 = vand.u32 %v3703, 4294901760
        %3705 = vmatmul.mubr.f32.gmra.mrb[0].mxu0 %v3704
        %v3706 = vpop.f32.mrb[0].mxu0
        %v3707 = vadd.f32 0.0, %v3706
        %v3708 = vpop.f32.mrb[0].mxu0
        %3709 = vdwg.mxu0
        %3710 = vmatprep.subr.mxu0 0.0
        %v3711 = vand.u32 %v3559, 4294901760
        %v3712 = vsub.f32 %v3559, %v3711
        %v3713 = vand.u32 %v3712, 4294901760
        %v3714 = vsub.f32 %v3712, %v3713
        %v3715 = vand.u32 %v3714, 4294901760
        %3716 = vmatpush1.msra.mxu0 %v3715
        %3717 = vmatprep.subr.mxu0 0.0
        %3718 = vmatpush1.msra.mxu0 0.0
        %3719 = vmatprep.subr.mxu0 0.0
        %3720 = vmatpush1.msra.mxu0 0.0
        %3721 = vmatprep.subr.mxu0 0.0
        %3722 = vmatpush1.msra.mxu0 0.0
        %3723 = vmatprep.subr.mxu0 0.0
        %3724 = vmatpush1.msra.mxu0 0.0
        %3725 = vmatprep.subr.mxu0 0.0
        %3726 = vmatpush1.msra.mxu0 0.0
        %3727 = vmatprep.subr.mxu0 0.0
        %3728 = vmatpush1.msra.mxu0 0.0
        %3729 = vmatprep.subr.mxu0 0.0
        %3730 = vmatpush1.msra.mxu0 0.0
        %3731 = vmatprep.subr.mxu0 0.0
        %3732 = vmatpush1.msra.mxu0 0.0
        %3733 = vmatprep.subr.mxu0 0.0
        %3734 = vmatpush1.msra.mxu0 0.0
        %3735 = vmatprep.subr.mxu0 0.0
        %3736 = vmatpush1.msra.mxu0 0.0
        %3737 = vmatprep.subr.mxu0 0.0
        %3738 = vmatpush1.msra.mxu0 0.0
        %3739 = vmatprep.subr.mxu0 0.0
        %3740 = vmatpush1.msra.mxu0 0.0
        %3741 = vmatprep.subr.mxu0 0.0
        %3742 = vmatpush1.msra.mxu0 0.0
        %3743 = vmatprep.subr.mxu0 0.0
        %3744 = vmatpush1.msra.mxu0 0.0
        %3745 = vmatprep.subr.mxu0 0.0
        %3746 = vmatpush1.msra.mxu0 0.0
        %3747 = vmatprep.subr.mxu0 0.0
        %3748 = vmatpush1.msra.mxu0 0.0
        %3749 = vmatprep.subr.mxu0 0.0
        %3750 = vmatpush1.msra.mxu0 0.0
        %3751 = vmatprep.subr.mxu0 0.0
        %3752 = vmatpush1.msra.mxu0 0.0
        %3753 = vmatprep.subr.mxu0 0.0
        %3754 = vmatpush1.msra.mxu0 0.0
        %3755 = vmatprep.subr.mxu0 0.0
        %3756 = vmatpush1.msra.mxu0 0.0
        %3757 = vmatprep.subr.mxu0 0.0
        %3758 = vmatpush1.msra.mxu0 0.0
        %3759 = vmatprep.subr.mxu0 0.0
        %3760 = vmatpush1.msra.mxu0 0.0
        %3761 = vmatprep.subr.mxu0 0.0
        %3762 = vmatpush1.msra.mxu0 0.0
        %3763 = vmatprep.subr.mxu0 0.0
        %3764 = vmatpush1.msra.mxu0 0.0
        %3765 = vmatprep.subr.mxu0 0.0
        %3766 = vmatpush1.msra.mxu0 0.0
        %3767 = vmatprep.subr.mxu0 0.0
        %3768 = vmatpush1.msra.mxu0 0.0
        %3769 = vmatprep.subr.mxu0 0.0
        %3770 = vmatpush1.msra.mxu0 0.0
        %3771 = vmatprep.subr.mxu0 0.0
        %3772 = vmatpush1.msra.mxu0 0.0
        %3773 = vmatprep.subr.mxu0 0.0
        %3774 = vmatpush1.msra.mxu0 0.0
        %3775 = vmatprep.subr.mxu0 0.0
        %3776 = vmatpush1.msra.mxu0 0.0
        %3777 = vmatprep.subr.mxu0 0.0
        %3778 = vmatpush1.msra.mxu0 0.0
        %3779 = vmatprep.mubr.f32.mxu0 0.0
        %v3780 = vand.u32 %v3593, 4294901760
        %3781 = vmatmul.mubr.f32.gmra.mrb[0].mxu0 %v3780
        %v3782 = vpop.f32.mrb[0].mxu0
        %v3783 = vadd.f32 %v3677, %v3782
        %v3784 = vpop.f32.mrb[0].mxu0
        %3785 = vmatprep.mubr.f32.mxu0 0.0
        %v3786 = vand.u32 %v3596, 4294901760
        %3787 = vmatmul.mubr.f32.gmra.mrb[0].mxu0 %v3786
        %v3788 = vpop.f32.mrb[0].mxu0
        %v3789 = vadd.f32 %v3687, %v3788
        %v3790 = vpop.f32.mrb[0].mxu0
        %3791 = vmatprep.mubr.f32.mxu0 0.0
        %v3792 = vand.u32 %v3599, 4294901760
        %3793 = vmatmul.mubr.f32.gmra.mrb[0].mxu0 %v3792
        %v3794 = vpop.f32.mrb[0].mxu0
        %v3795 = vadd.f32 %v3697, %v3794
        %v3796 = vpop.f32.mrb[0].mxu0
        %3797 = vmatprep.mubr.f32.mxu0 0.0
        %v3798 = vand.u32 %v3602, 4294901760
        %3799 = vmatmul.mubr.f32.gmra.mrb[0].mxu0 %v3798
        %v3800 = vpop.f32.mrb[0].mxu0
        %v3801 = vadd.f32 %v3707, %v3800
        %v3802 = vpop.f32.mrb[0].mxu0
        %3803 = vdwg.mxu0
        %3804 = vmatprep.subr.mxu0 0.0
        %v3805 = vand.u32 %v3559, 4294901760
        %v3806 = vsub.f32 %v3559, %v3805
        %3807 = vmatpush1.msra.mxu0 %v3806
        %3808 = vmatprep.subr.mxu0 0.0
        %3809 = vmatpush1.msra.mxu0 0.0
        %3810 = vmatprep.subr.mxu0 0.0
        %3811 = vmatpush1.msra.mxu0 0.0
        %3812 = vmatprep.subr.mxu0 0.0
        %3813 = vmatpush1.msra.mxu0 0.0
        %3814 = vmatprep.subr.mxu0 0.0
        %3815 = vmatpush1.msra.mxu0 0.0
        %3816 = vmatprep.subr.mxu0 0.0
        %3817 = vmatpush1.msra.mxu0 0.0
        %3818 = vmatprep.subr.mxu0 0.0
        %3819 = vmatpush1.msra.mxu0 0.0
        %3820 = vmatprep.subr.mxu0 0.0
        %3821 = vmatpush1.msra.mxu0 0.0
        %3822 = vmatprep.subr.mxu0 0.0
        %3823 = vmatpush1.msra.mxu0 0.0
        %3824 = vmatprep.subr.mxu0 0.0
        %3825 = vmatpush1.msra.mxu0 0.0
        %3826 = vmatprep.subr.mxu0 0.0
        %3827 = vmatpush1.msra.mxu0 0.0
        %3828 = vmatprep.subr.mxu0 0.0
        %3829 = vmatpush1.msra.mxu0 0.0
        %3830 = vmatprep.subr.mxu0 0.0
        %3831 = vmatpush1.msra.mxu0 0.0
        %3832 = vmatprep.subr.mxu0 0.0
        %3833 = vmatpush1.msra.mxu0 0.0
        %3834 = vmatprep.subr.mxu0 0.0
        %3835 = vmatpush1.msra.mxu0 0.0
        %3836 = vmatprep.subr.mxu0 0.0
        %3837 = vmatpush1.msra.mxu0 0.0
        %3838 = vmatprep.subr.mxu0 0.0
        %3839 = vmatpush1.msra.mxu0 0.0
        %3840 = vmatprep.subr.mxu0 0.0
        %3841 = vmatpush1.msra.mxu0 0.0
        %3842 = vmatprep.subr.mxu0 0.0
        %3843 = vmatpush1.msra.mxu0 0.0
        %3844 = vmatprep.subr.mxu0 0.0
        %3845 = vmatpush1.msra.mxu0 0.0
        %3846 = vmatprep.subr.mxu0 0.0
        %3847 = vmatpush1.msra.mxu0 0.0
        %3848 = vmatprep.subr.mxu0 0.0
        %3849 = vmatpush1.msra.mxu0 0.0
        %3850 = vmatprep.subr.mxu0 0.0
        %3851 = vmatpush1.msra.mxu0 0.0
        %3852 = vmatprep.subr.mxu0 0.0
        %3853 = vmatpush1.msra.mxu0 0.0
        %3854 = vmatprep.subr.mxu0 0.0
        %3855 = vmatpush1.msra.mxu0 0.0
        %3856 = vmatprep.subr.mxu0 0.0
        %3857 = vmatpush1.msra.mxu0 0.0
        %3858 = vmatprep.subr.mxu0 0.0
        %3859 = vmatpush1.msra.mxu0 0.0
        %3860 = vmatprep.subr.mxu0 0.0
        %3861 = vmatpush1.msra.mxu0 0.0
        %3862 = vmatprep.subr.mxu0 0.0
        %3863 = vmatpush1.msra.mxu0 0.0
        %3864 = vmatprep.subr.mxu0 0.0
        %3865 = vmatpush1.msra.mxu0 0.0
        %3866 = vmatprep.subr.mxu0 0.0
        %3867 = vmatpush1.msra.mxu0 0.0
        %3868 = vmatprep.subr.mxu0 0.0
        %3869 = vmatpush1.msra.mxu0 0.0
        %3870 = vmatprep.mubr.f32.mxu0 0.0
        %v3871 = vand.u32 %v3593, 4294901760
        %v3872 = vsub.f32 %v3593, %v3871
        %3873 = vmatmul.mubr.f32.gmra.mrb[0].mxu0 %v3872
        %v3874 = vpop.f32.mrb[0].mxu0
        %v3875 = vadd.f32 %v3783, %v3874
        %v3876 = vpop.f32.mrb[0].mxu0
        %3877 = vmatprep.mubr.f32.mxu0 0.0
        %v3878 = vand.u32 %v3596, 4294901760
        %v3879 = vsub.f32 %v3596, %v3878
        %3880 = vmatmul.mubr.f32.gmra.mrb[0].mxu0 %v3879
        %v3881 = vpop.f32.mrb[0].mxu0
        %v3882 = vadd.f32 %v3789, %v3881
        %v3883 = vpop.f32.mrb[0].mxu0
        %3884 = vmatprep.mubr.f32.mxu0 0.0
        %v3885 = vand.u32 %v3599, 4294901760
        %v3886 = vsub.f32 %v3599, %v3885
        %3887 = vmatmul.mubr.f32.gmra.mrb[0].mxu0 %v3886
        %v3888 = vpop.f32.mrb[0].mxu0
        %v3889 = vadd.f32 %v3795, %v3888
        %v3890 = vpop.f32.mrb[0].mxu0
        %3891 = vmatprep.mubr.f32.mxu0 0.0
        %v3892 = vand.u32 %v3602, 4294901760
        %v3893 = vsub.f32 %v3602, %v3892
        %3894 = vmatmul.mubr.f32.gmra.mrb[0].mxu0 %v3893
        %v3895 = vpop.f32.mrb[0].mxu0
        %v3896 = vadd.f32 %v3801, %v3895
        %v3897 = vpop.f32.mrb[0].mxu0
        %3898 = vdwg.mxu0
        %3899 = vmatprep.subr.mxu0 0.0
        %v3900 = vand.u32 %v3559, 4294901760
        %3901 = vmatpush1.msra.mxu0 %v3900
        %3902 = vmatprep.subr.mxu0 0.0
        %3903 = vmatpush1.msra.mxu0 0.0
        %3904 = vmatprep.subr.mxu0 0.0
        %3905 = vmatpush1.msra.mxu0 0.0
        %3906 = vmatprep.subr.mxu0 0.0
        %3907 = vmatpush1.msra.mxu0 0.0
        %3908 = vmatprep.subr.mxu0 0.0
        %3909 = vmatpush1.msra.mxu0 0.0
        %3910 = vmatprep.subr.mxu0 0.0
        %3911 = vmatpush1.msra.mxu0 0.0
        %3912 = vmatprep.subr.mxu0 0.0
        %3913 = vmatpush1.msra.mxu0 0.0
        %3914 = vmatprep.subr.mxu0 0.0
        %3915 = vmatpush1.msra.mxu0 0.0
        %3916 = vmatprep.subr.mxu0 0.0
        %3917 = vmatpush1.msra.mxu0 0.0
        %3918 = vmatprep.subr.mxu0 0.0
        %3919 = vmatpush1.msra.mxu0 0.0
        %3920 = vmatprep.subr.mxu0 0.0
        %3921 = vmatpush1.msra.mxu0 0.0
        %3922 = vmatprep.subr.mxu0 0.0
        %3923 = vmatpush1.msra.mxu0 0.0
        %3924 = vmatprep.subr.mxu0 0.0
        %3925 = vmatpush1.msra.mxu0 0.0
        %3926 = vmatprep.subr.mxu0 0.0
        %3927 = vmatpush1.msra.mxu0 0.0
        %3928 = vmatprep.subr.mxu0 0.0
        %3929 = vmatpush1.msra.mxu0 0.0
        %3930 = vmatprep.subr.mxu0 0.0
        %3931 = vmatpush1.msra.mxu0 0.0
        %3932 = vmatprep.subr.mxu0 0.0
        %3933 = vmatpush1.msra.mxu0 0.0
        %3934 = vmatprep.subr.mxu0 0.0
        %3935 = vmatpush1.msra.mxu0 0.0
        %3936 = vmatprep.subr.mxu0 0.0
        %3937 = vmatpush1.msra.mxu0 0.0
        %3938 = vmatprep.subr.mxu0 0.0
        %3939 = vmatpush1.msra.mxu0 0.0
        %3940 = vmatprep.subr.mxu0 0.0
        %3941 = vmatpush1.msra.mxu0 0.0
        %3942 = vmatprep.subr.mxu0 0.0
        %3943 = vmatpush1.msra.mxu0 0.0
        %3944 = vmatprep.subr.mxu0 0.0
        %3945 = vmatpush1.msra.mxu0 0.0
        %3946 = vmatprep.subr.mxu0 0.0
        %3947 = vmatpush1.msra.mxu0 0.0
        %3948 = vmatprep.subr.mxu0 0.0
        %3949 = vmatpush1.msra.mxu0 0.0
        %3950 = vmatprep.subr.mxu0 0.0
        %3951 = vmatpush1.msra.mxu0 0.0
        %3952 = vmatprep.subr.mxu0 0.0
        %3953 = vmatpush1.msra.mxu0 0.0
        %3954 = vmatprep.subr.mxu0 0.0
        %3955 = vmatpush1.msra.mxu0 0.0
        %3956 = vmatprep.subr.mxu0 0.0
        %3957 = vmatpush1.msra.mxu0 0.0
        %3958 = vmatprep.subr.mxu0 0.0
        %3959 = vmatpush1.msra.mxu0 0.0
        %3960 = vmatprep.subr.mxu0 0.0
        %3961 = vmatpush1.msra.mxu0 0.0
        %3962 = vmatprep.subr.mxu0 0.0
        %3963 = vmatpush1.msra.mxu0 0.0
        %3964 = vmatprep.mubr.f32.mxu0 0.0
        %v3965 = vand.u32 %v3593, 4294901760
        %v3966 = vsub.f32 %v3593, %v3965
        %v3967 = vand.u32 %v3966, 4294901760
        %3968 = vmatmul.mubr.f32.gmra.mrb[0].mxu0 %v3967
        %v3969 = vpop.f32.mrb[0].mxu0
        %v3970 = vadd.f32 %v3875, %v3969
        %v3971 = vpop.f32.mrb[0].mxu0
        %3972 = vmatprep.mubr.f32.mxu0 0.0
        %v3973 = vand.u32 %v3596, 4294901760
        %v3974 = vsub.f32 %v3596, %v3973
        %v3975 = vand.u32 %v3974, 4294901760
        %3976 = vmatmul.mubr.f32.gmra.mrb[0].mxu0 %v3975
        %v3977 = vpop.f32.mrb[0].mxu0
        %v3978 = vadd.f32 %v3882, %v3977
        %v3979 = vpop.f32.mrb[0].mxu0
        %3980 = vmatprep.mubr.f32.mxu0 0.0
        %v3981 = vand.u32 %v3599, 4294901760
        %v3982 = vsub.f32 %v3599, %v3981
        %v3983 = vand.u32 %v3982, 4294901760
        %3984 = vmatmul.mubr.f32.gmra.mrb[0].mxu0 %v3983
        %v3985 = vpop.f32.mrb[0].mxu0
        %v3986 = vadd.f32 %v3889, %v3985
        %v3987 = vpop.f32.mrb[0].mxu0
        %3988 = vmatprep.mubr.f32.mxu0 0.0
        %v3989 = vand.u32 %v3602, 4294901760
        %v3990 = vsub.f32 %v3602, %v3989
        %v3991 = vand.u32 %v3990, 4294901760
        %3992 = vmatmul.mubr.f32.gmra.mrb[0].mxu0 %v3991
        %v3993 = vpop.f32.mrb[0].mxu0
        %v3994 = vadd.f32 %v3896, %v3993
        %v3995 = vpop.f32.mrb[0].mxu0
        %3996 = vdwg.mxu0
        %3997 = vmatprep.subr.mxu0 0.0
        %v3998 = vand.u32 %v3559, 4294901760
        %v3999 = vsub.f32 %v3559, %v3998
        %v4000 = vand.u32 %v3999, 4294901760
        %4001 = vmatpush1.msra.mxu0 %v4000
        %4002 = vmatprep.subr.mxu0 0.0
        %4003 = vmatpush1.msra.mxu0 0.0
        %4004 = vmatprep.subr.mxu0 0.0
        %4005 = vmatpush1.msra.mxu0 0.0
        %4006 = vmatprep.subr.mxu0 0.0
        %4007 = vmatpush1.msra.mxu0 0.0
        %4008 = vmatprep.subr.mxu0 0.0
        %4009 = vmatpush1.msra.mxu0 0.0
        %4010 = vmatprep.subr.mxu0 0.0
        %4011 = vmatpush1.msra.mxu0 0.0
        %4012 = vmatprep.subr.mxu0 0.0
        %4013 = vmatpush1.msra.mxu0 0.0
        %4014 = vmatprep.subr.mxu0 0.0
        %4015 = vmatpush1.msra.mxu0 0.0
        %4016 = vmatprep.subr.mxu0 0.0
        %4017 = vmatpush1.msra.mxu0 0.0
        %4018 = vmatprep.subr.mxu0 0.0
        %4019 = vmatpush1.msra.mxu0 0.0
        %4020 = vmatprep.subr.mxu0 0.0
        %4021 = vmatpush1.msra.mxu0 0.0
        %4022 = vmatprep.subr.mxu0 0.0
        %4023 = vmatpush1.msra.mxu0 0.0
        %4024 = vmatprep.subr.mxu0 0.0
        %4025 = vmatpush1.msra.mxu0 0.0
        %4026 = vmatprep.subr.mxu0 0.0
        %4027 = vmatpush1.msra.mxu0 0.0
        %4028 = vmatprep.subr.mxu0 0.0
        %4029 = vmatpush1.msra.mxu0 0.0
        %4030 = vmatprep.subr.mxu0 0.0
        %4031 = vmatpush1.msra.mxu0 0.0
        %4032 = vmatprep.subr.mxu0 0.0
        %4033 = vmatpush1.msra.mxu0 0.0
        %4034 = vmatprep.subr.mxu0 0.0
        %4035 = vmatpush1.msra.mxu0 0.0
        %4036 = vmatprep.subr.mxu0 0.0
        %4037 = vmatpush1.msra.mxu0 0.0
        %4038 = vmatprep.subr.mxu0 0.0
        %4039 = vmatpush1.msra.mxu0 0.0
        %4040 = vmatprep.subr.mxu0 0.0
        %4041 = vmatpush1.msra.mxu0 0.0
        %4042 = vmatprep.subr.mxu0 0.0
        %4043 = vmatpush1.msra.mxu0 0.0
        %4044 = vmatprep.subr.mxu0 0.0
        %4045 = vmatpush1.msra.mxu0 0.0
        %4046 = vmatprep.subr.mxu0 0.0
        %4047 = vmatpush1.msra.mxu0 0.0
        %4048 = vmatprep.subr.mxu0 0.0
        %4049 = vmatpush1.msra.mxu0 0.0
        %4050 = vmatprep.subr.mxu0 0.0
        %4051 = vmatpush1.msra.mxu0 0.0
        %4052 = vmatprep.subr.mxu0 0.0
        %4053 = vmatpush1.msra.mxu0 0.0
        %4054 = vmatprep.subr.mxu0 0.0
        %4055 = vmatpush1.msra.mxu0 0.0
        %4056 = vmatprep.subr.mxu0 0.0
        %4057 = vmatpush1.msra.mxu0 0.0
        %4058 = vmatprep.subr.mxu0 0.0
        %4059 = vmatpush1.msra.mxu0 0.0
        %4060 = vmatprep.subr.mxu0 0.0
        %4061 = vmatpush1.msra.mxu0 0.0
        %4062 = vmatprep.subr.mxu0 0.0
        %4063 = vmatpush1.msra.mxu0 0.0
        %4064 = vmatprep.mubr.f32.mxu0 0.0
        %v4065 = vand.u32 %v3593, 4294901760
        %4066 = vmatmul.mubr.f32.gmra.mrb[0].mxu0 %v4065
        %v4067 = vpop.f32.mrb[0].mxu0
        %v4068 = vadd.f32 %v3970, %v4067
        %v4069 = vpop.f32.mrb[0].mxu0
        %4070 = vmatprep.mubr.f32.mxu0 0.0
        %v4071 = vand.u32 %v3596, 4294901760
        %4072 = vmatmul.mubr.f32.gmra.mrb[0].mxu0 %v4071
        %v4073 = vpop.f32.mrb[0].mxu0
        %v4074 = vadd.f32 %v3978, %v4073
        %v4075 = vpop.f32.mrb[0].mxu0
        %4076 = vmatprep.mubr.f32.mxu0 0.0
        %v4077 = vand.u32 %v3599, 4294901760
        %4078 = vmatmul.mubr.f32.gmra.mrb[0].mxu0 %v4077
        %v4079 = vpop.f32.mrb[0].mxu0
        %v4080 = vadd.f32 %v3986, %v4079
        %v4081 = vpop.f32.mrb[0].mxu0
        %4082 = vmatprep.mubr.f32.mxu0 0.0
        %v4083 = vand.u32 %v3602, 4294901760
        %4084 = vmatmul.mubr.f32.gmra.mrb[0].mxu0 %v4083
        %v4085 = vpop.f32.mrb[0].mxu0
        %v4086 = vadd.f32 %v3994, %v4085
        %v4087 = vpop.f32.mrb[0].mxu0
        %4088 = vdwg.mxu0
        %4089 = vmatprep.subr.mxu0 0.0
        %v4090 = vand.u32 %v3559, 4294901760
        %4091 = vmatpush1.msra.mxu0 %v4090
        %4092 = vmatprep.subr.mxu0 0.0
        %4093 = vmatpush1.msra.mxu0 0.0
        %4094 = vmatprep.subr.mxu0 0.0
        %4095 = vmatpush1.msra.mxu0 0.0
        %4096 = vmatprep.subr.mxu0 0.0
        %4097 = vmatpush1.msra.mxu0 0.0
        %4098 = vmatprep.subr.mxu0 0.0
        %4099 = vmatpush1.msra.mxu0 0.0
        %4100 = vmatprep.subr.mxu0 0.0
        %4101 = vmatpush1.msra.mxu0 0.0
        %4102 = vmatprep.subr.mxu0 0.0
        %4103 = vmatpush1.msra.mxu0 0.0
        %4104 = vmatprep.subr.mxu0 0.0
        %4105 = vmatpush1.msra.mxu0 0.0
        %4106 = vmatprep.subr.mxu0 0.0
        %4107 = vmatpush1.msra.mxu0 0.0
        %4108 = vmatprep.subr.mxu0 0.0
        %4109 = vmatpush1.msra.mxu0 0.0
        %4110 = vmatprep.subr.mxu0 0.0
        %4111 = vmatpush1.msra.mxu0 0.0
        %4112 = vmatprep.subr.mxu0 0.0
        %4113 = vmatpush1.msra.mxu0 0.0
        %4114 = vmatprep.subr.mxu0 0.0
        %4115 = vmatpush1.msra.mxu0 0.0
        %4116 = vmatprep.subr.mxu0 0.0
        %4117 = vmatpush1.msra.mxu0 0.0
        %4118 = vmatprep.subr.mxu0 0.0
        %4119 = vmatpush1.msra.mxu0 0.0
        %4120 = vmatprep.subr.mxu0 0.0
        %4121 = vmatpush1.msra.mxu0 0.0
        %4122 = vmatprep.subr.mxu0 0.0
        %4123 = vmatpush1.msra.mxu0 0.0
        %4124 = vmatprep.subr.mxu0 0.0
        %4125 = vmatpush1.msra.mxu0 0.0
        %4126 = vmatprep.subr.mxu0 0.0
        %4127 = vmatpush1.msra.mxu0 0.0
        %4128 = vmatprep.subr.mxu0 0.0
        %4129 = vmatpush1.msra.mxu0 0.0
        %4130 = vmatprep.subr.mxu0 0.0
        %4131 = vmatpush1.msra.mxu0 0.0
        %4132 = vmatprep.subr.mxu0 0.0
        %4133 = vmatpush1.msra.mxu0 0.0
        %4134 = vmatprep.subr.mxu0 0.0
        %4135 = vmatpush1.msra.mxu0 0.0
        %4136 = vmatprep.subr.mxu0 0.0
        %4137 = vmatpush1.msra.mxu0 0.0
        %4138 = vmatprep.subr.mxu0 0.0
        %4139 = vmatpush1.msra.mxu0 0.0
        %4140 = vmatprep.subr.mxu0 0.0
        %4141 = vmatpush1.msra.mxu0 0.0
        %4142 = vmatprep.subr.mxu0 0.0
        %4143 = vmatpush1.msra.mxu0 0.0
        %4144 = vmatprep.subr.mxu0 0.0
        %4145 = vmatpush1.msra.mxu0 0.0
        %4146 = vmatprep.subr.mxu0 0.0
        %4147 = vmatpush1.msra.mxu0 0.0
        %4148 = vmatprep.subr.mxu0 0.0
        %4149 = vmatpush1.msra.mxu0 0.0
        %4150 = vmatprep.subr.mxu0 0.0
        %4151 = vmatpush1.msra.mxu0 0.0
        %4152 = vmatprep.subr.mxu0 0.0
        %4153 = vmatpush1.msra.mxu0 0.0
        %4154 = vmatprep.mubr.f32.mxu0 0.0
        %v4155 = vand.u32 %v3593, 4294901760
        %4156 = vmatmul.mubr.f32.gmra.mrb[0].mxu0 %v4155
        %v4157 = vpop.f32.mrb[0].mxu0
        %v4158 = vadd.f32 %v4068, %v4157
        %v4159 = vpop.f32.mrb[0].mxu0
        %4160 = vmatprep.mubr.f32.mxu0 0.0
        %v4161 = vand.u32 %v3596, 4294901760
        %4162 = vmatmul.mubr.f32.gmra.mrb[0].mxu0 %v4161
        %v4163 = vpop.f32.mrb[0].mxu0
        %v4164 = vadd.f32 %v4074, %v4163
        %v4165 = vpop.f32.mrb[0].mxu0
        %4166 = vmatprep.mubr.f32.mxu0 0.0
        %v4167 = vand.u32 %v3599, 4294901760
        %4168 = vmatmul.mubr.f32.gmra.mrb[0].mxu0 %v4167
        %v4169 = vpop.f32.mrb[0].mxu0
        %v4170 = vadd.f32 %v4080, %v4169
        %v4171 = vpop.f32.mrb[0].mxu0
        %4172 = vmatprep.mubr.f32.mxu0 0.0
        %v4173 = vand.u32 %v3602, 4294901760
        %4174 = vmatmul.mubr.f32.gmra.mrb[0].mxu0 %v4173
        %v4175 = vpop.f32.mrb[0].mxu0
        %v4176 = vadd.f32 %v4086, %v4175
        %v4177 = vpop.f32.mrb[0].mxu0
        %4178 = vdwg.mxu0
        %s4179 = scalar_lea.vmem [#allocation2], 64
        %v4180 = vld [vmem:[%s4179] sm:$0xff]
        %v4181 = vld [vmem:[%s4179 + $0x8] sm:$0xff]
        %v4182 = vld [vmem:[%s4179 + $0x10] sm:$0xff]
        %v4183 = vld [vmem:[%s4179 + $0x18] sm:$0xff]
        %v4185 = vlaneseq
        %v4186 = vshrl.u32 %v4185, 7
        %v4187 = vsub.s32 0, %v4186
        %v4188 = vrot.slane %v3541, %v4187
        %4189 = vset.pattern.permute.xlu0 0
        %4190 = vperm.xlu0 %4189, %v4188
        %v4191 = vpop.permute.xlu0 %4190
        %v4193 = vmul.f32 %v4180, %v4191
        %v4194 = vmul.f32 %v4181, %v4191
        %v4195 = vmul.f32 %v4182, %v4191
        %v4196 = vmul.f32 %v4183, %v4191
        %v4197 = vadd.f32 %v4193, %v4158
        %v4198 = vadd.f32 %v4194, %v4164
        %v4199 = vadd.f32 %v4195, %v4170
        %v4200 = vadd.f32 %v4196, %v4176
        %4201 = vst.msk [vmem:[%s4179] sm:$0xff] %vm1907, %v4197
        %4202 = vst.msk [vmem:[%s4179 + $0x8] sm:$0xff] %vm1907, %v4198
        %4203 = vst.msk [vmem:[%s4179 + $0x10] sm:$0xff] %vm1907, %v4199
        %4204 = vst.msk [vmem:[%s4179 + $0x18] sm:$0xff] %vm1907, %v4200
        %s4205 = scalar_lea.vmem [#allocation3], 2
        %v4206 = vld [vmem:[%s4205] sm:$0x1]
        %v4207 = vsel %vm1907, %v3559, 0.0
        %v4208 = vrot.slane %v4207, 4
        %v4209 = vadd.f32 %v4207, %v4208
        %v4210 = vrot.slane %v4209, 2
        %v4211 = vadd.f32 %v4209, %v4210
        %v4212 = vrot.slane %v4211, 1
        %v4213 = vadd.f32 %v4211, %v4212
        %v4214 = vadd.f32 %v4206, %v4213
        %4215 = vst.msk [vmem:[%s4205] sm:$0x1] %vm1921, %v4214
        %4216 = vrot.lane.b32.xlu0 %v775, 104
        %v4217 = vpop.permute.xlu0 %4216
        %v4218 = vsel %vm779, %v4217, 0
        %4220 = vmatprep.subr.mxu0 0.0
        %v4221 = vand.u32 %v778, 4294901760
        %4222 = vmatpush1.msra.mxu0 %v4221
        %4223 = vmatprep.subr.mxu0 0.0
        %4224 = vmatpush1.msra.mxu0 0.0
        %4225 = vmatprep.subr.mxu0 0.0
        %4226 = vmatpush1.msra.mxu0 0.0
        %4227 = vmatprep.subr.mxu0 0.0
        %4228 = vmatpush1.msra.mxu0 0.0
        %4229 = vmatprep.subr.mxu0 0.0
        %4230 = vmatpush1.msra.mxu0 0.0
        %4231 = vmatprep.subr.mxu0 0.0
        %4232 = vmatpush1.msra.mxu0 0.0
        %4233 = vmatprep.subr.mxu0 0.0
        %4234 = vmatpush1.msra.mxu0 0.0
        %4235 = vmatprep.subr.mxu0 0.0
        %4236 = vmatpush1.msra.mxu0 0.0
        %4237 = vmatprep.subr.mxu0 0.0
        %4238 = vmatpush1.msra.mxu0 0.0
        %4239 = vmatprep.subr.mxu0 0.0
        %4240 = vmatpush1.msra.mxu0 0.0
        %4241 = vmatprep.subr.mxu0 0.0
        %4242 = vmatpush1.msra.mxu0 0.0
        %4243 = vmatprep.subr.mxu0 0.0
        %4244 = vmatpush1.msra.mxu0 0.0
        %4245 = vmatprep.subr.mxu0 0.0
        %4246 = vmatpush1.msra.mxu0 0.0
        %4247 = vmatprep.subr.mxu0 0.0
        %4248 = vmatpush1.msra.mxu0 0.0
        %4249 = vmatprep.subr.mxu0 0.0
        %4250 = vmatpush1.msra.mxu0 0.0
        %4251 = vmatprep.subr.mxu0 0.0
        %4252 = vmatpush1.msra.mxu0 0.0
        %4253 = vmatprep.subr.mxu0 0.0
        %4254 = vmatpush1.msra.mxu0 0.0
        %4255 = vmatprep.subr.mxu0 0.0
        %4256 = vmatpush1.msra.mxu0 0.0
        %4257 = vmatprep.subr.mxu0 0.0
        %4258 = vmatpush1.msra.mxu0 0.0
        %4259 = vmatprep.subr.mxu0 0.0
        %4260 = vmatpush1.msra.mxu0 0.0
        %4261 = vmatprep.subr.mxu0 0.0
        %4262 = vmatpush1.msra.mxu0 0.0
        %4263 = vmatprep.subr.mxu0 0.0
        %4264 = vmatpush1.msra.mxu0 0.0
        %4265 = vmatprep.subr.mxu0 0.0
        %4266 = vmatpush1.msra.mxu0 0.0
        %4267 = vmatprep.subr.mxu0 0.0
        %4268 = vmatpush1.msra.mxu0 0.0
        %4269 = vmatprep.subr.mxu0 0.0
        %4270 = vmatpush1.msra.mxu0 0.0
        %4271 = vmatprep.subr.mxu0 0.0
        %4272 = vmatpush1.msra.mxu0 0.0
        %4273 = vmatprep.subr.mxu0 0.0
        %4274 = vmatpush1.msra.mxu0 0.0
        %4275 = vmatprep.subr.mxu0 0.0
        %4276 = vmatpush1.msra.mxu0 0.0
        %4277 = vmatprep.subr.mxu0 0.0
        %4278 = vmatpush1.msra.mxu0 0.0
        %4279 = vmatprep.subr.mxu0 0.0
        %4280 = vmatpush1.msra.mxu0 0.0
        %4281 = vmatprep.subr.mxu0 0.0
        %4282 = vmatpush1.msra.mxu0 0.0
        %4283 = vmatprep.subr.mxu0 0.0
        %4284 = vmatpush1.msra.mxu0 0.0
        %4285 = vmatprep.mubr.f32.mxu0 0.0
        %v4286 = vand.u32 %v4218, 4294901760
        %v4287 = vsub.f32 %v4218, %v4286
        %v4288 = vand.u32 %v4287, 4294901760
        %v4289 = vsub.f32 %v4287, %v4288
        %v4290 = vand.u32 %v4289, 4294901760
        %4291 = vmatmul.mubr.f32.gmra.mrb[0].mxu0 %v4290
        %v4292 = vpop.f32.mrb[0].mxu0
        %v4293 = vadd.f32 0.0, %v4292
        %v4294 = vpop.f32.mrb[0].mxu0
        %4295 = vdwg.mxu0
        %4296 = vmatprep.subr.mxu0 0.0
        %v4297 = vand.u32 %v778, 4294901760
        %v4298 = vsub.f32 %v778, %v4297
        %v4299 = vand.u32 %v4298, 4294901760
        %v4300 = vsub.f32 %v4298, %v4299
        %v4301 = vand.u32 %v4300, 4294901760
        %4302 = vmatpush1.msra.mxu0 %v4301
        %4303 = vmatprep.subr.mxu0 0.0
        %4304 = vmatpush1.msra.mxu0 0.0
        %4305 = vmatprep.subr.mxu0 0.0
        %4306 = vmatpush1.msra.mxu0 0.0
        %4307 = vmatprep.subr.mxu0 0.0
        %4308 = vmatpush1.msra.mxu0 0.0
        %4309 = vmatprep.subr.mxu0 0.0
        %4310 = vmatpush1.msra.mxu0 0.0
        %4311 = vmatprep.subr.mxu0 0.0
        %4312 = vmatpush1.msra.mxu0 0.0
        %4313 = vmatprep.subr.mxu0 0.0
        %4314 = vmatpush1.msra.mxu0 0.0
        %4315 = vmatprep.subr.mxu0 0.0
        %4316 = vmatpush1.msra.mxu0 0.0
        %4317 = vmatprep.subr.mxu0 0.0
        %4318 = vmatpush1.msra.mxu0 0.0
        %4319 = vmatprep.subr.mxu0 0.0
        %4320 = vmatpush1.msra.mxu0 0.0
        %4321 = vmatprep.subr.mxu0 0.0
        %4322 = vmatpush1.msra.mxu0 0.0
        %4323 = vmatprep.subr.mxu0 0.0
        %4324 = vmatpush1.msra.mxu0 0.0
        %4325 = vmatprep.subr.mxu0 0.0
        %4326 = vmatpush1.msra.mxu0 0.0
        %4327 = vmatprep.subr.mxu0 0.0
        %4328 = vmatpush1.msra.mxu0 0.0
        %4329 = vmatprep.subr.mxu0 0.0
        %4330 = vmatpush1.msra.mxu0 0.0
        %4331 = vmatprep.subr.mxu0 0.0
        %4332 = vmatpush1.msra.mxu0 0.0
        %4333 = vmatprep.subr.mxu0 0.0
        %4334 = vmatpush1.msra.mxu0 0.0
        %4335 = vmatprep.subr.mxu0 0.0
        %4336 = vmatpush1.msra.mxu0 0.0
        %4337 = vmatprep.subr.mxu0 0.0
        %4338 = vmatpush1.msra.mxu0 0.0
        %4339 = vmatprep.subr.mxu0 0.0
        %4340 = vmatpush1.msra.mxu0 0.0
        %4341 = vmatprep.subr.mxu0 0.0
        %4342 = vmatpush1.msra.mxu0 0.0
        %4343 = vmatprep.subr.mxu0 0.0
        %4344 = vmatpush1.msra.mxu0 0.0
        %4345 = vmatprep.subr.mxu0 0.0
        %4346 = vmatpush1.msra.mxu0 0.0
        %4347 = vmatprep.subr.mxu0 0.0
        %4348 = vmatpush1.msra.mxu0 0.0
        %4349 = vmatprep.subr.mxu0 0.0
        %4350 = vmatpush1.msra.mxu0 0.0
        %4351 = vmatprep.subr.mxu0 0.0
        %4352 = vmatpush1.msra.mxu0 0.0
        %4353 = vmatprep.subr.mxu0 0.0
        %4354 = vmatpush1.msra.mxu0 0.0
        %4355 = vmatprep.subr.mxu0 0.0
        %4356 = vmatpush1.msra.mxu0 0.0
        %4357 = vmatprep.subr.mxu0 0.0
        %4358 = vmatpush1.msra.mxu0 0.0
        %4359 = vmatprep.subr.mxu0 0.0
        %4360 = vmatpush1.msra.mxu0 0.0
        %4361 = vmatprep.subr.mxu0 0.0
        %4362 = vmatpush1.msra.mxu0 0.0
        %4363 = vmatprep.subr.mxu0 0.0
        %4364 = vmatpush1.msra.mxu0 0.0
        %4365 = vmatprep.mubr.f32.mxu0 0.0
        %v4366 = vand.u32 %v4218, 4294901760
        %4367 = vmatmul.mubr.f32.gmra.mrb[0].mxu0 %v4366
        %v4368 = vpop.f32.mrb[0].mxu0
        %v4369 = vadd.f32 %v4293, %v4368
        %v4370 = vpop.f32.mrb[0].mxu0
        %4371 = vdwg.mxu0
        %4372 = vmatprep.subr.mxu0 0.0
        %v4373 = vand.u32 %v778, 4294901760
        %v4374 = vsub.f32 %v778, %v4373
        %4375 = vmatpush1.msra.mxu0 %v4374
        %4376 = vmatprep.subr.mxu0 0.0
        %4377 = vmatpush1.msra.mxu0 0.0
        %4378 = vmatprep.subr.mxu0 0.0
        %4379 = vmatpush1.msra.mxu0 0.0
        %4380 = vmatprep.subr.mxu0 0.0
        %4381 = vmatpush1.msra.mxu0 0.0
        %4382 = vmatprep.subr.mxu0 0.0
        %4383 = vmatpush1.msra.mxu0 0.0
        %4384 = vmatprep.subr.mxu0 0.0
        %4385 = vmatpush1.msra.mxu0 0.0
        %4386 = vmatprep.subr.mxu0 0.0
        %4387 = vmatpush1.msra.mxu0 0.0
        %4388 = vmatprep.subr.mxu0 0.0
        %4389 = vmatpush1.msra.mxu0 0.0
        %4390 = vmatprep.subr.mxu0 0.0
        %4391 = vmatpush1.msra.mxu0 0.0
        %4392 = vmatprep.subr.mxu0 0.0
        %4393 = vmatpush1.msra.mxu0 0.0
        %4394 = vmatprep.subr.mxu0 0.0
        %4395 = vmatpush1.msra.mxu0 0.0
        %4396 = vmatprep.subr.mxu0 0.0
        %4397 = vmatpush1.msra.mxu0 0.0
        %4398 = vmatprep.subr.mxu0 0.0
        %4399 = vmatpush1.msra.mxu0 0.0
        %4400 = vmatprep.subr.mxu0 0.0
        %4401 = vmatpush1.msra.mxu0 0.0
        %4402 = vmatprep.subr.mxu0 0.0
        %4403 = vmatpush1.msra.mxu0 0.0
        %4404 = vmatprep.subr.mxu0 0.0
        %4405 = vmatpush1.msra.mxu0 0.0
        %4406 = vmatprep.subr.mxu0 0.0
        %4407 = vmatpush1.msra.mxu0 0.0
        %4408 = vmatprep.subr.mxu0 0.0
        %4409 = vmatpush1.msra.mxu0 0.0
        %4410 = vmatprep.subr.mxu0 0.0
        %4411 = vmatpush1.msra.mxu0 0.0
        %4412 = vmatprep.subr.mxu0 0.0
        %4413 = vmatpush1.msra.mxu0 0.0
        %4414 = vmatprep.subr.mxu0 0.0
        %4415 = vmatpush1.msra.mxu0 0.0
        %4416 = vmatprep.subr.mxu0 0.0
        %4417 = vmatpush1.msra.mxu0 0.0
        %4418 = vmatprep.subr.mxu0 0.0
        %4419 = vmatpush1.msra.mxu0 0.0
        %4420 = vmatprep.subr.mxu0 0.0
        %4421 = vmatpush1.msra.mxu0 0.0
        %4422 = vmatprep.subr.mxu0 0.0
        %4423 = vmatpush1.msra.mxu0 0.0
        %4424 = vmatprep.subr.mxu0 0.0
        %4425 = vmatpush1.msra.mxu0 0.0
        %4426 = vmatprep.subr.mxu0 0.0
        %4427 = vmatpush1.msra.mxu0 0.0
        %4428 = vmatprep.subr.mxu0 0.0
        %4429 = vmatpush1.msra.mxu0 0.0
        %4430 = vmatprep.subr.mxu0 0.0
        %4431 = vmatpush1.msra.mxu0 0.0
        %4432 = vmatprep.subr.mxu0 0.0
        %4433 = vmatpush1.msra.mxu0 0.0
        %4434 = vmatprep.subr.mxu0 0.0
        %4435 = vmatpush1.msra.mxu0 0.0
        %4436 = vmatprep.subr.mxu0 0.0
        %4437 = vmatpush1.msra.mxu0 0.0
        %4438 = vmatprep.mubr.f32.mxu0 0.0
        %v4439 = vand.u32 %v4218, 4294901760
        %v4440 = vsub.f32 %v4218, %v4439
        %4441 = vmatmul.mubr.f32.gmra.mrb[0].mxu0 %v4440
        %v4442 = vpop.f32.mrb[0].mxu0
        %v4443 = vadd.f32 %v4369, %v4442
        %v4444 = vpop.f32.mrb[0].mxu0
        %4445 = vdwg.mxu0
        %4446 = vmatprep.subr.mxu0 0.0
        %v4447 = vand.u32 %v778, 4294901760
        %4448 = vmatpush1.msra.mxu0 %v4447
        %4449 = vmatprep.subr.mxu0 0.0
        %4450 = vmatpush1.msra.mxu0 0.0
        %4451 = vmatprep.subr.mxu0 0.0
        %4452 = vmatpush1.msra.mxu0 0.0
        %4453 = vmatprep.subr.mxu0 0.0
        %4454 = vmatpush1.msra.mxu0 0.0
        %4455 = vmatprep.subr.mxu0 0.0
        %4456 = vmatpush1.msra.mxu0 0.0
        %4457 = vmatprep.subr.mxu0 0.0
        %4458 = vmatpush1.msra.mxu0 0.0
        %4459 = vmatprep.subr.mxu0 0.0
        %4460 = vmatpush1.msra.mxu0 0.0
        %4461 = vmatprep.subr.mxu0 0.0
        %4462 = vmatpush1.msra.mxu0 0.0
        %4463 = vmatprep.subr.mxu0 0.0
        %4464 = vmatpush1.msra.mxu0 0.0
        %4465 = vmatprep.subr.mxu0 0.0
        %4466 = vmatpush1.msra.mxu0 0.0
        %4467 = vmatprep.subr.mxu0 0.0
        %4468 = vmatpush1.msra.mxu0 0.0
        %4469 = vmatprep.subr.mxu0 0.0
        %4470 = vmatpush1.msra.mxu0 0.0
        %4471 = vmatprep.subr.mxu0 0.0
        %4472 = vmatpush1.msra.mxu0 0.0
        %4473 = vmatprep.subr.mxu0 0.0
        %4474 = vmatpush1.msra.mxu0 0.0
        %4475 = vmatprep.subr.mxu0 0.0
        %4476 = vmatpush1.msra.mxu0 0.0
        %4477 = vmatprep.subr.mxu0 0.0
        %4478 = vmatpush1.msra.mxu0 0.0
        %4479 = vmatprep.subr.mxu0 0.0
        %4480 = vmatpush1.msra.mxu0 0.0
        %4481 = vmatprep.subr.mxu0 0.0
        %4482 = vmatpush1.msra.mxu0 0.0
        %4483 = vmatprep.subr.mxu0 0.0
        %4484 = vmatpush1.msra.mxu0 0.0
        %4485 = vmatprep.subr.mxu0 0.0
        %4486 = vmatpush1.msra.mxu0 0.0
        %4487 = vmatprep.subr.mxu0 0.0
        %4488 = vmatpush1.msra.mxu0 0.0
        %4489 = vmatprep.subr.mxu0 0.0
        %4490 = vmatpush1.msra.mxu0 0.0
        %4491 = vmatprep.subr.mxu0 0.0
        %4492 = vmatpush1.msra.mxu0 0.0
        %4493 = vmatprep.subr.mxu0 0.0
        %4494 = vmatpush1.msra.mxu0 0.0
        %4495 = vmatprep.subr.mxu0 0.0
        %4496 = vmatpush1.msra.mxu0 0.0
        %4497 = vmatprep.subr.mxu0 0.0
        %4498 = vmatpush1.msra.mxu0 0.0
        %4499 = vmatprep.subr.mxu0 0.0
        %4500 = vmatpush1.msra.mxu0 0.0
        %4501 = vmatprep.subr.mxu0 0.0
        %4502 = vmatpush1.msra.mxu0 0.0
        %4503 = vmatprep.subr.mxu0 0.0
        %4504 = vmatpush1.msra.mxu0 0.0
        %4505 = vmatprep.subr.mxu0 0.0
        %4506 = vmatpush1.msra.mxu0 0.0
        %4507 = vmatprep.subr.mxu0 0.0
        %4508 = vmatpush1.msra.mxu0 0.0
        %4509 = vmatprep.subr.mxu0 0.0
        %4510 = vmatpush1.msra.mxu0 0.0
        %4511 = vmatprep.mubr.f32.mxu0 0.0
        %v4512 = vand.u32 %v4218, 4294901760
        %v4513 = vsub.f32 %v4218, %v4512
        %v4514 = vand.u32 %v4513, 4294901760
        %4515 = vmatmul.mubr.f32.gmra.mrb[0].mxu0 %v4514
        %v4516 = vpop.f32.mrb[0].mxu0
        %v4517 = vadd.f32 %v4443, %v4516
        %v4518 = vpop.f32.mrb[0].mxu0
        %4519 = vdwg.mxu0
        %4520 = vmatprep.subr.mxu0 0.0
        %v4521 = vand.u32 %v778, 4294901760
        %v4522 = vsub.f32 %v778, %v4521
        %v4523 = vand.u32 %v4522, 4294901760
        %4524 = vmatpush1.msra.mxu0 %v4523
        %4525 = vmatprep.subr.mxu0 0.0
        %4526 = vmatpush1.msra.mxu0 0.0
        %4527 = vmatprep.subr.mxu0 0.0
        %4528 = vmatpush1.msra.mxu0 0.0
        %4529 = vmatprep.subr.mxu0 0.0
        %4530 = vmatpush1.msra.mxu0 0.0
        %4531 = vmatprep.subr.mxu0 0.0
        %4532 = vmatpush1.msra.mxu0 0.0
        %4533 = vmatprep.subr.mxu0 0.0
        %4534 = vmatpush1.msra.mxu0 0.0
        %4535 = vmatprep.subr.mxu0 0.0
        %4536 = vmatpush1.msra.mxu0 0.0
        %4537 = vmatprep.subr.mxu0 0.0
        %4538 = vmatpush1.msra.mxu0 0.0
        %4539 = vmatprep.subr.mxu0 0.0
        %4540 = vmatpush1.msra.mxu0 0.0
        %4541 = vmatprep.subr.mxu0 0.0
        %4542 = vmatpush1.msra.mxu0 0.0
        %4543 = vmatprep.subr.mxu0 0.0
        %4544 = vmatpush1.msra.mxu0 0.0
        %4545 = vmatprep.subr.mxu0 0.0
        %4546 = vmatpush1.msra.mxu0 0.0
        %4547 = vmatprep.subr.mxu0 0.0
        %4548 = vmatpush1.msra.mxu0 0.0
        %4549 = vmatprep.subr.mxu0 0.0
        %4550 = vmatpush1.msra.mxu0 0.0
        %4551 = vmatprep.subr.mxu0 0.0
        %4552 = vmatpush1.msra.mxu0 0.0
        %4553 = vmatprep.subr.mxu0 0.0
        %4554 = vmatpush1.msra.mxu0 0.0
        %4555 = vmatprep.subr.mxu0 0.0
        %4556 = vmatpush1.msra.mxu0 0.0
        %4557 = vmatprep.subr.mxu0 0.0
        %4558 = vmatpush1.msra.mxu0 0.0
        %4559 = vmatprep.subr.mxu0 0.0
        %4560 = vmatpush1.msra.mxu0 0.0
        %4561 = vmatprep.subr.mxu0 0.0
        %4562 = vmatpush1.msra.mxu0 0.0
        %4563 = vmatprep.subr.mxu0 0.0
        %4564 = vmatpush1.msra.mxu0 0.0
        %4565 = vmatprep.subr.mxu0 0.0
        %4566 = vmatpush1.msra.mxu0 0.0
        %4567 = vmatprep.subr.mxu0 0.0
        %4568 = vmatpush1.msra.mxu0 0.0
        %4569 = vmatprep.subr.mxu0 0.0
        %4570 = vmatpush1.msra.mxu0 0.0
        %4571 = vmatprep.subr.mxu0 0.0
        %4572 = vmatpush1.msra.mxu0 0.0
        %4573 = vmatprep.subr.mxu0 0.0
        %4574 = vmatpush1.msra.mxu0 0.0
        %4575 = vmatprep.subr.mxu0 0.0
        %4576 = vmatpush1.msra.mxu0 0.0
        %4577 = vmatprep.subr.mxu0 0.0
        %4578 = vmatpush1.msra.mxu0 0.0
        %4579 = vmatprep.subr.mxu0 0.0
        %4580 = vmatpush1.msra.mxu0 0.0
        %4581 = vmatprep.subr.mxu0 0.0
        %4582 = vmatpush1.msra.mxu0 0.0
        %4583 = vmatprep.subr.mxu0 0.0
        %4584 = vmatpush1.msra.mxu0 0.0
        %4585 = vmatprep.subr.mxu0 0.0
        %4586 = vmatpush1.msra.mxu0 0.0
        %4587 = vmatprep.mubr.f32.mxu0 0.0
        %v4588 = vand.u32 %v4218, 4294901760
        %4589 = vmatmul.mubr.f32.gmra.mrb[0].mxu0 %v4588
        %v4590 = vpop.f32.mrb[0].mxu0
        %v4591 = vadd.f32 %v4517, %v4590
        %v4592 = vpop.f32.mrb[0].mxu0
        %4593 = vdwg.mxu0
        %4594 = vmatprep.subr.mxu0 0.0
        %v4595 = vand.u32 %v778, 4294901760
        %4596 = vmatpush1.msra.mxu0 %v4595
        %4597 = vmatprep.subr.mxu0 0.0
        %4598 = vmatpush1.msra.mxu0 0.0
        %4599 = vmatprep.subr.mxu0 0.0
        %4600 = vmatpush1.msra.mxu0 0.0
        %4601 = vmatprep.subr.mxu0 0.0
        %4602 = vmatpush1.msra.mxu0 0.0
        %4603 = vmatprep.subr.mxu0 0.0
        %4604 = vmatpush1.msra.mxu0 0.0
        %4605 = vmatprep.subr.mxu0 0.0
        %4606 = vmatpush1.msra.mxu0 0.0
        %4607 = vmatprep.subr.mxu0 0.0
        %4608 = vmatpush1.msra.mxu0 0.0
        %4609 = vmatprep.subr.mxu0 0.0
        %4610 = vmatpush1.msra.mxu0 0.0
        %4611 = vmatprep.subr.mxu0 0.0
        %4612 = vmatpush1.msra.mxu0 0.0
        %4613 = vmatprep.subr.mxu0 0.0
        %4614 = vmatpush1.msra.mxu0 0.0
        %4615 = vmatprep.subr.mxu0 0.0
        %4616 = vmatpush1.msra.mxu0 0.0
        %4617 = vmatprep.subr.mxu0 0.0
        %4618 = vmatpush1.msra.mxu0 0.0
        %4619 = vmatprep.subr.mxu0 0.0
        %4620 = vmatpush1.msra.mxu0 0.0
        %4621 = vmatprep.subr.mxu0 0.0
        %4622 = vmatpush1.msra.mxu0 0.0
        %4623 = vmatprep.subr.mxu0 0.0
        %4624 = vmatpush1.msra.mxu0 0.0
        %4625 = vmatprep.subr.mxu0 0.0
        %4626 = vmatpush1.msra.mxu0 0.0
        %4627 = vmatprep.subr.mxu0 0.0
        %4628 = vmatpush1.msra.mxu0 0.0
        %4629 = vmatprep.subr.mxu0 0.0
        %4630 = vmatpush1.msra.mxu0 0.0
        %4631 = vmatprep.subr.mxu0 0.0
        %4632 = vmatpush1.msra.mxu0 0.0
        %4633 = vmatprep.subr.mxu0 0.0
        %4634 = vmatpush1.msra.mxu0 0.0
        %4635 = vmatprep.subr.mxu0 0.0
        %4636 = vmatpush1.msra.mxu0 0.0
        %4637 = vmatprep.subr.mxu0 0.0
        %4638 = vmatpush1.msra.mxu0 0.0
        %4639 = vmatprep.subr.mxu0 0.0
        %4640 = vmatpush1.msra.mxu0 0.0
        %4641 = vmatprep.subr.mxu0 0.0
        %4642 = vmatpush1.msra.mxu0 0.0
        %4643 = vmatprep.subr.mxu0 0.0
        %4644 = vmatpush1.msra.mxu0 0.0
        %4645 = vmatprep.subr.mxu0 0.0
        %4646 = vmatpush1.msra.mxu0 0.0
        %4647 = vmatprep.subr.mxu0 0.0
        %4648 = vmatpush1.msra.mxu0 0.0
        %4649 = vmatprep.subr.mxu0 0.0
        %4650 = vmatpush1.msra.mxu0 0.0
        %4651 = vmatprep.subr.mxu0 0.0
        %4652 = vmatpush1.msra.mxu0 0.0
        %4653 = vmatprep.subr.mxu0 0.0
        %4654 = vmatpush1.msra.mxu0 0.0
        %4655 = vmatprep.subr.mxu0 0.0
        %4656 = vmatpush1.msra.mxu0 0.0
        %4657 = vmatprep.subr.mxu0 0.0
        %4658 = vmatpush1.msra.mxu0 0.0
        %4659 = vmatprep.mubr.f32.mxu0 0.0
        %v4660 = vand.u32 %v4218, 4294901760
        %4661 = vmatmul.mubr.f32.gmra.mrb[0].mxu0 %v4660
        %v4662 = vpop.f32.mrb[0].mxu0
        %v4663 = vadd.f32 %v4591, %v4662
        %v4664 = vpop.f32.mrb[0].mxu0
        %4665 = vdwg.mxu0
        %4666 = vrot.lane.b32.xlu0 %v1229, 104
        %v4667 = vpop.permute.xlu0 %4666
        %v4669 = vsel %vm779, %v4667, 0.0
        %4670 = vadd.xlane.f32.xlu0 %v4669
        %v4671 = vpop.xlane.xlu0 %4670
        %v4672 = vmul.f32 %v4671, 0.17677669
        %v4673 = vsel %vm289, %v4663, -inf
        %4674 = vmax.xlane.f32.xlu0 %v4673
        %v4675 = vpop.xlane.xlu0 %4674
        %v4676 = vrot.slane %v4675, 4
        %v4677 = vmax.f32 %v4675, %v4676
        %v4678 = vrot.slane %v4677, 2
        %v4679 = vmax.f32 %v4677, %v4678
        %v4680 = vrot.slane %v4679, 1
        %v4681 = vmax.f32 %v4679, %v4680
        %s4682 = scalar_lea.vmem [#allocation4], 3
        %v4683 = vld [vmem:[%s4682] sm:$0x1]
        %v4684 = vmax.f32 %v4683, %v4681
        %v4685 = vsub.f32 %v4683, %v4684
        %v4686 = vmul.f32 %v4685, 1.442695
        %v4687 = vpow.pop %v4686
        %4688 = vst.msk [vmem:[%s4682] sm:$0x1] %vm1248, %v4684
        %v4689 = vsub.f32 %v4663, %v4672
        %v4691 = vlaneseq
        %v4692 = vshrl.u32 %v4691, 7
        %v4693 = vsub.s32 0, %v4692
        %v4694 = vrot.slane %v4684, %v4693
        %4695 = vset.pattern.permute.xlu0 0
        %4696 = vperm.xlu0 %4695, %v4694
        %v4697 = vpop.permute.xlu0 %4696
        %v4699 = vsub.f32 %v4689, %v4697
        %v4700 = vmul.f32 %v4699, 1.442695
        %v4701 = vpow.pop %v4700
        %4702 = vrot.lane.b32.xlu0 %v775, 72
        %v4703 = vpop.permute.xlu0 %4702
        %v4705 = vsel %vm779, %v4703, 1.0
        %4706 = vxpose.xlu0.b32.start [1/16] %v4701, 128
        %4707 = vxpose.xlu0.b32.cont [2/16] 0.0, 128
        %4708 = vxpose.xlu0.b32.cont [3/16] 0.0, 128
        %4709 = vxpose.xlu0.b32.cont [4/16] 0.0, 128
        %4710 = vxpose.xlu0.b32.cont [5/16] 0.0, 128
        %4711 = vxpose.xlu0.b32.cont [6/16] 0.0, 128
        %4712 = vxpose.xlu0.b32.cont [7/16] 0.0, 128
        %4713 = vxpose.xlu0.b32.cont [8/16] 0.0, 128
        %4714 = vxpose.xlu0.b32.cont [9/16] 0.0, 128
        %4715 = vxpose.xlu0.b32.cont [10/16] 0.0, 128
        %4716 = vxpose.xlu0.b32.cont [11/16] 0.0, 128
        %4717 = vxpose.xlu0.b32.cont [12/16] 0.0, 128
        %4718 = vxpose.xlu0.b32.cont [13/16] 0.0, 128
        %4719 = vxpose.xlu0.b32.cont [14/16] 0.0, 128
        %4720 = vxpose.xlu0.b32.cont [15/16] 0.0, 128
        %4721 = vxpose.xlu0.b32.end [16/16] 0.0, 128
        %v4722 = vpop.trf.xlu0
        %v4723 = vpop.trf.xlu0
        %v4724 = vpop.trf.xlu0
        %v4725 = vpop.trf.xlu0
        %v4726 = vpop.trf.xlu0
        %v4727 = vpop.trf.xlu0
        %v4728 = vpop.trf.xlu0
        %v4729 = vpop.trf.xlu0
        %v4730 = vpop.trf.xlu0
        %v4731 = vpop.trf.xlu0
        %v4732 = vpop.trf.xlu0
        %v4733 = vpop.trf.xlu0
        %v4734 = vpop.trf.xlu0
        %v4735 = vpop.trf.xlu0
        %v4736 = vpop.trf.xlu0
        %v4737 = vpop.trf.xlu0
        %v4739 = vsel %vm779, %v4722, 0
        %v4742 = vsel %vm779, %v4723, 0
        %v4745 = vsel %vm779, %v4724, 0
        %v4748 = vsel %vm779, %v4725, 0
        %4750 = vmatprep.subr.mxu0 0.0
        %v4751 = vand.u32 %v4705, 4294901760
        %4752 = vmatpush1.msra.mxu0 %v4751
        %4753 = vmatprep.subr.mxu0 0.0
        %4754 = vmatpush1.msra.mxu0 0.0
        %4755 = vmatprep.subr.mxu0 0.0
        %4756 = vmatpush1.msra.mxu0 0.0
        %4757 = vmatprep.subr.mxu0 0.0
        %4758 = vmatpush1.msra.mxu0 0.0
        %4759 = vmatprep.subr.mxu0 0.0
        %4760 = vmatpush1.msra.mxu0 0.0
        %4761 = vmatprep.subr.mxu0 0.0
        %4762 = vmatpush1.msra.mxu0 0.0
        %4763 = vmatprep.subr.mxu0 0.0
        %4764 = vmatpush1.msra.mxu0 0.0
        %4765 = vmatprep.subr.mxu0 0.0
        %4766 = vmatpush1.msra.mxu0 0.0
        %4767 = vmatprep.subr.mxu0 0.0
        %4768 = vmatpush1.msra.mxu0 0.0
        %4769 = vmatprep.subr.mxu0 0.0
        %4770 = vmatpush1.msra.mxu0 0.0
        %4771 = vmatprep.subr.mxu0 0.0
        %4772 = vmatpush1.msra.mxu0 0.0
        %4773 = vmatprep.subr.mxu0 0.0
        %4774 = vmatpush1.msra.mxu0 0.0
        %4775 = vmatprep.subr.mxu0 0.0
        %4776 = vmatpush1.msra.mxu0 0.0
        %4777 = vmatprep.subr.mxu0 0.0
        %4778 = vmatpush1.msra.mxu0 0.0
        %4779 = vmatprep.subr.mxu0 0.0
        %4780 = vmatpush1.msra.mxu0 0.0
        %4781 = vmatprep.subr.mxu0 0.0
        %4782 = vmatpush1.msra.mxu0 0.0
        %4783 = vmatprep.subr.mxu0 0.0
        %4784 = vmatpush1.msra.mxu0 0.0
        %4785 = vmatprep.subr.mxu0 0.0
        %4786 = vmatpush1.msra.mxu0 0.0
        %4787 = vmatprep.subr.mxu0 0.0
        %4788 = vmatpush1.msra.mxu0 0.0
        %4789 = vmatprep.subr.mxu0 0.0
        %4790 = vmatpush1.msra.mxu0 0.0
        %4791 = vmatprep.subr.mxu0 0.0
        %4792 = vmatpush1.msra.mxu0 0.0
        %4793 = vmatprep.subr.mxu0 0.0
        %4794 = vmatpush1.msra.mxu0 0.0
        %4795 = vmatprep.subr.mxu0 0.0
        %4796 = vmatpush1.msra.mxu0 0.0
        %4797 = vmatprep.subr.mxu0 0.0
        %4798 = vmatpush1.msra.mxu0 0.0
        %4799 = vmatprep.subr.mxu0 0.0
        %4800 = vmatpush1.msra.mxu0 0.0
        %4801 = vmatprep.subr.mxu0 0.0
        %4802 = vmatpush1.msra.mxu0 0.0
        %4803 = vmatprep.subr.mxu0 0.0
        %4804 = vmatpush1.msra.mxu0 0.0
        %4805 = vmatprep.subr.mxu0 0.0
        %4806 = vmatpush1.msra.mxu0 0.0
        %4807 = vmatprep.subr.mxu0 0.0
        %4808 = vmatpush1.msra.mxu0 0.0
        %4809 = vmatprep.subr.mxu0 0.0
        %4810 = vmatpush1.msra.mxu0 0.0
        %4811 = vmatprep.subr.mxu0 0.0
        %4812 = vmatpush1.msra.mxu0 0.0
        %4813 = vmatprep.subr.mxu0 0.0
        %4814 = vmatpush1.msra.mxu0 0.0
        %4815 = vmatprep.mubr.f32.mxu0 0.0
        %v4816 = vand.u32 %v4739, 4294901760
        %v4817 = vsub.f32 %v4739, %v4816
        %v4818 = vand.u32 %v4817, 4294901760
        %v4819 = vsub.f32 %v4817, %v4818
        %v4820 = vand.u32 %v4819, 4294901760
        %4821 = vmatmul.mubr.f32.gmra.mrb[0].mxu0 %v4820
        %v4822 = vpop.f32.mrb[0].mxu0
        %v4823 = vadd.f32 0.0, %v4822
        %v4824 = vpop.f32.mrb[0].mxu0
        %4825 = vmatprep.mubr.f32.mxu0 0.0
        %v4826 = vand.u32 %v4742, 4294901760
        %v4827 = vsub.f32 %v4742, %v4826
        %v4828 = vand.u32 %v4827, 4294901760
        %v4829 = vsub.f32 %v4827, %v4828
        %v4830 = vand.u32 %v4829, 4294901760
        %4831 = vmatmul.mubr.f32.gmra.mrb[0].mxu0 %v4830
        %v4832 = vpop.f32.mrb[0].mxu0
        %v4833 = vadd.f32 0.0, %v4832
        %v4834 = vpop.f32.mrb[0].mxu0
        %4835 = vmatprep.mubr.f32.mxu0 0.0
        %v4836 = vand.u32 %v4745, 4294901760
        %v4837 = vsub.f32 %v4745, %v4836
        %v4838 = vand.u32 %v4837, 4294901760
        %v4839 = vsub.f32 %v4837, %v4838
        %v4840 = vand.u32 %v4839, 4294901760
        %4841 = vmatmul.mubr.f32.gmra.mrb[0].mxu0 %v4840
        %v4842 = vpop.f32.mrb[0].mxu0
        %v4843 = vadd.f32 0.0, %v4842
        %v4844 = vpop.f32.mrb[0].mxu0
        %4845 = vmatprep.mubr.f32.mxu0 0.0
        %v4846 = vand.u32 %v4748, 4294901760
        %v4847 = vsub.f32 %v4748, %v4846
        %v4848 = vand.u32 %v4847, 4294901760
        %v4849 = vsub.f32 %v4847, %v4848
        %v4850 = vand.u32 %v4849, 4294901760
        %4851 = vmatmul.mubr.f32.gmra.mrb[0].mxu0 %v4850
        %v4852 = vpop.f32.mrb[0].mxu0
        %v4853 = vadd.f32 0.0, %v4852
        %v4854 = vpop.f32.mrb[0].mxu0
        %4855 = vdwg.mxu0
        %4856 = vmatprep.subr.mxu0 0.0
        %v4857 = vand.u32 %v4705, 4294901760
        %v4858 = vsub.f32 %v4705, %v4857
        %v4859 = vand.u32 %v4858, 4294901760
        %v4860 = vsub.f32 %v4858, %v4859
        %v4861 = vand.u32 %v4860, 4294901760
        %4862 = vmatpush1.msra.mxu0 %v4861
        %4863 = vmatprep.subr.mxu0 0.0
        %4864 = vmatpush1.msra.mxu0 0.0
        %4865 = vmatprep.subr.mxu0 0.0
        %4866 = vmatpush1.msra.mxu0 0.0
        %4867 = vmatprep.subr.mxu0 0.0
        %4868 = vmatpush1.msra.mxu0 0.0
        %4869 = vmatprep.subr.mxu0 0.0
        %4870 = vmatpush1.msra.mxu0 0.0
        %4871 = vmatprep.subr.mxu0 0.0
        %4872 = vmatpush1.msra.mxu0 0.0
        %4873 = vmatprep.subr.mxu0 0.0
        %4874 = vmatpush1.msra.mxu0 0.0
        %4875 = vmatprep.subr.mxu0 0.0
        %4876 = vmatpush1.msra.mxu0 0.0
        %4877 = vmatprep.subr.mxu0 0.0
        %4878 = vmatpush1.msra.mxu0 0.0
        %4879 = vmatprep.subr.mxu0 0.0
        %4880 = vmatpush1.msra.mxu0 0.0
        %4881 = vmatprep.subr.mxu0 0.0
        %4882 = vmatpush1.msra.mxu0 0.0
        %4883 = vmatprep.subr.mxu0 0.0
        %4884 = vmatpush1.msra.mxu0 0.0
        %4885 = vmatprep.subr.mxu0 0.0
        %4886 = vmatpush1.msra.mxu0 0.0
        %4887 = vmatprep.subr.mxu0 0.0
        %4888 = vmatpush1.msra.mxu0 0.0
        %4889 = vmatprep.subr.mxu0 0.0
        %4890 = vmatpush1.msra.mxu0 0.0
        %4891 = vmatprep.subr.mxu0 0.0
        %4892 = vmatpush1.msra.mxu0 0.0
        %4893 = vmatprep.subr.mxu0 0.0
        %4894 = vmatpush1.msra.mxu0 0.0
        %4895 = vmatprep.subr.mxu0 0.0
        %4896 = vmatpush1.msra.mxu0 0.0
        %4897 = vmatprep.subr.mxu0 0.0
        %4898 = vmatpush1.msra.mxu0 0.0
        %4899 = vmatprep.subr.mxu0 0.0
        %4900 = vmatpush1.msra.mxu0 0.0
        %4901 = vmatprep.subr.mxu0 0.0
        %4902 = vmatpush1.msra.mxu0 0.0
        %4903 = vmatprep.subr.mxu0 0.0
        %4904 = vmatpush1.msra.mxu0 0.0
        %4905 = vmatprep.subr.mxu0 0.0
        %4906 = vmatpush1.msra.mxu0 0.0
        %4907 = vmatprep.subr.mxu0 0.0
        %4908 = vmatpush1.msra.mxu0 0.0
        %4909 = vmatprep.subr.mxu0 0.0
        %4910 = vmatpush1.msra.mxu0 0.0
        %4911 = vmatprep.subr.mxu0 0.0
        %4912 = vmatpush1.msra.mxu0 0.0
        %4913 = vmatprep.subr.mxu0 0.0
        %4914 = vmatpush1.msra.mxu0 0.0
        %4915 = vmatprep.subr.mxu0 0.0
        %4916 = vmatpush1.msra.mxu0 0.0
        %4917 = vmatprep.subr.mxu0 0.0
        %4918 = vmatpush1.msra.mxu0 0.0
        %4919 = vmatprep.subr.mxu0 0.0
        %4920 = vmatpush1.msra.mxu0 0.0
        %4921 = vmatprep.subr.mxu0 0.0
        %4922 = vmatpush1.msra.mxu0 0.0
        %4923 = vmatprep.subr.mxu0 0.0
        %4924 = vmatpush1.msra.mxu0 0.0
        %4925 = vmatprep.mubr.f32.mxu0 0.0
        %v4926 = vand.u32 %v4739, 4294901760
        %4927 = vmatmul.mubr.f32.gmra.mrb[0].mxu0 %v4926
        %v4928 = vpop.f32.mrb[0].mxu0
        %v4929 = vadd.f32 %v4823, %v4928
        %v4930 = vpop.f32.mrb[0].mxu0
        %4931 = vmatprep.mubr.f32.mxu0 0.0
        %v4932 = vand.u32 %v4742, 4294901760
        %4933 = vmatmul.mubr.f32.gmra.mrb[0].mxu0 %v4932
        %v4934 = vpop.f32.mrb[0].mxu0
        %v4935 = vadd.f32 %v4833, %v4934
        %v4936 = vpop.f32.mrb[0].mxu0
        %4937 = vmatprep.mubr.f32.mxu0 0.0
        %v4938 = vand.u32 %v4745, 4294901760
        %4939 = vmatmul.mubr.f32.gmra.mrb[0].mxu0 %v4938
        %v4940 = vpop.f32.mrb[0].mxu0
        %v4941 = vadd.f32 %v4843, %v4940
        %v4942 = vpop.f32.mrb[0].mxu0
        %4943 = vmatprep.mubr.f32.mxu0 0.0
        %v4944 = vand.u32 %v4748, 4294901760
        %4945 = vmatmul.mubr.f32.gmra.mrb[0].mxu0 %v4944
        %v4946 = vpop.f32.mrb[0].mxu0
        %v4947 = vadd.f32 %v4853, %v4946
        %v4948 = vpop.f32.mrb[0].mxu0
        %4949 = vdwg.mxu0
        %4950 = vmatprep.subr.mxu0 0.0
        %v4951 = vand.u32 %v4705, 4294901760
        %v4952 = vsub.f32 %v4705, %v4951
        %4953 = vmatpush1.msra.mxu0 %v4952
        %4954 = vmatprep.subr.mxu0 0.0
        %4955 = vmatpush1.msra.mxu0 0.0
        %4956 = vmatprep.subr.mxu0 0.0
        %4957 = vmatpush1.msra.mxu0 0.0
        %4958 = vmatprep.subr.mxu0 0.0
        %4959 = vmatpush1.msra.mxu0 0.0
        %4960 = vmatprep.subr.mxu0 0.0
        %4961 = vmatpush1.msra.mxu0 0.0
        %4962 = vmatprep.subr.mxu0 0.0
        %4963 = vmatpush1.msra.mxu0 0.0
        %4964 = vmatprep.subr.mxu0 0.0
        %4965 = vmatpush1.msra.mxu0 0.0
        %4966 = vmatprep.subr.mxu0 0.0
        %4967 = vmatpush1.msra.mxu0 0.0
        %4968 = vmatprep.subr.mxu0 0.0
        %4969 = vmatpush1.msra.mxu0 0.0
        %4970 = vmatprep.subr.mxu0 0.0
        %4971 = vmatpush1.msra.mxu0 0.0
        %4972 = vmatprep.subr.mxu0 0.0
        %4973 = vmatpush1.msra.mxu0 0.0
        %4974 = vmatprep.subr.mxu0 0.0
        %4975 = vmatpush1.msra.mxu0 0.0
        %4976 = vmatprep.subr.mxu0 0.0
        %4977 = vmatpush1.msra.mxu0 0.0
        %4978 = vmatprep.subr.mxu0 0.0
        %4979 = vmatpush1.msra.mxu0 0.0
        %4980 = vmatprep.subr.mxu0 0.0
        %4981 = vmatpush1.msra.mxu0 0.0
        %4982 = vmatprep.subr.mxu0 0.0
        %4983 = vmatpush1.msra.mxu0 0.0
        %4984 = vmatprep.subr.mxu0 0.0
        %4985 = vmatpush1.msra.mxu0 0.0
        %4986 = vmatprep.subr.mxu0 0.0
        %4987 = vmatpush1.msra.mxu0 0.0
        %4988 = vmatprep.subr.mxu0 0.0
        %4989 = vmatpush1.msra.mxu0 0.0
        %4990 = vmatprep.subr.mxu0 0.0
        %4991 = vmatpush1.msra.mxu0 0.0
        %4992 = vmatprep.subr.mxu0 0.0
        %4993 = vmatpush1.msra.mxu0 0.0
        %4994 = vmatprep.subr.mxu0 0.0
        %4995 = vmatpush1.msra.mxu0 0.0
        %4996 = vmatprep.subr.mxu0 0.0
        %4997 = vmatpush1.msra.mxu0 0.0
        %4998 = vmatprep.subr.mxu0 0.0
        %4999 = vmatpush1.msra.mxu0 0.0
        %5000 = vmatprep.subr.mxu0 0.0
        %5001 = vmatpush1.msra.mxu0 0.0
        %5002 = vmatprep.subr.mxu0 0.0
        %5003 = vmatpush1.msra.mxu0 0.0
        %5004 = vmatprep.subr.mxu0 0.0
        %5005 = vmatpush1.msra.mxu0 0.0
        %5006 = vmatprep.subr.mxu0 0.0
        %5007 = vmatpush1.msra.mxu0 0.0
        %5008 = vmatprep.subr.mxu0 0.0
        %5009 = vmatpush1.msra.mxu0 0.0
        %5010 = vmatprep.subr.mxu0 0.0
        %5011 = vmatpush1.msra.mxu0 0.0
        %5012 = vmatprep.subr.mxu0 0.0
        %5013 = vmatpush1.msra.mxu0 0.0
        %5014 = vmatprep.subr.mxu0 0.0
        %5015 = vmatpush1.msra.mxu0 0.0
        %5016 = vmatprep.mubr.f32.mxu0 0.0
        %v5017 = vand.u32 %v4739, 4294901760
        %v5018 = vsub.f32 %v4739, %v5017
        %5019 = vmatmul.mubr.f32.gmra.mrb[0].mxu0 %v5018
        %v5020 = vpop.f32.mrb[0].mxu0
        %v5021 = vadd.f32 %v4929, %v5020
        %v5022 = vpop.f32.mrb[0].mxu0
        %5023 = vmatprep.mubr.f32.mxu0 0.0
        %v5024 = vand.u32 %v4742, 4294901760
        %v5025 = vsub.f32 %v4742, %v5024
        %5026 = vmatmul.mubr.f32.gmra.mrb[0].mxu0 %v5025
        %v5027 = vpop.f32.mrb[0].mxu0
        %v5028 = vadd.f32 %v4935, %v5027
        %v5029 = vpop.f32.mrb[0].mxu0
        %5030 = vmatprep.mubr.f32.mxu0 0.0
        %v5031 = vand.u32 %v4745, 4294901760
        %v5032 = vsub.f32 %v4745, %v5031
        %5033 = vmatmul.mubr.f32.gmra.mrb[0].mxu0 %v5032
        %v5034 = vpop.f32.mrb[0].mxu0
        %v5035 = vadd.f32 %v4941, %v5034
        %v5036 = vpop.f32.mrb[0].mxu0
        %5037 = vmatprep.mubr.f32.mxu0 0.0
        %v5038 = vand.u32 %v4748, 4294901760
        %v5039 = vsub.f32 %v4748, %v5038
        %5040 = vmatmul.mubr.f32.gmra.mrb[0].mxu0 %v5039
        %v5041 = vpop.f32.mrb[0].mxu0
        %v5042 = vadd.f32 %v4947, %v5041
        %v5043 = vpop.f32.mrb[0].mxu0
        %5044 = vdwg.mxu0
        %5045 = vmatprep.subr.mxu0 0.0
        %v5046 = vand.u32 %v4705, 4294901760
        %5047 = vmatpush1.msra.mxu0 %v5046
        %5048 = vmatprep.subr.mxu0 0.0
        %5049 = vmatpush1.msra.mxu0 0.0
        %5050 = vmatprep.subr.mxu0 0.0
        %5051 = vmatpush1.msra.mxu0 0.0
        %5052 = vmatprep.subr.mxu0 0.0
        %5053 = vmatpush1.msra.mxu0 0.0
        %5054 = vmatprep.subr.mxu0 0.0
        %5055 = vmatpush1.msra.mxu0 0.0
        %5056 = vmatprep.subr.mxu0 0.0
        %5057 = vmatpush1.msra.mxu0 0.0
        %5058 = vmatprep.subr.mxu0 0.0
        %5059 = vmatpush1.msra.mxu0 0.0
        %5060 = vmatprep.subr.mxu0 0.0
        %5061 = vmatpush1.msra.mxu0 0.0
        %5062 = vmatprep.subr.mxu0 0.0
        %5063 = vmatpush1.msra.mxu0 0.0
        %5064 = vmatprep.subr.mxu0 0.0
        %5065 = vmatpush1.msra.mxu0 0.0
        %5066 = vmatprep.subr.mxu0 0.0
        %5067 = vmatpush1.msra.mxu0 0.0
        %5068 = vmatprep.subr.mxu0 0.0
        %5069 = vmatpush1.msra.mxu0 0.0
        %5070 = vmatprep.subr.mxu0 0.0
        %5071 = vmatpush1.msra.mxu0 0.0
        %5072 = vmatprep.subr.mxu0 0.0
        %5073 = vmatpush1.msra.mxu0 0.0
        %5074 = vmatprep.subr.mxu0 0.0
        %5075 = vmatpush1.msra.mxu0 0.0
        %5076 = vmatprep.subr.mxu0 0.0
        %5077 = vmatpush1.msra.mxu0 0.0
        %5078 = vmatprep.subr.mxu0 0.0
        %5079 = vmatpush1.msra.mxu0 0.0
        %5080 = vmatprep.subr.mxu0 0.0
        %5081 = vmatpush1.msra.mxu0 0.0
        %5082 = vmatprep.subr.mxu0 0.0
        %5083 = vmatpush1.msra.mxu0 0.0
        %5084 = vmatprep.subr.mxu0 0.0
        %5085 = vmatpush1.msra.mxu0 0.0
        %5086 = vmatprep.subr.mxu0 0.0
        %5087 = vmatpush1.msra.mxu0 0.0
        %5088 = vmatprep.subr.mxu0 0.0
        %5089 = vmatpush1.msra.mxu0 0.0
        %5090 = vmatprep.subr.mxu0 0.0
        %5091 = vmatpush1.msra.mxu0 0.0
        %5092 = vmatprep.subr.mxu0 0.0
        %5093 = vmatpush1.msra.mxu0 0.0
        %5094 = vmatprep.subr.mxu0 0.0
        %5095 = vmatpush1.msra.mxu0 0.0
        %5096 = vmatprep.subr.mxu0 0.0
        %5097 = vmatpush1.msra.mxu0 0.0
        %5098 = vmatprep.subr.mxu0 0.0
        %5099 = vmatpush1.msra.mxu0 0.0
        %5100 = vmatprep.subr.mxu0 0.0
        %5101 = vmatpush1.msra.mxu0 0.0
        %5102 = vmatprep.subr.mxu0 0.0
        %5103 = vmatpush1.msra.mxu0 0.0
        %5104 = vmatprep.subr.mxu0 0.0
        %5105 = vmatpush1.msra.mxu0 0.0
        %5106 = vmatprep.subr.mxu0 0.0
        %5107 = vmatpush1.msra.mxu0 0.0
        %5108 = vmatprep.subr.mxu0 0.0
        %5109 = vmatpush1.msra.mxu0 0.0
        %5110 = vmatprep.mubr.f32.mxu0 0.0
        %v5111 = vand.u32 %v4739, 4294901760
        %v5112 = vsub.f32 %v4739, %v5111
        %v5113 = vand.u32 %v5112, 4294901760
        %5114 = vmatmul.mubr.f32.gmra.mrb[0].mxu0 %v5113
        %v5115 = vpop.f32.mrb[0].mxu0
        %v5116 = vadd.f32 %v5021, %v5115
        %v5117 = vpop.f32.mrb[0].mxu0
        %5118 = vmatprep.mubr.f32.mxu0 0.0
        %v5119 = vand.u32 %v4742, 4294901760
        %v5120 = vsub.f32 %v4742, %v5119
        %v5121 = vand.u32 %v5120, 4294901760
        %5122 = vmatmul.mubr.f32.gmra.mrb[0].mxu0 %v5121
        %v5123 = vpop.f32.mrb[0].mxu0
        %v5124 = vadd.f32 %v5028, %v5123
        %v5125 = vpop.f32.mrb[0].mxu0
        %5126 = vmatprep.mubr.f32.mxu0 0.0
        %v5127 = vand.u32 %v4745, 4294901760
        %v5128 = vsub.f32 %v4745, %v5127
        %v5129 = vand.u32 %v5128, 4294901760
        %5130 = vmatmul.mubr.f32.gmra.mrb[0].mxu0 %v5129
        %v5131 = vpop.f32.mrb[0].mxu0
        %v5132 = vadd.f32 %v5035, %v5131
        %v5133 = vpop.f32.mrb[0].mxu0
        %5134 = vmatprep.mubr.f32.mxu0 0.0
        %v5135 = vand.u32 %v4748, 4294901760
        %v5136 = vsub.f32 %v4748, %v5135
        %v5137 = vand.u32 %v5136, 4294901760
        %5138 = vmatmul.mubr.f32.gmra.mrb[0].mxu0 %v5137
        %v5139 = vpop.f32.mrb[0].mxu0
        %v5140 = vadd.f32 %v5042, %v5139
        %v5141 = vpop.f32.mrb[0].mxu0
        %5142 = vdwg.mxu0
        %5143 = vmatprep.subr.mxu0 0.0
        %v5144 = vand.u32 %v4705, 4294901760
        %v5145 = vsub.f32 %v4705, %v5144
        %v5146 = vand.u32 %v5145, 4294901760
        %5147 = vmatpush1.msra.mxu0 %v5146
        %5148 = vmatprep.subr.mxu0 0.0
        %5149 = vmatpush1.msra.mxu0 0.0
        %5150 = vmatprep.subr.mxu0 0.0
        %5151 = vmatpush1.msra.mxu0 0.0
        %5152 = vmatprep.subr.mxu0 0.0
        %5153 = vmatpush1.msra.mxu0 0.0
        %5154 = vmatprep.subr.mxu0 0.0
        %5155 = vmatpush1.msra.mxu0 0.0
        %5156 = vmatprep.subr.mxu0 0.0
        %5157 = vmatpush1.msra.mxu0 0.0
        %5158 = vmatprep.subr.mxu0 0.0
        %5159 = vmatpush1.msra.mxu0 0.0
        %5160 = vmatprep.subr.mxu0 0.0
        %5161 = vmatpush1.msra.mxu0 0.0
        %5162 = vmatprep.subr.mxu0 0.0
        %5163 = vmatpush1.msra.mxu0 0.0
        %5164 = vmatprep.subr.mxu0 0.0
        %5165 = vmatpush1.msra.mxu0 0.0
        %5166 = vmatprep.subr.mxu0 0.0
        %5167 = vmatpush1.msra.mxu0 0.0
        %5168 = vmatprep.subr.mxu0 0.0
        %5169 = vmatpush1.msra.mxu0 0.0
        %5170 = vmatprep.subr.mxu0 0.0
        %5171 = vmatpush1.msra.mxu0 0.0
        %5172 = vmatprep.subr.mxu0 0.0
        %5173 = vmatpush1.msra.mxu0 0.0
        %5174 = vmatprep.subr.mxu0 0.0
        %5175 = vmatpush1.msra.mxu0 0.0
        %5176 = vmatprep.subr.mxu0 0.0
        %5177 = vmatpush1.msra.mxu0 0.0
        %5178 = vmatprep.subr.mxu0 0.0
        %5179 = vmatpush1.msra.mxu0 0.0
        %5180 = vmatprep.subr.mxu0 0.0
        %5181 = vmatpush1.msra.mxu0 0.0
        %5182 = vmatprep.subr.mxu0 0.0
        %5183 = vmatpush1.msra.mxu0 0.0
        %5184 = vmatprep.subr.mxu0 0.0
        %5185 = vmatpush1.msra.mxu0 0.0
        %5186 = vmatprep.subr.mxu0 0.0
        %5187 = vmatpush1.msra.mxu0 0.0
        %5188 = vmatprep.subr.mxu0 0.0
        %5189 = vmatpush1.msra.mxu0 0.0
        %5190 = vmatprep.subr.mxu0 0.0
        %5191 = vmatpush1.msra.mxu0 0.0
        %5192 = vmatprep.subr.mxu0 0.0
        %5193 = vmatpush1.msra.mxu0 0.0
        %5194 = vmatprep.subr.mxu0 0.0
        %5195 = vmatpush1.msra.mxu0 0.0
        %5196 = vmatprep.subr.mxu0 0.0
        %5197 = vmatpush1.msra.mxu0 0.0
        %5198 = vmatprep.subr.mxu0 0.0
        %5199 = vmatpush1.msra.mxu0 0.0
        %5200 = vmatprep.subr.mxu0 0.0
        %5201 = vmatpush1.msra.mxu0 0.0
        %5202 = vmatprep.subr.mxu0 0.0
        %5203 = vmatpush1.msra.mxu0 0.0
        %5204 = vmatprep.subr.mxu0 0.0
        %5205 = vmatpush1.msra.mxu0 0.0
        %5206 = vmatprep.subr.mxu0 0.0
        %5207 = vmatpush1.msra.mxu0 0.0
        %5208 = vmatprep.subr.mxu0 0.0
        %5209 = vmatpush1.msra.mxu0 0.0
        %5210 = vmatprep.mubr.f32.mxu0 0.0
        %v5211 = vand.u32 %v4739, 4294901760
        %5212 = vmatmul.mubr.f32.gmra.mrb[0].mxu0 %v5211
        %v5213 = vpop.f32.mrb[0].mxu0
        %v5214 = vadd.f32 %v5116, %v5213
        %v5215 = vpop.f32.mrb[0].mxu0
        %5216 = vmatprep.mubr.f32.mxu0 0.0
        %v5217 = vand.u32 %v4742, 4294901760
        %5218 = vmatmul.mubr.f32.gmra.mrb[0].mxu0 %v5217
        %v5219 = vpop.f32.mrb[0].mxu0
        %v5220 = vadd.f32 %v5124, %v5219
        %v5221 = vpop.f32.mrb[0].mxu0
        %5222 = vmatprep.mubr.f32.mxu0 0.0
        %v5223 = vand.u32 %v4745, 4294901760
        %5224 = vmatmul.mubr.f32.gmra.mrb[0].mxu0 %v5223
        %v5225 = vpop.f32.mrb[0].mxu0
        %v5226 = vadd.f32 %v5132, %v5225
        %v5227 = vpop.f32.mrb[0].mxu0
        %5228 = vmatprep.mubr.f32.mxu0 0.0
        %v5229 = vand.u32 %v4748, 4294901760
        %5230 = vmatmul.mubr.f32.gmra.mrb[0].mxu0 %v5229
        %v5231 = vpop.f32.mrb[0].mxu0
        %v5232 = vadd.f32 %v5140, %v5231
        %v5233 = vpop.f32.mrb[0].mxu0
        %5234 = vdwg.mxu0
        %5235 = vmatprep.subr.mxu0 0.0
        %v5236 = vand.u32 %v4705, 4294901760
        %5237 = vmatpush1.msra.mxu0 %v5236
        %5238 = vmatprep.subr.mxu0 0.0
        %5239 = vmatpush1.msra.mxu0 0.0
        %5240 = vmatprep.subr.mxu0 0.0
        %5241 = vmatpush1.msra.mxu0 0.0
        %5242 = vmatprep.subr.mxu0 0.0
        %5243 = vmatpush1.msra.mxu0 0.0
        %5244 = vmatprep.subr.mxu0 0.0
        %5245 = vmatpush1.msra.mxu0 0.0
        %5246 = vmatprep.subr.mxu0 0.0
        %5247 = vmatpush1.msra.mxu0 0.0
        %5248 = vmatprep.subr.mxu0 0.0
        %5249 = vmatpush1.msra.mxu0 0.0
        %5250 = vmatprep.subr.mxu0 0.0
        %5251 = vmatpush1.msra.mxu0 0.0
        %5252 = vmatprep.subr.mxu0 0.0
        %5253 = vmatpush1.msra.mxu0 0.0
        %5254 = vmatprep.subr.mxu0 0.0
        %5255 = vmatpush1.msra.mxu0 0.0
        %5256 = vmatprep.subr.mxu0 0.0
        %5257 = vmatpush1.msra.mxu0 0.0
        %5258 = vmatprep.subr.mxu0 0.0
        %5259 = vmatpush1.msra.mxu0 0.0
        %5260 = vmatprep.subr.mxu0 0.0
        %5261 = vmatpush1.msra.mxu0 0.0
        %5262 = vmatprep.subr.mxu0 0.0
        %5263 = vmatpush1.msra.mxu0 0.0
        %5264 = vmatprep.subr.mxu0 0.0
        %5265 = vmatpush1.msra.mxu0 0.0
        %5266 = vmatprep.subr.mxu0 0.0
        %5267 = vmatpush1.msra.mxu0 0.0
        %5268 = vmatprep.subr.mxu0 0.0
        %5269 = vmatpush1.msra.mxu0 0.0
        %5270 = vmatprep.subr.mxu0 0.0
        %5271 = vmatpush1.msra.mxu0 0.0
        %5272 = vmatprep.subr.mxu0 0.0
        %5273 = vmatpush1.msra.mxu0 0.0
        %5274 = vmatprep.subr.mxu0 0.0
        %5275 = vmatpush1.msra.mxu0 0.0
        %5276 = vmatprep.subr.mxu0 0.0
        %5277 = vmatpush1.msra.mxu0 0.0
        %5278 = vmatprep.subr.mxu0 0.0
        %5279 = vmatpush1.msra.mxu0 0.0
        %5280 = vmatprep.subr.mxu0 0.0
        %5281 = vmatpush1.msra.mxu0 0.0
        %5282 = vmatprep.subr.mxu0 0.0
        %5283 = vmatpush1.msra.mxu0 0.0
        %5284 = vmatprep.subr.mxu0 0.0
        %5285 = vmatpush1.msra.mxu0 0.0
        %5286 = vmatprep.subr.mxu0 0.0
        %5287 = vmatpush1.msra.mxu0 0.0
        %5288 = vmatprep.subr.mxu0 0.0
        %5289 = vmatpush1.msra.mxu0 0.0
        %5290 = vmatprep.subr.mxu0 0.0
        %5291 = vmatpush1.msra.mxu0 0.0
        %5292 = vmatprep.subr.mxu0 0.0
        %5293 = vmatpush1.msra.mxu0 0.0
        %5294 = vmatprep.subr.mxu0 0.0
        %5295 = vmatpush1.msra.mxu0 0.0
        %5296 = vmatprep.subr.mxu0 0.0
        %5297 = vmatpush1.msra.mxu0 0.0
        %5298 = vmatprep.subr.mxu0 0.0
        %5299 = vmatpush1.msra.mxu0 0.0
        %5300 = vmatprep.mubr.f32.mxu0 0.0
        %v5301 = vand.u32 %v4739, 4294901760
        %5302 = vmatmul.mubr.f32.gmra.mrb[0].mxu0 %v5301
        %v5303 = vpop.f32.mrb[0].mxu0
        %v5304 = vadd.f32 %v5214, %v5303
        %v5305 = vpop.f32.mrb[0].mxu0
        %5306 = vmatprep.mubr.f32.mxu0 0.0
        %v5307 = vand.u32 %v4742, 4294901760
        %5308 = vmatmul.mubr.f32.gmra.mrb[0].mxu0 %v5307
        %v5309 = vpop.f32.mrb[0].mxu0
        %v5310 = vadd.f32 %v5220, %v5309
        %v5311 = vpop.f32.mrb[0].mxu0
        %5312 = vmatprep.mubr.f32.mxu0 0.0
        %v5313 = vand.u32 %v4745, 4294901760
        %5314 = vmatmul.mubr.f32.gmra.mrb[0].mxu0 %v5313
        %v5315 = vpop.f32.mrb[0].mxu0
        %v5316 = vadd.f32 %v5226, %v5315
        %v5317 = vpop.f32.mrb[0].mxu0
        %5318 = vmatprep.mubr.f32.mxu0 0.0
        %v5319 = vand.u32 %v4748, 4294901760
        %5320 = vmatmul.mubr.f32.gmra.mrb[0].mxu0 %v5319
        %v5321 = vpop.f32.mrb[0].mxu0
        %v5322 = vadd.f32 %v5232, %v5321
        %v5323 = vpop.f32.mrb[0].mxu0
        %5324 = vdwg.mxu0
        %s5325 = scalar_lea.vmem [#allocation2], 96
        %v5326 = vld [vmem:[%s5325] sm:$0xff]
        %v5327 = vld [vmem:[%s5325 + $0x8] sm:$0xff]
        %v5328 = vld [vmem:[%s5325 + $0x10] sm:$0xff]
        %v5329 = vld [vmem:[%s5325 + $0x18] sm:$0xff]
        %v5331 = vlaneseq
        %v5332 = vshrl.u32 %v5331, 7
        %v5333 = vsub.s32 0, %v5332
        %v5334 = vrot.slane %v4687, %v5333
        %5335 = vset.pattern.permute.xlu0 0
        %5336 = vperm.xlu0 %5335, %v5334
        %v5337 = vpop.permute.xlu0 %5336
        %v5339 = vmul.f32 %v5326, %v5337
        %v5340 = vmul.f32 %v5327, %v5337
        %v5341 = vmul.f32 %v5328, %v5337
        %v5342 = vmul.f32 %v5329, %v5337
        %v5343 = vadd.f32 %v5339, %v5304
        %v5344 = vadd.f32 %v5340, %v5310
        %v5345 = vadd.f32 %v5341, %v5316
        %v5346 = vadd.f32 %v5342, %v5322
        %5347 = vst.msk [vmem:[%s5325] sm:$0xff] %vm1907, %v5343
        %5348 = vst.msk [vmem:[%s5325 + $0x8] sm:$0xff] %vm1907, %v5344
        %5349 = vst.msk [vmem:[%s5325 + $0x10] sm:$0xff] %vm1907, %v5345
        %5350 = vst.msk [vmem:[%s5325 + $0x18] sm:$0xff] %vm1907, %v5346
        %s5351 = scalar_lea.vmem [#allocation3], 3
        %v5352 = vld [vmem:[%s5351] sm:$0x1]
        %v5353 = vsel %vm1907, %v4705, 0.0
        %v5354 = vrot.slane %v5353, 4
        %v5355 = vadd.f32 %v5353, %v5354
        %v5356 = vrot.slane %v5355, 2
        %v5357 = vadd.f32 %v5355, %v5356
        %v5358 = vrot.slane %v5357, 1
        %v5359 = vadd.f32 %v5357, %v5358
        %v5360 = vadd.f32 %v5352, %v5359
        %5361 = vst.msk [vmem:[%s5351] sm:$0x1] %vm1921, %v5360
        %p5362 = scmp.eq.s32.totalorder %s24, 1
        // Predicated region
        $region49: #{tpu_custom_call.1} parent=35 // pred_check
          %p5363 = pneg %p5362
        $region50: #{tpu_custom_call.1} parent=35 // pred_check_branch
          %5365 = sbr.rel (%p5363) target = $region52
        $region51: #{tpu_custom_call.1} parent=35 // pred_region
          %v5366 = vld [vmem:[#allocation2] sm:$0xff]
          %v5367 = vld [vmem:[#allocation2 + $0x8] sm:$0xff]
          %v5368 = vld [vmem:[#allocation2 + $0x10] sm:$0xff]
          %v5369 = vld [vmem:[#allocation2 + $0x18] sm:$0xff]
          %v5370 = vld [vmem:[#allocation2 + $0x20] sm:$0xff]
          %v5371 = vld [vmem:[#allocation2 + $0x28] sm:$0xff]
          %v5372 = vld [vmem:[#allocation2 + $0x30] sm:$0xff]
          %v5373 = vld [vmem:[#allocation2 + $0x38] sm:$0xff]
          %v5374 = vld [vmem:[#allocation2 + $0x40] sm:$0xff]
          %v5375 = vld [vmem:[#allocation2 + $0x48] sm:$0xff]
          %v5376 = vld [vmem:[#allocation2 + $0x50] sm:$0xff]
          %v5377 = vld [vmem:[#allocation2 + $0x58] sm:$0xff]
          %v5378 = vld [vmem:[#allocation2 + $0x60] sm:$0xff]
          %v5379 = vld [vmem:[#allocation2 + $0x68] sm:$0xff]
          %v5380 = vld [vmem:[#allocation2 + $0x70] sm:$0xff]
          %v5381 = vld [vmem:[#allocation2 + $0x78] sm:$0xff]
          %v5382 = vld [vmem:[#allocation3] sm:$0x1]
          %v5383 = vld [vmem:[#allocation3 + $0x1] sm:$0x1]
          %v5384 = vld [vmem:[#allocation3 + $0x2] sm:$0x1]
          %v5385 = vld [vmem:[#allocation3 + $0x3] sm:$0x1]
          %v5386 = vmul.f32 %v5382, 0.0001
          %v5387 = vmul.f32 %v5383, 0.0001
          %v5388 = vmul.f32 %v5384, 0.0001
          %v5389 = vmul.f32 %v5385, 0.0001
          %v5394 = vlaneseq
          %v5395 = vshrl.u32 %v5394, 7
          %v5396 = vsub.s32 0, %v5395
          %v5397 = vrot.slane %v5386, %v5396
          %v5398 = vlaneseq
          %v5399 = vshrl.u32 %v5398, 7
          %v5400 = vsub.s32 0, %v5399
          %v5401 = vrot.slane %v5387, %v5400
          %v5402 = vlaneseq
          %v5403 = vshrl.u32 %v5402, 7
          %v5404 = vsub.s32 0, %v5403
          %v5405 = vrot.slane %v5388, %v5404
          %v5406 = vlaneseq
          %v5407 = vshrl.u32 %v5406, 7
          %v5408 = vsub.s32 0, %v5407
          %v5409 = vrot.slane %v5389, %v5408
          %v5414 = vadd.f32 %v5366, %v5397
          %v5415 = vadd.f32 %v5367, %v5397
          %v5416 = vadd.f32 %v5368, %v5397
          %v5417 = vadd.f32 %v5369, %v5397
          %v5418 = vadd.f32 %v5370, %v5401
          %v5419 = vadd.f32 %v5371, %v5401
          %v5420 = vadd.f32 %v5372, %v5401
          %v5421 = vadd.f32 %v5373, %v5401
          %v5422 = vadd.f32 %v5374, %v5405
          %v5423 = vadd.f32 %v5375, %v5405
          %v5424 = vadd.f32 %v5376, %v5405
          %v5425 = vadd.f32 %v5377, %v5405
          %v5426 = vadd.f32 %v5378, %v5409
          %v5427 = vadd.f32 %v5379, %v5409
          %v5428 = vadd.f32 %v5380, %v5409
          %v5429 = vadd.f32 %v5381, %v5409
          %v5430 = vmul.f32 %v5414, 0.17677669
          %v5431 = vmul.f32 %v5415, 0.17677669
          %v5432 = vmul.f32 %v5416, 0.17677669
          %v5433 = vmul.f32 %v5417, 0.17677669
          %v5434 = vmul.f32 %v5418, 0.17677669
          %v5435 = vmul.f32 %v5419, 0.17677669
          %v5436 = vmul.f32 %v5420, 0.17677669
          %v5437 = vmul.f32 %v5421, 0.17677669
          %v5438 = vmul.f32 %v5422, 0.17677669
          %v5439 = vmul.f32 %v5423, 0.17677669
          %v5440 = vmul.f32 %v5424, 0.17677669
          %v5441 = vmul.f32 %v5425, 0.17677669
          %v5442 = vmul.f32 %v5426, 0.17677669
          %v5443 = vmul.f32 %v5427, 0.17677669
          %v5444 = vmul.f32 %v5428, 0.17677669
          %v5445 = vmul.f32 %v5429, 0.17677669
          %5446 = vst.msk [vmem:[%s245] sm:$0xff] %vm1907, %v5430
          %5447 = vst.msk [vmem:[%s245 + $0x8] sm:$0xff] %vm1907, %v5431
          %5448 = vst.msk [vmem:[%s245 + $0x10] sm:$0xff] %vm1907, %v5432
          %5449 = vst.msk [vmem:[%s245 + $0x18] sm:$0xff] %vm1907, %v5433
          %5450 = vst.msk [vmem:[%s245 + $0x20] sm:$0xff] %vm1907, %v5434
          %5451 = vst.msk [vmem:[%s245 + $0x28] sm:$0xff] %vm1907, %v5435
          %5452 = vst.msk [vmem:[%s245 + $0x30] sm:$0xff] %vm1907, %v5436
          %5453 = vst.msk [vmem:[%s245 + $0x38] sm:$0xff] %vm1907, %v5437
          %5454 = vst.msk [vmem:[%s245 + $0x40] sm:$0xff] %vm1907, %v5438
          %5455 = vst.msk [vmem:[%s245 + $0x48] sm:$0xff] %vm1907, %v5439
          %5456 = vst.msk [vmem:[%s245 + $0x50] sm:$0xff] %vm1907, %v5440
          %5457 = vst.msk [vmem:[%s245 + $0x58] sm:$0xff] %vm1907, %v5441
          %5458 = vst.msk [vmem:[%s245 + $0x60] sm:$0xff] %vm1907, %v5442
          %5459 = vst.msk [vmem:[%s245 + $0x68] sm:$0xff] %vm1907, %v5443
          %5460 = vst.msk [vmem:[%s245 + $0x70] sm:$0xff] %vm1907, %v5444
          %5461 = vst.msk [vmem:[%s245 + $0x78] sm:$0xff] %vm1907, %v5445
        $region52: #{tpu_custom_call.1} parent=35 // pred_fallthru
          _
        %p5462 = scmp.lt.s32.totalorder %s23, 1
        %s5463 = scalar_select %p5462, %s23, 1
        %s5464 = smul.addr %s5463, 16
        %s5465 = smul.addr %s5464, 8
        %s5466 = scalar_lea.vmem %s4, %s5465
        // Predicated region
        $region53: #{tpu_custom_call.1} parent=35 // pred_check
          %p5467 = pneg %p140
        $region54: #{tpu_custom_call.1} parent=35 // pred_check_branch
          %5469 = sbr.rel (%p5467) target = $region56
        $region55: #{tpu_custom_call.1} parent=35 // pred_region
          _
        $region56: #{tpu_custom_call.1} parent=35 // pred_fallthru
          _
      $region36: #{tpu_custom_call.1} parent=5 // pred_fallthru
        _
      %p5470 = scmp.le.s32.totalorder 2, %s14
      // Predicated region
      $region57: #{tpu_custom_call.1} parent=5 // pred_check
        %p5471 = pneg %p5470
      $region58: #{tpu_custom_call.1} parent=5 // pred_check_branch
        %5473 = sbr.rel (%p5471) target = $region60
      $region59: #{tpu_custom_call.1} parent=5 // pred_region
        %s5474 = ssub.s32 %s14, 2
        // Predicated region
        $region61: #{tpu_custom_call.1} parent=59 // pred_check
          %p5475 = pneg %p146
        $region62: #{tpu_custom_call.1} parent=59 // pred_check_branch
          %5477 = sbr.rel (%p5475) target = $region64
        $region63: #{tpu_custom_call.1} parent=59 // pred_region
          %p5478 = scmp.lt.s32.totalorder %s25, 1
          %s5479 = scalar_select %p5478, %s25, 1
          %s5480 = smul.addr %s5479, 16
          %s5481 = smul.addr %s5480, 8
          %s5482 = scalar_lea.vmem %s4, %s5481
        $region64: #{tpu_custom_call.1} parent=59 // pred_fallthru
          _
      $region60: #{tpu_custom_call.1} parent=5 // pred_fallthru
        _
    $region6: #{tpu_custom_call.1} parent=1 // loop_footer
      %s18 = sadd.s32 1, %s14
    $region7: #{tpu_custom_call.1} parent=1 // loop_footer_branch
      %13 = sbr.rel target = $region3
    $region8: #{tpu_custom_call.1} parent=1 // loop_exit
      _
    %5483 = vsyncpa [#allocation6], 1
    %s5484 = scalar_lea.sflag [#allocation6], 1
    %5485 = vsyncpa %s5484, 1
    %5486 = vsyncpa [#allocation8], 1

</llo_original>
